<compile_context>
chip_gen: v7x
topology: tpu7x:2x2x1
jax: 0.10.0
libtpu: 0.0.40
codegen_flags: <defaults>
</compile_context>

<pallas_src>
import jax
import jax.numpy as jnp
from jax import lax
from jax.experimental import pallas as pl
from jax.experimental.pallas import tpu as pltpu

K_IN = 28 * 28      # 784
HIDDEN = 256
W3_ROWS = 8         # layer3 weight padded to 8 sublanes (rows 1..7 zero)

# Contract the last dim of both operands ("A @ B.T" dimension numbers), same
# pattern as the official Pallas flash-attention kernel.
_TRANS_B_DIMS = (((1,), (1,)), ((), ()))


def discriminator_kernel(x_ref, w1_ref, b1_ref, w2_ref, b2_ref, w3_ref, b3_ref,
                         o_ref):
    # layer1: Linear(784 -> 256) + LeakyReLU(0.2).  bf16 MXU, f32 accumulate.
    x_bf = x_ref[...].astype(jnp.bfloat16)                 # in-kernel cast (VPU)
    h1 = jnp.dot(x_bf, w1_ref[...], preferred_element_type=jnp.float32)
    h1 = h1 + b1_ref[...]
    h1 = jnp.where(h1 > 0, h1, 0.2 * h1)

    # layer2: Linear(256 -> 256) + LeakyReLU(0.2)
    h2 = jnp.dot(h1.astype(jnp.bfloat16), w2_ref[...],
                 preferred_element_type=jnp.float32)
    h2 = h2 + b2_ref[...]
    h2 = jnp.where(h2 > 0, h2, 0.2 * h2)

    # layer3: Linear(256 -> 1) + sigmoid, emitted lane-dense.
    # w3_ref is (8, 256) with only row 0 non-zero; contracting the feature axes
    # gives (8, tile_b), i.e. the logits already laid out along lanes.
    h3 = lax.dot_general(w3_ref[...], h2, _TRANS_B_DIMS,
                         preferred_element_type=jnp.float32)
    logit = h3[0:1, :] + b3_ref[...]                       # (1, tile_b)
    o_ref[0] = jax.nn.sigmoid(logit)                       # dense row store


def _round_up(v, m):
    return (v + m - 1) // m * m


def _pick_tile_b(batch, max_tile_b):
    if batch <= 128:
        return max(8, _round_up(batch, 8))
    # >= 2 tiles so v7x's 2 TensorCores both get work; lane multiple of 128.
    return min(max_tile_b, _round_up(pl.cdiv(batch, 2), 128))


def discriminator_forward(x, kernel_params, *, tile_b=None, max_tile_b=1024):
    """x: (B, 784) f32.  kernel_params from prepare_kernel_params()."""
    w1, b1, w2, b2, w3_rows, b3 = kernel_params
    B = x.shape[0]
    if tile_b is None:
        tile_b = _pick_tile_b(B, max_tile_b)
    num_tiles = pl.cdiv(B, tile_b)

    rows = num_tiles * tile_b
    flops = 2 * rows * (K_IN * HIDDEN + HIDDEN * HIDDEN + W3_ROWS * HIDDEN)
    bytes_accessed = (x.size * x.dtype.itemsize
                      + (w1.size + w2.size) * 2
                      + (b1.size + b2.size + w3_rows.size + b3.size) * 4
                      + rows * 4)

    out = pl.pallas_call(
        discriminator_kernel,
        out_shape=jax.ShapeDtypeStruct((num_tiles, 1, tile_b), jnp.float32),
        grid_spec=pltpu.PrefetchScalarGridSpec(
            num_scalar_prefetch=0,
            grid=(num_tiles,),
            in_specs=[
                pl.BlockSpec((tile_b, K_IN), lambda i: (i, 0)),     # x tile (f32)
                pl.BlockSpec((K_IN, HIDDEN), lambda i: (0, 0)),     # w1 (resident)
                pl.BlockSpec((1, HIDDEN), lambda i: (0, 0)),        # b1
                pl.BlockSpec((HIDDEN, HIDDEN), lambda i: (0, 0)),   # w2 (resident)
                pl.BlockSpec((1, HIDDEN), lambda i: (0, 0)),        # b2
                pl.BlockSpec((W3_ROWS, HIDDEN), lambda i: (0, 0)),  # w3 rows
                pl.BlockSpec((1, 1), lambda i: (0, 0)),             # b3
            ],
            out_specs=pl.BlockSpec((1, 1, tile_b), lambda i: (i, 0, 0)),
        ),
        compiler_params=pltpu.CompilerParams(
            dimension_semantics=("parallel",),
            vmem_limit_bytes=32 * 1024 * 1024),
        cost_estimate=pl.CostEstimate(
            flops=flops, transcendentals=rows, bytes_accessed=bytes_accessed),
    )(x, w1, b1, w2, b2, w3_rows, b3)

    # (num_tiles, 1, tile_b) -> (B, 1); garbage rows from the ragged last block
    # (and rows >= B) are dropped here.
    return out.reshape(-1)[:B].reshape(B, 1)


def init_params(key):
    """f32 params in PyTorch nn.Linear layout: weight (out, in), bias (out,)."""
    ks = jax.random.split(key, 6)

    def linear(kw, kb, fan_in, fan_out):
        bound = 1.0 / float(fan_in) ** 0.5
        w = jax.random.uniform(kw, (fan_out, fan_in), jnp.float32, -bound, bound)
        b = jax.random.uniform(kb, (fan_out,), jnp.float32, -bound, bound)
        return w, b

    w1, b1 = linear(ks[0], ks[1], K_IN, HIDDEN)
    w2, b2 = linear(ks[2], ks[3], HIDDEN, HIDDEN)
    w3, b3 = linear(ks[4], ks[5], HIDDEN, 1)
    return w1, b1, w2, b2, w3, b3


def prepare_kernel_params(params):
    """Transpose to (in, out), cast matmul weights to bf16, pad w3 to 8 rows."""
    w1, b1, w2, b2, w3, b3 = params
    w3_rows = jnp.zeros((W3_ROWS, HIDDEN), jnp.float32).at[0, :].set(
        w3.reshape(HIDDEN).astype(jnp.float32))
    return (w1.T.astype(jnp.bfloat16),
            b1.reshape(1, HIDDEN).astype(jnp.float32),
            w2.T.astype(jnp.bfloat16),
            b2.reshape(1, HIDDEN).astype(jnp.float32),
            w3_rows,
            b3.reshape(1, 1).astype(jnp.float32))


def reference_forward(x, params):
    """Pure-JAX f32 reference matching the PyTorch module exactly."""
    w1, b1, w2, b2, w3, b3 = params
    h1 = jax.nn.leaky_relu(x @ w1.T + b1, negative_slope=0.2)
    h2 = jax.nn.leaky_relu(h1 @ w2.T + b2, negative_slope=0.2)
    return jax.nn.sigmoid(h2 @ w3.T + b3)


if __name__ == "__main__":
    key = jax.random.PRNGKey(0)
    kx, kp = jax.random.split(key)

    B = 300  # not a tile multiple: exercises ragged last block + 2 grid tiles
    x = jax.random.normal(kx, (B, K_IN), jnp.float32)

    params = init_params(kp)
    kernel_params = prepare_kernel_params(params)

    out = discriminator_forward(x, kernel_params)
    out = jax.block_until_ready(out)

    ref = reference_forward(x, params)
    assert out.shape == (B, 1), out.shape
    # bf16 x/w1/w2 on the MXU path -> looser tolerance than pure f32.
    err = jnp.max(jnp.abs(out - ref))
    assert jnp.allclose(out, ref, atol=2e-2, rtol=2e-2), float(err)

    print("KERNEL_OK")
</pallas_src>

<mosaic_0001>
module attributes {stable_mosaic.version = 11 : i64} {
  func.func @discriminator_kernel(%arg0: i32, %arg1: memref<256x784xf32, #tpu.memory_space<vmem>>, %arg2: memref<784x256xbf16, #tpu.memory_space<vmem>>, %arg3: memref<1x256xf32, #tpu.memory_space<vmem>>, %arg4: memref<256x256xbf16, #tpu.memory_space<vmem>>, %arg5: memref<1x256xf32, #tpu.memory_space<vmem>>, %arg6: memref<8x256xf32, #tpu.memory_space<vmem>>, %arg7: memref<1x1xf32, #tpu.memory_space<vmem>>, %arg8: memref<1x1x256xf32, #tpu.memory_space<vmem>>) attributes {dimension_semantics = [#tpu.dimension_semantics<parallel>], iteration_bounds = array<i64: 2>, scalar_prefetch = 0 : i64, scratch_operands = 0 : i64, tpu.core_type = #tpu.core_type<tc>, window_params = [{transform_indices = @transform_0, window_bounds = array<i64: 256, 784>}, {pipeline_mode = #tpu.pipeline_mode<synchronous>, transform_indices = @transform_1, window_bounds = array<i64: 784, 256>}, {pipeline_mode = #tpu.pipeline_mode<synchronous>, transform_indices = @transform_2, window_bounds = array<i64: 1, 256>}, {pipeline_mode = #tpu.pipeline_mode<synchronous>, transform_indices = @transform_3, window_bounds = array<i64: 256, 256>}, {pipeline_mode = #tpu.pipeline_mode<synchronous>, transform_indices = @transform_4, window_bounds = array<i64: 1, 256>}, {pipeline_mode = #tpu.pipeline_mode<synchronous>, transform_indices = @transform_5, window_bounds = array<i64: 8, 256>}, {pipeline_mode = #tpu.pipeline_mode<synchronous>, transform_indices = @transform_6, window_bounds = array<i64: 1, 1>}, {transform_indices = @transform_7, window_bounds = array<i64: 1, 1, 256>}]} {
    %c0 = arith.constant 0 : index
    %c0_0 = arith.constant 0 : index
    %0 = vector.load %arg1[%c0, %c0_0] : memref<256x784xf32, #tpu.memory_space<vmem>>, vector<256x784xf32>
    %1 = arith.truncf %0 : vector<256x784xf32> to vector<256x784xbf16>
    %c0_1 = arith.constant 0 : index
    %c0_2 = arith.constant 0 : index
    %2 = vector.load %arg2[%c0_1, %c0_2] : memref<784x256xbf16, #tpu.memory_space<vmem>>, vector<784x256xbf16>
    %cst = arith.constant dense<0.000000e+00> : vector<256x256xf32>
    %3 = tpu.matmul %1, %2, %cst {dimension_numbers = #tpu.dot_dimension_numbers<[1], [0], [0], [1], [0, 0, 1, 1], [], []>} : vector<256x784xbf16>, vector<784x256xbf16>, vector<256x256xf32> -> vector<256x256xf32>
    %c0_3 = arith.constant 0 : index
    %c0_4 = arith.constant 0 : index
    %4 = vector.load %arg3[%c0_3, %c0_4] : memref<1x256xf32, #tpu.memory_space<vmem>>, vector<1x256xf32>
    %5 = vector.broadcast %4 : vector<1x256xf32> to vector<256x256xf32>
    %6 = arith.addf %3, %5 : vector<256x256xf32>
    %cst_5 = arith.constant 0.000000e+00 : f32
    %7 = vector.broadcast %cst_5 : f32 to vector<256x256xf32>
    %8 = arith.cmpf ogt, %6, %7 : vector<256x256xf32>
    %cst_6 = arith.constant 2.000000e-01 : f32
    %9 = vector.broadcast %cst_6 : f32 to vector<256x256xf32>
    %10 = arith.mulf %9, %6 : vector<256x256xf32>
    %11 = arith.select %8, %6, %10 : vector<256x256xi1>, vector<256x256xf32>
    %12 = arith.truncf %11 : vector<256x256xf32> to vector<256x256xbf16>
    %c0_7 = arith.constant 0 : index
    %c0_8 = arith.constant 0 : index
    %13 = vector.load %arg4[%c0_7, %c0_8] : memref<256x256xbf16, #tpu.memory_space<vmem>>, vector<256x256xbf16>
    %cst_9 = arith.constant dense<0.000000e+00> : vector<256x256xf32>
    %14 = tpu.matmul %12, %13, %cst_9 {dimension_numbers = #tpu.dot_dimension_numbers<[1], [0], [0], [1], [0, 0, 1, 1], [], []>} : vector<256x256xbf16>, vector<256x256xbf16>, vector<256x256xf32> -> vector<256x256xf32>
    %c0_10 = arith.constant 0 : index
    %c0_11 = arith.constant 0 : index
    %15 = vector.load %arg5[%c0_10, %c0_11] : memref<1x256xf32, #tpu.memory_space<vmem>>, vector<1x256xf32>
    %16 = vector.broadcast %15 : vector<1x256xf32> to vector<256x256xf32>
    %17 = arith.addf %14, %16 : vector<256x256xf32>
    %cst_12 = arith.constant 0.000000e+00 : f32
    %18 = vector.broadcast %cst_12 : f32 to vector<256x256xf32>
    %19 = arith.cmpf ogt, %17, %18 : vector<256x256xf32>
    %cst_13 = arith.constant 2.000000e-01 : f32
    %20 = vector.broadcast %cst_13 : f32 to vector<256x256xf32>
    %21 = arith.mulf %20, %17 : vector<256x256xf32>
    %22 = arith.select %19, %17, %21 : vector<256x256xi1>, vector<256x256xf32>
    %c0_14 = arith.constant 0 : index
    %c0_15 = arith.constant 0 : index
    %23 = vector.load %arg6[%c0_14, %c0_15] : memref<8x256xf32, #tpu.memory_space<vmem>>, vector<8x256xf32>
    %cst_16 = arith.constant dense<0.000000e+00> : vector<8x256xf32>
    %24 = tpu.matmul %23, %22, %cst_16 {dimension_numbers = #tpu.dot_dimension_numbers<[1], [1], [0], [0], [0, 0, 1, 0], [], []>} : vector<8x256xf32>, vector<256x256xf32>, vector<8x256xf32> -> vector<8x256xf32>
    %25 = vector.extract_strided_slice %24 {offsets = [0, 0], sizes = [1, 256], strides = [1, 1]} : vector<8x256xf32> to vector<1x256xf32>
    %c0_17 = arith.constant 0 : index
    %c0_18 = arith.constant 0 : index
    %26 = vector.load %arg7[%c0_17, %c0_18] : memref<1x1xf32, #tpu.memory_space<vmem>>, vector<1x1xf32>
    %27 = vector.broadcast %26 : vector<1x1xf32> to vector<1x256xf32>
    %28 = arith.addf %25, %27 : vector<1x256xf32>
    %29 = arith.negf %28 : vector<1x256xf32>
    %30 = math.exp %29 : vector<1x256xf32>
    %cst_19 = arith.constant 1.000000e+00 : f32
    %31 = vector.broadcast %cst_19 : f32 to vector<1x256xf32>
    %32 = arith.addf %31, %30 : vector<1x256xf32>
    %33 = arith.divf %31, %32 : vector<1x256xf32>
    %c0_20 = arith.constant 0 : index
    %c0_21 = arith.constant 0 : index
    %c0_22 = arith.constant 0 : index
    %34 = vector.load %arg8[%c0_20, %c0_21, %c0_22] : memref<1x1x256xf32, #tpu.memory_space<vmem>>, vector<1x1x256xf32>
    %35 = vector.shape_cast %34 : vector<1x1x256xf32> to vector<1x256xf32>
    %36 = vector.shape_cast %33 : vector<1x256xf32> to vector<1x1x256xf32>
    tpu.vector_store %arg8[%c0_20, %c0_21, %c0_22], %36 {strides = array<i32>} : memref<1x1x256xf32, #tpu.memory_space<vmem>>, vector<1x1x256xf32>,
    return
  }
  func.func @transform_0(%arg0: i32) -> (i32, i32) {
    %c0_i32 = arith.constant 0 : i32
    %c0_i32_0 = arith.constant 0 : i32
    return %arg0, %c0_i32 : i32, i32
  }
  func.func @transform_1(%arg0: i32) -> (i32, i32) {
    %c0_i32 = arith.constant 0 : i32
    %c0_i32_0 = arith.constant 0 : i32
    %c0_i32_1 = arith.constant 0 : i32
    return %c0_i32, %c0_i32_0 : i32, i32
  }
  func.func @transform_2(%arg0: i32) -> (i32, i32) {
    %c0_i32 = arith.constant 0 : i32
    %c0_i32_0 = arith.constant 0 : i32
    %c0_i32_1 = arith.constant 0 : i32
    return %c0_i32, %c0_i32_0 : i32, i32
  }
  func.func @transform_3(%arg0: i32) -> (i32, i32) {
    %c0_i32 = arith.constant 0 : i32
    %c0_i32_0 = arith.constant 0 : i32
    %c0_i32_1 = arith.constant 0 : i32
    return %c0_i32, %c0_i32_0 : i32, i32
  }
  func.func @transform_4(%arg0: i32) -> (i32, i32) {
    %c0_i32 = arith.constant 0 : i32
    %c0_i32_0 = arith.constant 0 : i32
    %c0_i32_1 = arith.constant 0 : i32
    return %c0_i32, %c0_i32_0 : i32, i32
  }
  func.func @transform_5(%arg0: i32) -> (i32, i32) {
    %c0_i32 = arith.constant 0 : i32
    %c0_i32_0 = arith.constant 0 : i32
    %c0_i32_1 = arith.constant 0 : i32
    return %c0_i32, %c0_i32_0 : i32, i32
  }
  func.func @transform_6(%arg0: i32) -> (i32, i32) {
    %c0_i32 = arith.constant 0 : i32
    %c0_i32_0 = arith.constant 0 : i32
    %c0_i32_1 = arith.constant 0 : i32
    return %c0_i32, %c0_i32_0 : i32, i32
  }
  func.func @transform_7(%arg0: i32) -> (i32, i32, i32) {
    %c0_i32 = arith.constant 0 : i32
    %c0_i32_0 = arith.constant 0 : i32
    %c0_i32_1 = arith.constant 0 : i32
    return %arg0, %c0_i32, %c0_i32_0 : i32, i32, i32
  }
}

</mosaic_0001>

<llo_original>
// kernel: tpu_custom_call.1
$region0: #{tpu_custom_call.1}
  #allocation0 [shape = 'u32[]', space=smem, size = 0x4, offset = 0x4, fixed_abs, tag = 'smem constant byte address 0x4 - core index']
  #allocation1 [shape = 'u32[144,128]{1,0:T(1,128)}', space=vmem, size = 0x12000, scoped, tag = 'internal scratch']
  #allocation2 [shape = 'f32[1,1]{1,0:T(1,128)S(1)}', space=vmem, size = 0x200, scoped, tag = 'scoped memory for tpu_custom_call.1']
  %s0 = inlined_call_operand.hbm [shape: f32[300,784], index: 0, kind: input, shape index: {}]
  %s1 = inlined_call_operand.hbm [shape: bf16[784,256], index: 1, kind: input, shape index: {}]
  %s2 = inlined_call_operand.hbm [shape: f32[1,256], index: 2, kind: input, shape index: {}]
  %s3 = inlined_call_operand.hbm [shape: bf16[256,256], index: 3, kind: input, shape index: {}]
  %s4 = inlined_call_operand.hbm [shape: f32[1,256], index: 4, kind: input, shape index: {}]
  %s5 = inlined_call_operand.hbm [shape: f32[8,256], index: 5, kind: input, shape index: {}]
  %s6 = inlined_call_operand.<no memory space> [shape: f32[1,1], index: 6, kind: input, shape index: {}]
  %s7 = inlined_call_operand.hbm [shape: f32[2,1,256], index: 7, kind: output, shape index: {}]
  %s8 = sld [smem:[#allocation0]]
  $region85: #{tpu_custom_call.1} parent=0
    _
  %s10 = ssub.s32 1, %s8
  %s11 = scalar_select 0, %s10, %s8
  %v12 = vstv %s6
  %13 = vst [vmem:[#allocation2] sm:$0x1] %v12
  $region1: #{tpu_custom_call.1} parent=0
    #allocation3 [shape = 'u8[1835008]{0}', space=vmem, size = 0x1c0000, scoped, tag = 'input window, operand 0']
    #allocation4 [shape = 's32[2]{0}', space=sflag, size = 0x8, scoped, tag = 'scoped memory for tpu_custom_call.1']
    #allocation5 [shape = 's32[2]{0}', space=sflag, size = 0x8, scoped, tag = 'scoped memory for tpu_custom_call.1']
    #allocation6 [shape = 'u8[401408]{0}', space=vmem, size = 0x62000, scoped, tag = 'input window, operand 1, single buffered']
    #allocation7 [shape = 's32[1]{0}', space=sflag, size = 0x4, scoped, tag = 'scoped memory for tpu_custom_call.1']
    #allocation8 [shape = 'u8[1024]{0}', space=vmem, size = 0x400, scoped, tag = 'input window, operand 2, single buffered']
    #allocation9 [shape = 'u8[131072]{0}', space=vmem, size = 0x20000, scoped, tag = 'input window, operand 3, single buffered']
    #allocation10 [shape = 's32[1]{0}', space=sflag, size = 0x4, scoped, tag = 'scoped memory for tpu_custom_call.1']
    #allocation11 [shape = 'u8[1024]{0}', space=vmem, size = 0x400, scoped, tag = 'input window, operand 4, single buffered']
    #allocation12 [shape = 'u8[8192]{0}', space=vmem, size = 0x2000, scoped, tag = 'input window, operand 5, single buffered']
    #allocation13 [shape = 's32[1]{0}', space=sflag, size = 0x4, scoped, tag = 'scoped memory for tpu_custom_call.1']
    #allocation14 [shape = 'u8[2048]{0}', space=vmem, size = 0x800, scoped, tag = 'output window, operand 0']
    %14 = vsyncpa [#allocation4], 0
    %s15 = scalar_lea.sflag [#allocation4], 1
    %16 = vsyncpa %s15, 0
    %17 = vsyncpa [#allocation7], 0
    %18 = vsyncpa [#allocation10], 0
    %19 = vsyncpa [#allocation13], 0
    %20 = vsyncpa [#allocation5], 0
    %s21 = scalar_lea.sflag [#allocation5], 1
    %22 = vsyncpa %s21, 0
    loop: start=0, step=1, limit=4
    $region2: #{tpu_custom_call.1} parent=1 // loop_pre_header
      _
    $region3: #{tpu_custom_call.1} parent=1 // loop_header
      %s24 = sphi 0, %s28
      %p25 = scmp.ge.s32.totalorder %s24, 4
      %s34 = sphi 0, %s36
      %s37 = sphi 0, %s34
      %s38 = sphi 0, %s37
      %s54 = sphi 0, %s38
      %s58 = sphi 0, %s58
      %s60 = sphi 0, %s58
      %s61 = sphi 0, %s60
      %s75 = sphi 0, %s61
      %s79 = sphi 0, %s79
      %s81 = sphi 0, %s79
      %s82 = sphi 0, %s81
      %s96 = sphi 0, %s82
      %s100 = sphi 0, %s100
      %s102 = sphi 0, %s100
      %s103 = sphi 0, %s102
      %s117 = sphi 0, %s103
      %s121 = sphi 0, %s121
      %s123 = sphi 0, %s121
      %s124 = sphi 0, %s123
      %s138 = sphi 0, %s124
      %s142 = sphi 0, %s142
      %s144 = sphi 0, %s142
      %s145 = sphi 0, %s144
      %s159 = sphi 0, %s145
      %s163 = sphi 0, %s163
      %s165 = sphi 0, %s163
      %s166 = sphi 0, %s165
      %s180 = sphi 0, %s166
      %s186 = sphi 0, %s188
      %s189 = sphi 0, %s186
      %s190 = sphi 0, %s189
      %s206 = sphi 0, %s190
    $region4: #{tpu_custom_call.1} parent=1 // loop_header_branch
      %27 = sbr.rel (%p25) target = $region8
    $region5: #{tpu_custom_call.1} parent=1 // loop_body
      %s29 = ssub.s32 %s24, 1
      %s30 = ssub.s32 %s24, 2
      %s31 = sadd.s32 %s24, 1
      %s32 = ssub.s32 %s24, %s31
      %p33 = scmp.eq.s32.totalorder %s32, 0
      %s35 = sadd.s32 %s34, 1
      %s36 = scalar_select %p33, %s34, %s35
      %p39 = pneg %p33
      %p40 = scmp.eq.s32.totalorder %s24, 1
      %p41 = por %p39, %p40
      %p42 = scmp.ne.s32.totalorder %s34, %s37
      %p43 = scmp.eq.s32.totalorder %s24, 0
      %p44 = por %p42, %p43
      %p45 = scmp.ne.s32.totalorder %s34, %s37
      %p46 = scmp.eq.s32.totalorder %s29, 1
      %p47 = por %p45, %p46
      %p48 = scmp.ne.s32.totalorder %s37, %s38
      %p49 = scmp.eq.s32.totalorder %s29, 0
      %p50 = por %p48, %p49
      %p51 = scmp.ne.s32.totalorder %s37, %s38
      %p52 = scmp.eq.s32.totalorder %s30, 1
      %p53 = por %p51, %p52
      %p55 = scmp.ne.s32.totalorder %s38, %s54
      %p56 = scmp.eq.s32.totalorder %s30, 0
      %p57 = por %p55, %p56
      %s59 = sadd.s32 %s58, 1
      %p62 = scmp.eq.s32.totalorder %s24, 1
      %p63 = scmp.ne.s32.totalorder %s58, %s60
      %p64 = scmp.eq.s32.totalorder %s24, 0
      %p65 = por %p63, %p64
      %p66 = scmp.ne.s32.totalorder %s58, %s60
      %p67 = scmp.eq.s32.totalorder %s29, 1
      %p68 = por %p66, %p67
      %p69 = scmp.ne.s32.totalorder %s60, %s61
      %p70 = scmp.eq.s32.totalorder %s29, 0
      %p71 = por %p69, %p70
      %p72 = scmp.ne.s32.totalorder %s60, %s61
      %p73 = scmp.eq.s32.totalorder %s30, 1
      %p74 = por %p72, %p73
      %p76 = scmp.ne.s32.totalorder %s61, %s75
      %p77 = scmp.eq.s32.totalorder %s30, 0
      %p78 = por %p76, %p77
      %s80 = sadd.s32 %s79, 1
      %p83 = scmp.eq.s32.totalorder %s24, 1
      %p84 = scmp.ne.s32.totalorder %s79, %s81
      %p85 = scmp.eq.s32.totalorder %s24, 0
      %p86 = por %p84, %p85
      %p87 = scmp.ne.s32.totalorder %s79, %s81
      %p88 = scmp.eq.s32.totalorder %s29, 1
      %p89 = por %p87, %p88
      %p90 = scmp.ne.s32.totalorder %s81, %s82
      %p91 = scmp.eq.s32.totalorder %s29, 0
      %p92 = por %p90, %p91
      %p93 = scmp.ne.s32.totalorder %s81, %s82
      %p94 = scmp.eq.s32.totalorder %s30, 1
      %p95 = por %p93, %p94
      %p97 = scmp.ne.s32.totalorder %s82, %s96
      %p98 = scmp.eq.s32.totalorder %s30, 0
      %p99 = por %p97, %p98
      %s101 = sadd.s32 %s100, 1
      %p104 = scmp.eq.s32.totalorder %s24, 1
      %p105 = scmp.ne.s32.totalorder %s100, %s102
      %p106 = scmp.eq.s32.totalorder %s24, 0
      %p107 = por %p105, %p106
      %p108 = scmp.ne.s32.totalorder %s100, %s102
      %p109 = scmp.eq.s32.totalorder %s29, 1
      %p110 = por %p108, %p109
      %p111 = scmp.ne.s32.totalorder %s102, %s103
      %p112 = scmp.eq.s32.totalorder %s29, 0
      %p113 = por %p111, %p112
      %p114 = scmp.ne.s32.totalorder %s102, %s103
      %p115 = scmp.eq.s32.totalorder %s30, 1
      %p116 = por %p114, %p115
      %p118 = scmp.ne.s32.totalorder %s103, %s117
      %p119 = scmp.eq.s32.totalorder %s30, 0
      %p120 = por %p118, %p119
      %s122 = sadd.s32 %s121, 1
      %p125 = scmp.eq.s32.totalorder %s24, 1
      %p126 = scmp.ne.s32.totalorder %s121, %s123
      %p127 = scmp.eq.s32.totalorder %s24, 0
      %p128 = por %p126, %p127
      %p129 = scmp.ne.s32.totalorder %s121, %s123
      %p130 = scmp.eq.s32.totalorder %s29, 1
      %p131 = por %p129, %p130
      %p132 = scmp.ne.s32.totalorder %s123, %s124
      %p133 = scmp.eq.s32.totalorder %s29, 0
      %p134 = por %p132, %p133
      %p135 = scmp.ne.s32.totalorder %s123, %s124
      %p136 = scmp.eq.s32.totalorder %s30, 1
      %p137 = por %p135, %p136
      %p139 = scmp.ne.s32.totalorder %s124, %s138
      %p140 = scmp.eq.s32.totalorder %s30, 0
      %p141 = por %p139, %p140
      %s143 = sadd.s32 %s142, 1
      %p146 = scmp.eq.s32.totalorder %s24, 1
      %p147 = scmp.ne.s32.totalorder %s142, %s144
      %p148 = scmp.eq.s32.totalorder %s24, 0
      %p149 = por %p147, %p148
      %p150 = scmp.ne.s32.totalorder %s142, %s144
      %p151 = scmp.eq.s32.totalorder %s29, 1
      %p152 = por %p150, %p151
      %p153 = scmp.ne.s32.totalorder %s144, %s145
      %p154 = scmp.eq.s32.totalorder %s29, 0
      %p155 = por %p153, %p154
      %p156 = scmp.ne.s32.totalorder %s144, %s145
      %p157 = scmp.eq.s32.totalorder %s30, 1
      %p158 = por %p156, %p157
      %p160 = scmp.ne.s32.totalorder %s145, %s159
      %p161 = scmp.eq.s32.totalorder %s30, 0
      %p162 = por %p160, %p161
      %s164 = sadd.s32 %s163, 1
      %p167 = scmp.eq.s32.totalorder %s24, 1
      %p168 = scmp.ne.s32.totalorder %s163, %s165
      %p169 = scmp.eq.s32.totalorder %s24, 0
      %p170 = por %p168, %p169
      %p171 = scmp.ne.s32.totalorder %s163, %s165
      %p172 = scmp.eq.s32.totalorder %s29, 1
      %p173 = por %p171, %p172
      %p174 = scmp.ne.s32.totalorder %s165, %s166
      %p175 = scmp.eq.s32.totalorder %s29, 0
      %p176 = por %p174, %p175
      %p177 = scmp.ne.s32.totalorder %s165, %s166
      %p178 = scmp.eq.s32.totalorder %s30, 1
      %p179 = por %p177, %p178
      %p181 = scmp.ne.s32.totalorder %s166, %s180
      %p182 = scmp.eq.s32.totalorder %s30, 0
      %p183 = por %p181, %p182
      %s184 = ssub.s32 %s24, %s31
      %p185 = scmp.eq.s32.totalorder %s184, 0
      %s187 = sadd.s32 %s186, 1
      %s188 = scalar_select %p185, %s186, %s187
      %p191 = pneg %p185
      %p192 = scmp.eq.s32.totalorder %s24, 1
      %p193 = por %p191, %p192
      %p194 = scmp.ne.s32.totalorder %s186, %s189
      %p195 = scmp.eq.s32.totalorder %s24, 0
      %p196 = por %p194, %p195
      %p197 = scmp.ne.s32.totalorder %s186, %s189
      %p198 = scmp.eq.s32.totalorder %s29, 1
      %p199 = por %p197, %p198
      %p200 = scmp.ne.s32.totalorder %s189, %s190
      %p201 = scmp.eq.s32.totalorder %s29, 0
      %p202 = por %p200, %p201
      %p203 = scmp.ne.s32.totalorder %s189, %s190
      %p204 = scmp.eq.s32.totalorder %s30, 1
      %p205 = por %p203, %p204
      %p207 = scmp.ne.s32.totalorder %s190, %s206
      %p208 = scmp.eq.s32.totalorder %s30, 0
      %p209 = por %p207, %p208
      %p210 = scmp.le.s32.totalorder 1, %s24
      %p211 = scmp.lt.s32.totalorder %s24, 3
      %p212 = pnand %p210, %p211
      %p213 = pneg %p212
      // Predicated region
      $region9: #{tpu_custom_call.1} parent=5 // pred_check
        _
      $region10: #{tpu_custom_call.1} parent=5 // pred_check_branch
        %215 = sbr.rel (%p212) target = $region12
      $region11: #{tpu_custom_call.1} parent=5 // pred_region
        %s216 = ssub.s32 %s24, 1
        // Predicated region
        $region13: #{tpu_custom_call.1} parent=11 // pred_check
          %p217 = pneg %p71
        $region14: #{tpu_custom_call.1} parent=11 // pred_check_branch
          %219 = sbr.rel (%p217) target = $region16
        $region15: #{tpu_custom_call.1} parent=11 // pred_region
          %s221 = ssub.s32 12544, 12544
          %222 = vsyncadd [#allocation7], %s221
          %s223 = sshll.u32 [#allocation6], 4
          %s224 = int_to_ptr.vmem [resolvable:$true] %s223
          %229 = dma.hbm_to_vmem [thread:$0]  %s1, 12544, %s224, [#allocation7], 128, 128, 8
        $region16: #{tpu_custom_call.1} parent=11 // pred_fallthru
          _
        // Predicated region
        $region17: #{tpu_custom_call.1} parent=11 // pred_check
          %p230 = pneg %p92
        $region18: #{tpu_custom_call.1} parent=11 // pred_check_branch
          %232 = sbr.rel (%p230) target = $region20
        $region19: #{tpu_custom_call.1} parent=11 // pred_region
          %s234 = ssub.s32 32, 32
          %235 = vsyncadd [#allocation7], %s234
          %s237 = sshll.u32 [#allocation8], 4
          %s238 = int_to_ptr.vmem [resolvable:$true] %s237
          %240 = dma.hbm_to_vmem [thread:$0]  %s2, 32, %s238, [#allocation7]
        $region20: #{tpu_custom_call.1} parent=11 // pred_fallthru
          _
        // Predicated region
        $region21: #{tpu_custom_call.1} parent=11 // pred_check
          %p241 = pneg %p113
        $region22: #{tpu_custom_call.1} parent=11 // pred_check_branch
          %243 = sbr.rel (%p241) target = $region24
        $region23: #{tpu_custom_call.1} parent=11 // pred_region
          %s245 = ssub.s32 4096, 4096
          %246 = vsyncadd [#allocation10], %s245
          %s247 = sshll.u32 [#allocation9], 4
          %s248 = int_to_ptr.vmem [resolvable:$true] %s247
          %253 = dma.hbm_to_vmem [thread:$0]  %s3, 4096, %s248, [#allocation10], 128, 128, 8
        $region24: #{tpu_custom_call.1} parent=11 // pred_fallthru
          _
        // Predicated region
        $region25: #{tpu_custom_call.1} parent=11 // pred_check
          %p254 = pneg %p134
        $region26: #{tpu_custom_call.1} parent=11 // pred_check_branch
          %256 = sbr.rel (%p254) target = $region28
        $region27: #{tpu_custom_call.1} parent=11 // pred_region
          %s258 = ssub.s32 32, 32
          %259 = vsyncadd [#allocation10], %s258
          %s261 = sshll.u32 [#allocation11], 4
          %s262 = int_to_ptr.vmem [resolvable:$true] %s261
          %264 = dma.hbm_to_vmem [thread:$0]  %s4, 32, %s262, [#allocation10]
        $region28: #{tpu_custom_call.1} parent=11 // pred_fallthru
          _
        // Predicated region
        $region29: #{tpu_custom_call.1} parent=11 // pred_check
          %p265 = pneg %p155
        $region30: #{tpu_custom_call.1} parent=11 // pred_check_branch
          %267 = sbr.rel (%p265) target = $region32
        $region31: #{tpu_custom_call.1} parent=11 // pred_region
          %s269 = ssub.s32 256, 256
          %270 = vsyncadd [#allocation13], %s269
          %s272 = sshll.u32 [#allocation12], 4
          %s273 = int_to_ptr.vmem [resolvable:$true] %s272
          %275 = dma.hbm_to_vmem [thread:$0]  %s5, 256, %s273, [#allocation13]
        $region32: #{tpu_custom_call.1} parent=11 // pred_fallthru
          _
        // Predicated region
        $region33: #{tpu_custom_call.1} parent=11 // pred_check
          %p276 = pneg %p176
        $region34: #{tpu_custom_call.1} parent=11 // pred_check_branch
          %278 = sbr.rel (%p276) target = $region36
        $region35: #{tpu_custom_call.1} parent=11 // pred_region
          _
        $region36: #{tpu_custom_call.1} parent=11 // pred_fallthru
          _
      $region12: #{tpu_custom_call.1} parent=5 // pred_fallthru
        _
      %p279 = scmp.lt.s32.totalorder %s24, 2
      // Predicated region
      $region37: #{tpu_custom_call.1} parent=5 // pred_check
        %p280 = pneg %p279
      $region38: #{tpu_custom_call.1} parent=5 // pred_check_branch
        %282 = sbr.rel (%p280) target = $region40
      $region39: #{tpu_custom_call.1} parent=5 // pred_region
        // Predicated region
        $region41: #{tpu_custom_call.1} parent=39 // pred_check
          %p283 = pneg %p44
        $region42: #{tpu_custom_call.1} parent=39 // pred_check_branch
          %285 = sbr.rel (%p283) target = $region44
        $region43: #{tpu_custom_call.1} parent=39 // pred_region
          %s286 = sand.u32 %s34, 1
          %s287 = scalar_lea.sflag [#allocation4], %s286
          %s288 = sand.u32 %s34, 1
          %s289 = smul.addr %s288, 1792
          %s290 = scalar_lea.vmem [#allocation3], %s289
          %s291 = smul.u32 32, %s24
          %s292 = ssub.s32 38, %s291
          %p293 = scmp.lt.s32.totalorder %s292, 32
          %s294 = scalar_select %p293, %s292, 32
          %s295 = smul.u32 128, %s294
          %s296 = smul.u32 %s295, 7
          %s298 = ssub.s32 28672, %s296
          %299 = vsyncadd %s287, %s298
          %p300 = scmp.ne.s32.totalorder 0, %s296
          %s301 = smul.addr %s291, 7
          %s302 = smul.addr %s301, 128
          %s303 = scalar_lea.hbm %s0, %s302
          %s304 = smul.u32 56, %s294
          %s305 = sshll.u32 %s290, 4
          %s306 = int_to_ptr.vmem [resolvable:$true] %s305
          %s307 = sshll.u32 %s304, 4
          %311 = dma.hbm_to_vmem [thread:$0]  (%p300), %s303, %s307, %s306, %s287, 896, 896, 56
        $region44: #{tpu_custom_call.1} parent=39 // pred_fallthru
          _
      $region40: #{tpu_custom_call.1} parent=5 // pred_fallthru
        _
      %p312 = scmp.le.s32.totalorder 1, %s24
      %p313 = scmp.lt.s32.totalorder %s24, 3
      %p314 = pnand %p312, %p313
      %p315 = pneg %p314
      // Predicated region
      $region45: #{tpu_custom_call.1} parent=5 // pred_check
        _
      $region46: #{tpu_custom_call.1} parent=5 // pred_check_branch
        %317 = sbr.rel (%p314) target = $region48
      $region47: #{tpu_custom_call.1} parent=5 // pred_region
        %s318 = ssub.s32 %s24, 1
        %s319 = sand.u32 %s37, 1
        %s320 = scalar_lea.sflag [#allocation4], %s319
        %s321 = sand.u32 %s37, 1
        %s322 = smul.addr %s321, 1792
        %s323 = scalar_lea.vmem [#allocation3], %s322
        // Predicated region
        $region49: #{tpu_custom_call.1} parent=47 // pred_check
          %p324 = pneg %p50
        $region50: #{tpu_custom_call.1} parent=47 // pred_check_branch
          %326 = sbr.rel (%p324) target = $region52
        $region51: #{tpu_custom_call.1} parent=47 // pred_region
          %327 = dma.done %s320, 28672
        $region52: #{tpu_custom_call.1} parent=47 // pred_fallthru
          _
        // Predicated region
        $region53: #{tpu_custom_call.1} parent=47 // pred_check
          %p328 = pneg %p71
        $region54: #{tpu_custom_call.1} parent=47 // pred_check_branch
          %330 = sbr.rel (%p328) target = $region56
        $region55: #{tpu_custom_call.1} parent=47 // pred_region
          %331 = dma.done [#allocation7], 12544
        $region56: #{tpu_custom_call.1} parent=47 // pred_fallthru
          _
        // Predicated region
        $region57: #{tpu_custom_call.1} parent=47 // pred_check
          %p332 = pneg %p92
        $region58: #{tpu_custom_call.1} parent=47 // pred_check_branch
          %334 = sbr.rel (%p332) target = $region60
        $region59: #{tpu_custom_call.1} parent=47 // pred_region
          %335 = dma.done [#allocation7], 32
        $region60: #{tpu_custom_call.1} parent=47 // pred_fallthru
          _
        // Predicated region
        $region61: #{tpu_custom_call.1} parent=47 // pred_check
          %p336 = pneg %p113
        $region62: #{tpu_custom_call.1} parent=47 // pred_check_branch
          %338 = sbr.rel (%p336) target = $region64
        $region63: #{tpu_custom_call.1} parent=47 // pred_region
          %339 = dma.done [#allocation10], 4096
        $region64: #{tpu_custom_call.1} parent=47 // pred_fallthru
          _
        // Predicated region
        $region65: #{tpu_custom_call.1} parent=47 // pred_check
          %p340 = pneg %p134
        $region66: #{tpu_custom_call.1} parent=47 // pred_check_branch
          %342 = sbr.rel (%p340) target = $region68
        $region67: #{tpu_custom_call.1} parent=47 // pred_region
          %343 = dma.done [#allocation10], 32
        $region68: #{tpu_custom_call.1} parent=47 // pred_fallthru
          _
        // Predicated region
        $region69: #{tpu_custom_call.1} parent=47 // pred_check
          %p344 = pneg %p155
        $region70: #{tpu_custom_call.1} parent=47 // pred_check_branch
          %346 = sbr.rel (%p344) target = $region72
        $region71: #{tpu_custom_call.1} parent=47 // pred_region
          %347 = dma.done [#allocation13], 256
        $region72: #{tpu_custom_call.1} parent=47 // pred_fallthru
          _
        %s348 = sand.u32 %s37, 1
        %s349 = scalar_lea.sflag [#allocation4], %s348
        %s350 = sand.u32 %s37, 1
        %s351 = smul.addr %s350, 1792
        %s352 = scalar_lea.vmem [#allocation3], %s351
        %p353 = pneg %p50
        %p354 = pneg %p47
        %p355 = pneg %p71
        %p356 = pneg %p68
        %p357 = pneg %p92
        %p358 = pneg %p89
        %p359 = pneg %p113
        %p360 = pneg %p110
        %p361 = pneg %p134
        %p362 = pneg %p131
        %p363 = pneg %p155
        %p364 = pneg %p152
        %p365 = pneg %p176
        %p366 = pneg %p173
        %p367 = pneg %p202
        %p368 = pneg %p199
        %s369 = sand.u32 %s189, 1
        %s370 = scalar_lea.sflag [#allocation5], %s369
        %s371 = sand.u32 %s189, 1
        %s372 = smul.addr %s371, 2
        %s373 = scalar_lea.vmem [#allocation14], %s372
        %s374 = smul.u32 32, %s29
        %s375 = ssub.s32 38, %s374
        %p376 = scmp.lt.s32.totalorder %s375, 32
        %s377 = scalar_select %p376, %s375, 32
        %s378 = smul.u32 128, %s377
        %s379 = smul.u32 %s378, 7
        %v381 = vld [vmem:[%s323] sm:$0xff]
        %v382 = vld [vmem:[%s323 + $0x8] sm:$0xff]
        %v383 = vld [vmem:[%s323 + $0x10] sm:$0xff]
        %v384 = vld [vmem:[%s323 + $0x18] sm:$0xff]
        %v385 = vld [vmem:[%s323 + $0x20] sm:$0xff]
        %v386 = vld [vmem:[%s323 + $0x28] sm:$0xff]
        %v387 = vld [vmem:[%s323 + $0x30] sm:$0xff]
        %v388 = vld [vmem:[%s323 + $0x38] sm:$0xff]
        %v389 = vld [vmem:[%s323 + $0x40] sm:$0xff]
        %v390 = vld [vmem:[%s323 + $0x48] sm:$0xff]
        %v391 = vld [vmem:[%s323 + $0x50] sm:$0xff]
        %v392 = vld [vmem:[%s323 + $0x58] sm:$0xff]
        %v393 = vld [vmem:[%s323 + $0x60] sm:$0xff]
        %v394 = vld [vmem:[%s323 + $0x68] sm:$0xff]
        %v395 = vld [vmem:[%s323 + $0x70] sm:$0xff]
        %v396 = vld [vmem:[%s323 + $0x78] sm:$0xff]
        %v397 = vld [vmem:[%s323 + $0x80] sm:$0xff]
        %v398 = vld [vmem:[%s323 + $0x88] sm:$0xff]
        %v399 = vld [vmem:[%s323 + $0x90] sm:$0xff]
        %v400 = vld [vmem:[%s323 + $0x98] sm:$0xff]
        %v401 = vld [vmem:[%s323 + $0xa0] sm:$0xff]
        %v402 = vld [vmem:[%s323 + $0xa8] sm:$0xff]
        %v403 = vld [vmem:[%s323 + $0xb0] sm:$0xff]
        %v404 = vld [vmem:[%s323 + $0xb8] sm:$0xff]
        %v405 = vld [vmem:[%s323 + $0xc0] sm:$0xff]
        %v406 = vld [vmem:[%s323 + $0xc8] sm:$0xff]
        %v407 = vld [vmem:[%s323 + $0xd0] sm:$0xff]
        %v408 = vld [vmem:[%s323 + $0xd8] sm:$0xff]
        %v409 = vld [vmem:[%s323 + $0xe0] sm:$0xff]
        %v410 = vld [vmem:[%s323 + $0xe8] sm:$0xff]
        %v411 = vld [vmem:[%s323 + $0xf0] sm:$0xff]
        %v412 = vld [vmem:[%s323 + $0xf8] sm:$0xff]
        %v413 = vld [vmem:[%s323 + $0x100] sm:$0xff]
        %v414 = vld [vmem:[%s323 + $0x108] sm:$0xff]
        %v415 = vld [vmem:[%s323 + $0x110] sm:$0xff]
        %v416 = vld [vmem:[%s323 + $0x118] sm:$0xff]
        %v417 = vld [vmem:[%s323 + $0x120] sm:$0xff]
        %v418 = vld [vmem:[%s323 + $0x128] sm:$0xff]
        %v419 = vld [vmem:[%s323 + $0x130] sm:$0xff]
        %v420 = vld [vmem:[%s323 + $0x138] sm:$0xff]
        %v421 = vld [vmem:[%s323 + $0x140] sm:$0xff]
        %v422 = vld [vmem:[%s323 + $0x148] sm:$0xff]
        %v423 = vld [vmem:[%s323 + $0x150] sm:$0xff]
        %v424 = vld [vmem:[%s323 + $0x158] sm:$0xff]
        %v425 = vld [vmem:[%s323 + $0x160] sm:$0xff]
        %v426 = vld [vmem:[%s323 + $0x168] sm:$0xff]
        %v427 = vld [vmem:[%s323 + $0x170] sm:$0xff]
        %v428 = vld [vmem:[%s323 + $0x178] sm:$0xff]
        %v429 = vld [vmem:[%s323 + $0x180] sm:$0xff]
        %v430 = vld [vmem:[%s323 + $0x188] sm:$0xff]
        %v431 = vld [vmem:[%s323 + $0x190] sm:$0xff]
        %v432 = vld [vmem:[%s323 + $0x198] sm:$0xff]
        %v433 = vld [vmem:[%s323 + $0x1a0] sm:$0xff]
        %v434 = vld [vmem:[%s323 + $0x1a8] sm:$0xff]
        %v435 = vld [vmem:[%s323 + $0x1b0] sm:$0xff]
        %v436 = vld [vmem:[%s323 + $0x1b8] sm:$0xff]
        %v437 = vld [vmem:[%s323 + $0x1c0] sm:$0xff]
        %v438 = vld [vmem:[%s323 + $0x1c8] sm:$0xff]
        %v439 = vld [vmem:[%s323 + $0x1d0] sm:$0xff]
        %v440 = vld [vmem:[%s323 + $0x1d8] sm:$0xff]
        %v441 = vld [vmem:[%s323 + $0x1e0] sm:$0xff]
        %v442 = vld [vmem:[%s323 + $0x1e8] sm:$0xff]
        %v443 = vld [vmem:[%s323 + $0x1f0] sm:$0xff]
        %v444 = vld [vmem:[%s323 + $0x1f8] sm:$0xff]
        %v445 = vld [vmem:[%s323 + $0x200] sm:$0xff]
        %v446 = vld [vmem:[%s323 + $0x208] sm:$0xff]
        %v447 = vld [vmem:[%s323 + $0x210] sm:$0xff]
        %v448 = vld [vmem:[%s323 + $0x218] sm:$0xff]
        %v449 = vld [vmem:[%s323 + $0x220] sm:$0xff]
        %v450 = vld [vmem:[%s323 + $0x228] sm:$0xff]
        %v451 = vld [vmem:[%s323 + $0x230] sm:$0xff]
        %v452 = vld [vmem:[%s323 + $0x238] sm:$0xff]
        %v453 = vld [vmem:[%s323 + $0x240] sm:$0xff]
        %v454 = vld [vmem:[%s323 + $0x248] sm:$0xff]
        %v455 = vld [vmem:[%s323 + $0x250] sm:$0xff]
        %v456 = vld [vmem:[%s323 + $0x258] sm:$0xff]
        %v457 = vld [vmem:[%s323 + $0x260] sm:$0xff]
        %v458 = vld [vmem:[%s323 + $0x268] sm:$0xff]
        %v459 = vld [vmem:[%s323 + $0x270] sm:$0xff]
        %v460 = vld [vmem:[%s323 + $0x278] sm:$0xff]
        %v461 = vld [vmem:[%s323 + $0x280] sm:$0xff]
        %v462 = vld [vmem:[%s323 + $0x288] sm:$0xff]
        %v463 = vld [vmem:[%s323 + $0x290] sm:$0xff]
        %v464 = vld [vmem:[%s323 + $0x298] sm:$0xff]
        %v465 = vld [vmem:[%s323 + $0x2a0] sm:$0xff]
        %v466 = vld [vmem:[%s323 + $0x2a8] sm:$0xff]
        %v467 = vld [vmem:[%s323 + $0x2b0] sm:$0xff]
        %v468 = vld [vmem:[%s323 + $0x2b8] sm:$0xff]
        %v469 = vld [vmem:[%s323 + $0x2c0] sm:$0xff]
        %v470 = vld [vmem:[%s323 + $0x2c8] sm:$0xff]
        %v471 = vld [vmem:[%s323 + $0x2d0] sm:$0xff]
        %v472 = vld [vmem:[%s323 + $0x2d8] sm:$0xff]
        %v473 = vld [vmem:[%s323 + $0x2e0] sm:$0xff]
        %v474 = vld [vmem:[%s323 + $0x2e8] sm:$0xff]
        %v475 = vld [vmem:[%s323 + $0x2f0] sm:$0xff]
        %v476 = vld [vmem:[%s323 + $0x2f8] sm:$0xff]
        %v477 = vld [vmem:[%s323 + $0x300] sm:$0xff]
        %v478 = vld [vmem:[%s323 + $0x308] sm:$0xff]
        %v479 = vld [vmem:[%s323 + $0x310] sm:$0xff]
        %v480 = vld [vmem:[%s323 + $0x318] sm:$0xff]
        %v481 = vld [vmem:[%s323 + $0x320] sm:$0xff]
        %v482 = vld [vmem:[%s323 + $0x328] sm:$0xff]
        %v483 = vld [vmem:[%s323 + $0x330] sm:$0xff]
        %v484 = vld [vmem:[%s323 + $0x338] sm:$0xff]
        %v485 = vld [vmem:[%s323 + $0x340] sm:$0xff]
        %v486 = vld [vmem:[%s323 + $0x348] sm:$0xff]
        %v487 = vld [vmem:[%s323 + $0x350] sm:$0xff]
        %v488 = vld [vmem:[%s323 + $0x358] sm:$0xff]
        %v489 = vld [vmem:[%s323 + $0x360] sm:$0xff]
        %v490 = vld [vmem:[%s323 + $0x368] sm:$0xff]
        %v491 = vld [vmem:[%s323 + $0x370] sm:$0xff]
        %v492 = vld [vmem:[%s323 + $0x378] sm:$0xff]
        %v493 = vld [vmem:[%s323 + $0x380] sm:$0xff]
        %v494 = vld [vmem:[%s323 + $0x388] sm:$0xff]
        %v495 = vld [vmem:[%s323 + $0x390] sm:$0xff]
        %v496 = vld [vmem:[%s323 + $0x398] sm:$0xff]
        %v497 = vld [vmem:[%s323 + $0x3a0] sm:$0xff]
        %v498 = vld [vmem:[%s323 + $0x3a8] sm:$0xff]
        %v499 = vld [vmem:[%s323 + $0x3b0] sm:$0xff]
        %v500 = vld [vmem:[%s323 + $0x3b8] sm:$0xff]
        %v501 = vld [vmem:[%s323 + $0x3c0] sm:$0xff]
        %v502 = vld [vmem:[%s323 + $0x3c8] sm:$0xff]
        %v503 = vld [vmem:[%s323 + $0x3d0] sm:$0xff]
        %v504 = vld [vmem:[%s323 + $0x3d8] sm:$0xff]
        %v505 = vld [vmem:[%s323 + $0x3e0] sm:$0xff]
        %v506 = vld [vmem:[%s323 + $0x3e8] sm:$0xff]
        %v507 = vld [vmem:[%s323 + $0x3f0] sm:$0xff]
        %v508 = vld [vmem:[%s323 + $0x3f8] sm:$0xff]
        %v509 = vld [vmem:[%s323 + $0x400] sm:$0xff]
        %v510 = vld [vmem:[%s323 + $0x408] sm:$0xff]
        %v511 = vld [vmem:[%s323 + $0x410] sm:$0xff]
        %v512 = vld [vmem:[%s323 + $0x418] sm:$0xff]
        %v513 = vld [vmem:[%s323 + $0x420] sm:$0xff]
        %v514 = vld [vmem:[%s323 + $0x428] sm:$0xff]
        %v515 = vld [vmem:[%s323 + $0x430] sm:$0xff]
        %v516 = vld [vmem:[%s323 + $0x438] sm:$0xff]
        %v517 = vld [vmem:[%s323 + $0x440] sm:$0xff]
        %v518 = vld [vmem:[%s323 + $0x448] sm:$0xff]
        %v519 = vld [vmem:[%s323 + $0x450] sm:$0xff]
        %v520 = vld [vmem:[%s323 + $0x458] sm:$0xff]
        %v521 = vld [vmem:[%s323 + $0x460] sm:$0xff]
        %v522 = vld [vmem:[%s323 + $0x468] sm:$0xff]
        %v523 = vld [vmem:[%s323 + $0x470] sm:$0xff]
        %v524 = vld [vmem:[%s323 + $0x478] sm:$0xff]
        %v525 = vld [vmem:[%s323 + $0x480] sm:$0xff]
        %v526 = vld [vmem:[%s323 + $0x488] sm:$0xff]
        %v527 = vld [vmem:[%s323 + $0x490] sm:$0xff]
        %v528 = vld [vmem:[%s323 + $0x498] sm:$0xff]
        %v529 = vld [vmem:[%s323 + $0x4a0] sm:$0xff]
        %v530 = vld [vmem:[%s323 + $0x4a8] sm:$0xff]
        %v531 = vld [vmem:[%s323 + $0x4b0] sm:$0xff]
        %v532 = vld [vmem:[%s323 + $0x4b8] sm:$0xff]
        %v533 = vld [vmem:[%s323 + $0x4c0] sm:$0xff]
        %v534 = vld [vmem:[%s323 + $0x4c8] sm:$0xff]
        %v535 = vld [vmem:[%s323 + $0x4d0] sm:$0xff]
        %v536 = vld [vmem:[%s323 + $0x4d8] sm:$0xff]
        %v537 = vld [vmem:[%s323 + $0x4e0] sm:$0xff]
        %v538 = vld [vmem:[%s323 + $0x4e8] sm:$0xff]
        %v539 = vld [vmem:[%s323 + $0x4f0] sm:$0xff]
        %v540 = vld [vmem:[%s323 + $0x4f8] sm:$0xff]
        %v541 = vld [vmem:[%s323 + $0x500] sm:$0xff]
        %v542 = vld [vmem:[%s323 + $0x508] sm:$0xff]
        %v543 = vld [vmem:[%s323 + $0x510] sm:$0xff]
        %v544 = vld [vmem:[%s323 + $0x518] sm:$0xff]
        %v545 = vld [vmem:[%s323 + $0x520] sm:$0xff]
        %v546 = vld [vmem:[%s323 + $0x528] sm:$0xff]
        %v547 = vld [vmem:[%s323 + $0x530] sm:$0xff]
        %v548 = vld [vmem:[%s323 + $0x538] sm:$0xff]
        %v549 = vld [vmem:[%s323 + $0x540] sm:$0xff]
        %v550 = vld [vmem:[%s323 + $0x548] sm:$0xff]
        %v551 = vld [vmem:[%s323 + $0x550] sm:$0xff]
        %v552 = vld [vmem:[%s323 + $0x558] sm:$0xff]
        %v553 = vld [vmem:[%s323 + $0x560] sm:$0xff]
        %v554 = vld [vmem:[%s323 + $0x568] sm:$0xff]
        %v555 = vld [vmem:[%s323 + $0x570] sm:$0xff]
        %v556 = vld [vmem:[%s323 + $0x578] sm:$0xff]
        %v557 = vld [vmem:[%s323 + $0x580] sm:$0xff]
        %v558 = vld [vmem:[%s323 + $0x588] sm:$0xff]
        %v559 = vld [vmem:[%s323 + $0x590] sm:$0xff]
        %v560 = vld [vmem:[%s323 + $0x598] sm:$0xff]
        %v561 = vld [vmem:[%s323 + $0x5a0] sm:$0xff]
        %v562 = vld [vmem:[%s323 + $0x5a8] sm:$0xff]
        %v563 = vld [vmem:[%s323 + $0x5b0] sm:$0xff]
        %v564 = vld [vmem:[%s323 + $0x5b8] sm:$0xff]
        %v565 = vld [vmem:[%s323 + $0x5c0] sm:$0xff]
        %v566 = vld [vmem:[%s323 + $0x5c8] sm:$0xff]
        %v567 = vld [vmem:[%s323 + $0x5d0] sm:$0xff]
        %v568 = vld [vmem:[%s323 + $0x5d8] sm:$0xff]
        %v569 = vld [vmem:[%s323 + $0x5e0] sm:$0xff]
        %v570 = vld [vmem:[%s323 + $0x5e8] sm:$0xff]
        %v571 = vld [vmem:[%s323 + $0x5f0] sm:$0xff]
        %v572 = vld [vmem:[%s323 + $0x5f8] sm:$0xff]
        %v573 = vld [vmem:[%s323 + $0x600] sm:$0xff]
        %v574 = vld [vmem:[%s323 + $0x608] sm:$0xff]
        %v575 = vld [vmem:[%s323 + $0x610] sm:$0xff]
        %v576 = vld [vmem:[%s323 + $0x618] sm:$0xff]
        %v577 = vld [vmem:[%s323 + $0x620] sm:$0xff]
        %v578 = vld [vmem:[%s323 + $0x628] sm:$0xff]
        %v579 = vld [vmem:[%s323 + $0x630] sm:$0xff]
        %v580 = vld [vmem:[%s323 + $0x638] sm:$0xff]
        %v581 = vld [vmem:[%s323 + $0x640] sm:$0xff]
        %v582 = vld [vmem:[%s323 + $0x648] sm:$0xff]
        %v583 = vld [vmem:[%s323 + $0x650] sm:$0xff]
        %v584 = vld [vmem:[%s323 + $0x658] sm:$0xff]
        %v585 = vld [vmem:[%s323 + $0x660] sm:$0xff]
        %v586 = vld [vmem:[%s323 + $0x668] sm:$0xff]
        %v587 = vld [vmem:[%s323 + $0x670] sm:$0xff]
        %v588 = vld [vmem:[%s323 + $0x678] sm:$0xff]
        %v589 = vld [vmem:[%s323 + $0x680] sm:$0xff]
        %v590 = vld [vmem:[%s323 + $0x688] sm:$0xff]
        %v591 = vld [vmem:[%s323 + $0x690] sm:$0xff]
        %v592 = vld [vmem:[%s323 + $0x698] sm:$0xff]
        %v593 = vld [vmem:[%s323 + $0x6a0] sm:$0xff]
        %v594 = vld [vmem:[%s323 + $0x6a8] sm:$0xff]
        %v595 = vld [vmem:[%s323 + $0x6b0] sm:$0xff]
        %v596 = vld [vmem:[%s323 + $0x6b8] sm:$0xff]
        %v597 = vld [vmem:[%s323 + $0x6c0] sm:$0xff]
        %v598 = vld [vmem:[%s323 + $0x6c8] sm:$0xff]
        %v599 = vld [vmem:[%s323 + $0x6d0] sm:$0xff]
        %v600 = vld [vmem:[%s323 + $0x6d8] sm:$0xff]
        %v601 = vld [vmem:[%s323 + $0x6e0] sm:$0xff]
        %v602 = vld [vmem:[%s323 + $0x6e8] sm:$0xff]
        %v603 = vld [vmem:[%s323 + $0x6f0] sm:$0xff]
        %v604 = vld [vmem:[%s323 + $0x6f8] sm:$0xff]
        %v605 = vpack.c.bf16 %v388, %v381
        %v606 = vpack.c.bf16 %v389, %v382
        %v607 = vpack.c.bf16 %v390, %v383
        %v608 = vpack.c.bf16 %v391, %v384
        %v609 = vpack.c.bf16 %v392, %v385
        %v610 = vpack.c.bf16 %v393, %v386
        %v611 = vpack.c.bf16 %v394, %v387
        %v612 = vpack.c.bf16 %v402, %v395
        %v613 = vpack.c.bf16 %v403, %v396
        %v614 = vpack.c.bf16 %v404, %v397
        %v615 = vpack.c.bf16 %v405, %v398
        %v616 = vpack.c.bf16 %v406, %v399
        %v617 = vpack.c.bf16 %v407, %v400
        %v618 = vpack.c.bf16 %v408, %v401
        %v619 = vpack.c.bf16 %v416, %v409
        %v620 = vpack.c.bf16 %v417, %v410
        %v621 = vpack.c.bf16 %v418, %v411
        %v622 = vpack.c.bf16 %v419, %v412
        %v623 = vpack.c.bf16 %v420, %v413
        %v624 = vpack.c.bf16 %v421, %v414
        %v625 = vpack.c.bf16 %v422, %v415
        %v626 = vpack.c.bf16 %v430, %v423
        %v627 = vpack.c.bf16 %v431, %v424
        %v628 = vpack.c.bf16 %v432, %v425
        %v629 = vpack.c.bf16 %v433, %v426
        %v630 = vpack.c.bf16 %v434, %v427
        %v631 = vpack.c.bf16 %v435, %v428
        %v632 = vpack.c.bf16 %v436, %v429
        %v633 = vpack.c.bf16 %v444, %v437
        %v634 = vpack.c.bf16 %v445, %v438
        %v635 = vpack.c.bf16 %v446, %v439
        %v636 = vpack.c.bf16 %v447, %v440
        %v637 = vpack.c.bf16 %v448, %v441
        %v638 = vpack.c.bf16 %v449, %v442
        %v639 = vpack.c.bf16 %v450, %v443
        %v640 = vpack.c.bf16 %v458, %v451
        %v641 = vpack.c.bf16 %v459, %v452
        %v642 = vpack.c.bf16 %v460, %v453
        %v643 = vpack.c.bf16 %v461, %v454
        %v644 = vpack.c.bf16 %v462, %v455
        %v645 = vpack.c.bf16 %v463, %v456
        %v646 = vpack.c.bf16 %v464, %v457
        %v647 = vpack.c.bf16 %v472, %v465
        %v648 = vpack.c.bf16 %v473, %v466
        %v649 = vpack.c.bf16 %v474, %v467
        %v650 = vpack.c.bf16 %v475, %v468
        %v651 = vpack.c.bf16 %v476, %v469
        %v652 = vpack.c.bf16 %v477, %v470
        %v653 = vpack.c.bf16 %v478, %v471
        %v654 = vpack.c.bf16 %v486, %v479
        %v655 = vpack.c.bf16 %v487, %v480
        %v656 = vpack.c.bf16 %v488, %v481
        %v657 = vpack.c.bf16 %v489, %v482
        %v658 = vpack.c.bf16 %v490, %v483
        %v659 = vpack.c.bf16 %v491, %v484
        %v660 = vpack.c.bf16 %v492, %v485
        %v661 = vpack.c.bf16 %v500, %v493
        %v662 = vpack.c.bf16 %v501, %v494
        %v663 = vpack.c.bf16 %v502, %v495
        %v664 = vpack.c.bf16 %v503, %v496
        %v665 = vpack.c.bf16 %v504, %v497
        %v666 = vpack.c.bf16 %v505, %v498
        %v667 = vpack.c.bf16 %v506, %v499
        %v668 = vpack.c.bf16 %v514, %v507
        %v669 = vpack.c.bf16 %v515, %v508
        %v670 = vpack.c.bf16 %v516, %v509
        %v671 = vpack.c.bf16 %v517, %v510
        %v672 = vpack.c.bf16 %v518, %v511
        %v673 = vpack.c.bf16 %v519, %v512
        %v674 = vpack.c.bf16 %v520, %v513
        %v675 = vpack.c.bf16 %v528, %v521
        %v676 = vpack.c.bf16 %v529, %v522
        %v677 = vpack.c.bf16 %v530, %v523
        %v678 = vpack.c.bf16 %v531, %v524
        %v679 = vpack.c.bf16 %v532, %v525
        %v680 = vpack.c.bf16 %v533, %v526
        %v681 = vpack.c.bf16 %v534, %v527
        %v682 = vpack.c.bf16 %v542, %v535
        %v683 = vpack.c.bf16 %v543, %v536
        %v684 = vpack.c.bf16 %v544, %v537
        %v685 = vpack.c.bf16 %v545, %v538
        %v686 = vpack.c.bf16 %v546, %v539
        %v687 = vpack.c.bf16 %v547, %v540
        %v688 = vpack.c.bf16 %v548, %v541
        %v689 = vpack.c.bf16 %v556, %v549
        %v690 = vpack.c.bf16 %v557, %v550
        %v691 = vpack.c.bf16 %v558, %v551
        %v692 = vpack.c.bf16 %v559, %v552
        %v693 = vpack.c.bf16 %v560, %v553
        %v694 = vpack.c.bf16 %v561, %v554
        %v695 = vpack.c.bf16 %v562, %v555
        %v696 = vpack.c.bf16 %v570, %v563
        %v697 = vpack.c.bf16 %v571, %v564
        %v698 = vpack.c.bf16 %v572, %v565
        %v699 = vpack.c.bf16 %v573, %v566
        %v700 = vpack.c.bf16 %v574, %v567
        %v701 = vpack.c.bf16 %v575, %v568
        %v702 = vpack.c.bf16 %v576, %v569
        %v703 = vpack.c.bf16 %v584, %v577
        %v704 = vpack.c.bf16 %v585, %v578
        %v705 = vpack.c.bf16 %v586, %v579
        %v706 = vpack.c.bf16 %v587, %v580
        %v707 = vpack.c.bf16 %v588, %v581
        %v708 = vpack.c.bf16 %v589, %v582
        %v709 = vpack.c.bf16 %v590, %v583
        %v710 = vpack.c.bf16 %v598, %v591
        %v711 = vpack.c.bf16 %v599, %v592
        %v712 = vpack.c.bf16 %v600, %v593
        %v713 = vpack.c.bf16 %v601, %v594
        %v714 = vpack.c.bf16 %v602, %v595
        %v715 = vpack.c.bf16 %v603, %v596
        %v716 = vpack.c.bf16 %v604, %v597
        %v717 = vld [vmem:[#allocation6] sm:$0xff]
        %v718 = vld [vmem:[#allocation6 + $0x8] sm:$0xff]
        %v719 = vld [vmem:[#allocation6 + $0x10] sm:$0xff]
        %v720 = vld [vmem:[#allocation6 + $0x18] sm:$0xff]
        %v721 = vld [vmem:[#allocation6 + $0x20] sm:$0xff]
        %v722 = vld [vmem:[#allocation6 + $0x28] sm:$0xff]
        %v723 = vld [vmem:[#allocation6 + $0x30] sm:$0xff]
        %v724 = vld [vmem:[#allocation6 + $0x38] sm:$0xff]
        %v725 = vld [vmem:[#allocation6 + $0x40] sm:$0xff]
        %v726 = vld [vmem:[#allocation6 + $0x48] sm:$0xff]
        %v727 = vld [vmem:[#allocation6 + $0x50] sm:$0xff]
        %v728 = vld [vmem:[#allocation6 + $0x58] sm:$0xff]
        %v729 = vld [vmem:[#allocation6 + $0x60] sm:$0xff]
        %v730 = vld [vmem:[#allocation6 + $0x68] sm:$0xff]
        %v731 = vld [vmem:[#allocation6 + $0x70] sm:$0xff]
        %v732 = vld [vmem:[#allocation6 + $0x78] sm:$0xff]
        %v733 = vld [vmem:[#allocation6 + $0x80] sm:$0xff]
        %v734 = vld [vmem:[#allocation6 + $0x88] sm:$0xff]
        %v735 = vld [vmem:[#allocation6 + $0x90] sm:$0xff]
        %v736 = vld [vmem:[#allocation6 + $0x98] sm:$0xff]
        %v737 = vld [vmem:[#allocation6 + $0xa0] sm:$0xff]
        %v738 = vld [vmem:[#allocation6 + $0xa8] sm:$0xff]
        %v739 = vld [vmem:[#allocation6 + $0xb0] sm:$0xff]
        %v740 = vld [vmem:[#allocation6 + $0xb8] sm:$0xff]
        %v741 = vld [vmem:[#allocation6 + $0xc0] sm:$0xff]
        %v742 = vld [vmem:[#allocation6 + $0xc8] sm:$0xff]
        %v743 = vld [vmem:[#allocation6 + $0xd0] sm:$0xff]
        %v744 = vld [vmem:[#allocation6 + $0xd8] sm:$0xff]
        %v745 = vld [vmem:[#allocation6 + $0xe0] sm:$0xff]
        %v746 = vld [vmem:[#allocation6 + $0xe8] sm:$0xff]
        %v747 = vld [vmem:[#allocation6 + $0xf0] sm:$0xff]
        %v748 = vld [vmem:[#allocation6 + $0xf8] sm:$0xff]
        %v749 = vld [vmem:[#allocation6 + $0x100] sm:$0xff]
        %v750 = vld [vmem:[#allocation6 + $0x108] sm:$0xff]
        %v751 = vld [vmem:[#allocation6 + $0x110] sm:$0xff]
        %v752 = vld [vmem:[#allocation6 + $0x118] sm:$0xff]
        %v753 = vld [vmem:[#allocation6 + $0x120] sm:$0xff]
        %v754 = vld [vmem:[#allocation6 + $0x128] sm:$0xff]
        %v755 = vld [vmem:[#allocation6 + $0x130] sm:$0xff]
        %v756 = vld [vmem:[#allocation6 + $0x138] sm:$0xff]
        %v757 = vld [vmem:[#allocation6 + $0x140] sm:$0xff]
        %v758 = vld [vmem:[#allocation6 + $0x148] sm:$0xff]
        %v759 = vld [vmem:[#allocation6 + $0x150] sm:$0xff]
        %v760 = vld [vmem:[#allocation6 + $0x158] sm:$0xff]
        %v761 = vld [vmem:[#allocation6 + $0x160] sm:$0xff]
        %v762 = vld [vmem:[#allocation6 + $0x168] sm:$0xff]
        %v763 = vld [vmem:[#allocation6 + $0x170] sm:$0xff]
        %v764 = vld [vmem:[#allocation6 + $0x178] sm:$0xff]
        %v765 = vld [vmem:[#allocation6 + $0x180] sm:$0xff]
        %v766 = vld [vmem:[#allocation6 + $0x188] sm:$0xff]
        %v767 = vld [vmem:[#allocation6 + $0x190] sm:$0xff]
        %v768 = vld [vmem:[#allocation6 + $0x198] sm:$0xff]
        %v769 = vld [vmem:[#allocation6 + $0x1a0] sm:$0xff]
        %v770 = vld [vmem:[#allocation6 + $0x1a8] sm:$0xff]
        %v771 = vld [vmem:[#allocation6 + $0x1b0] sm:$0xff]
        %v772 = vld [vmem:[#allocation6 + $0x1b8] sm:$0xff]
        %v773 = vld [vmem:[#allocation6 + $0x1c0] sm:$0xff]
        %v774 = vld [vmem:[#allocation6 + $0x1c8] sm:$0xff]
        %v775 = vld [vmem:[#allocation6 + $0x1d0] sm:$0xff]
        %v776 = vld [vmem:[#allocation6 + $0x1d8] sm:$0xff]
        %v777 = vld [vmem:[#allocation6 + $0x1e0] sm:$0xff]
        %v778 = vld [vmem:[#allocation6 + $0x1e8] sm:$0xff]
        %v779 = vld [vmem:[#allocation6 + $0x1f0] sm:$0xff]
        %v780 = vld [vmem:[#allocation6 + $0x1f8] sm:$0xff]
        %v781 = vld [vmem:[#allocation6 + $0x200] sm:$0xff]
        %v782 = vld [vmem:[#allocation6 + $0x208] sm:$0xff]
        %v783 = vld [vmem:[#allocation6 + $0x210] sm:$0xff]
        %v784 = vld [vmem:[#allocation6 + $0x218] sm:$0xff]
        %v785 = vld [vmem:[#allocation6 + $0x220] sm:$0xff]
        %v786 = vld [vmem:[#allocation6 + $0x228] sm:$0xff]
        %v787 = vld [vmem:[#allocation6 + $0x230] sm:$0xff]
        %v788 = vld [vmem:[#allocation6 + $0x238] sm:$0xff]
        %v789 = vld [vmem:[#allocation6 + $0x240] sm:$0xff]
        %v790 = vld [vmem:[#allocation6 + $0x248] sm:$0xff]
        %v791 = vld [vmem:[#allocation6 + $0x250] sm:$0xff]
        %v792 = vld [vmem:[#allocation6 + $0x258] sm:$0xff]
        %v793 = vld [vmem:[#allocation6 + $0x260] sm:$0xff]
        %v794 = vld [vmem:[#allocation6 + $0x268] sm:$0xff]
        %v795 = vld [vmem:[#allocation6 + $0x270] sm:$0xff]
        %v796 = vld [vmem:[#allocation6 + $0x278] sm:$0xff]
        %v797 = vld [vmem:[#allocation6 + $0x280] sm:$0xff]
        %v798 = vld [vmem:[#allocation6 + $0x288] sm:$0xff]
        %v799 = vld [vmem:[#allocation6 + $0x290] sm:$0xff]
        %v800 = vld [vmem:[#allocation6 + $0x298] sm:$0xff]
        %v801 = vld [vmem:[#allocation6 + $0x2a0] sm:$0xff]
        %v802 = vld [vmem:[#allocation6 + $0x2a8] sm:$0xff]
        %v803 = vld [vmem:[#allocation6 + $0x2b0] sm:$0xff]
        %v804 = vld [vmem:[#allocation6 + $0x2b8] sm:$0xff]
        %v805 = vld [vmem:[#allocation6 + $0x2c0] sm:$0xff]
        %v806 = vld [vmem:[#allocation6 + $0x2c8] sm:$0xff]
        %v807 = vld [vmem:[#allocation6 + $0x2d0] sm:$0xff]
        %v808 = vld [vmem:[#allocation6 + $0x2d8] sm:$0xff]
        %v809 = vld [vmem:[#allocation6 + $0x2e0] sm:$0xff]
        %v810 = vld [vmem:[#allocation6 + $0x2e8] sm:$0xff]
        %v811 = vld [vmem:[#allocation6 + $0x2f0] sm:$0xff]
        %v812 = vld [vmem:[#allocation6 + $0x2f8] sm:$0xff]
        %v813 = vld [vmem:[#allocation6 + $0x300] sm:$0xff]
        %v814 = vld [vmem:[#allocation6 + $0x308] sm:$0xff]
        %v815 = vld [vmem:[#allocation8] sm:$0x3]
        %v817 = vlaneseq
        %v818 = vshrl.u32 %v817, 7
        %v819 = vsub.s32 0, %v818
        %v820 = vrot.slane %v815, %v819
        %v821 = vlaneseq
        %v822 = vshrl.u32 %v821, 7
        %v823 = vsub.s32 1, %v822
        %v824 = vrot.slane %v815, %v823
        %v925 = vunpack.c.l.b16 %v717
        %v926 = vunpack.c.h.b16 %v717
        %v927 = vunpack.c.l.b16 %v718
        %v928 = vunpack.c.h.b16 %v718
        %v929 = vunpack.c.l.b16 %v719
        %v930 = vunpack.c.h.b16 %v719
        %v931 = vunpack.c.l.b16 %v720
        %v932 = vunpack.c.h.b16 %v720
        %v933 = vunpack.c.l.b16 %v721
        %v934 = vunpack.c.h.b16 %v721
        %v935 = vunpack.c.l.b16 %v722
        %v936 = vunpack.c.h.b16 %v722
        %v937 = vunpack.c.l.b16 %v723
        %v938 = vunpack.c.h.b16 %v723
        %v939 = vunpack.c.l.b16 %v724
        %v940 = vunpack.c.h.b16 %v724
        %v941 = vunpack.c.l.b16 %v725
        %v942 = vunpack.c.h.b16 %v725
        %v943 = vunpack.c.l.b16 %v726
        %v944 = vunpack.c.h.b16 %v726
        %v945 = vunpack.c.l.b16 %v727
        %v946 = vunpack.c.h.b16 %v727
        %v947 = vunpack.c.l.b16 %v728
        %v948 = vunpack.c.h.b16 %v728
        %v949 = vunpack.c.l.b16 %v729
        %v950 = vunpack.c.h.b16 %v729
        %v951 = vunpack.c.l.b16 %v730
        %v952 = vunpack.c.h.b16 %v730
        %v953 = vunpack.c.l.b16 %v731
        %v954 = vunpack.c.h.b16 %v731
        %v955 = vunpack.c.l.b16 %v732
        %v956 = vunpack.c.h.b16 %v732
        %v957 = vunpack.c.l.b16 %v733
        %v958 = vunpack.c.h.b16 %v733
        %v959 = vunpack.c.l.b16 %v734
        %v960 = vunpack.c.h.b16 %v734
        %v961 = vunpack.c.l.b16 %v735
        %v962 = vunpack.c.h.b16 %v735
        %v963 = vunpack.c.l.b16 %v736
        %v964 = vunpack.c.h.b16 %v736
        %v965 = vunpack.c.l.b16 %v737
        %v966 = vunpack.c.h.b16 %v737
        %v967 = vunpack.c.l.b16 %v738
        %v968 = vunpack.c.h.b16 %v738
        %v969 = vunpack.c.l.b16 %v739
        %v970 = vunpack.c.h.b16 %v739
        %v971 = vunpack.c.l.b16 %v740
        %v972 = vunpack.c.h.b16 %v740
        %v973 = vunpack.c.l.b16 %v741
        %v974 = vunpack.c.h.b16 %v741
        %v975 = vunpack.c.l.b16 %v742
        %v976 = vunpack.c.h.b16 %v742
        %v977 = vunpack.c.l.b16 %v743
        %v978 = vunpack.c.h.b16 %v743
        %v979 = vunpack.c.l.b16 %v744
        %v980 = vunpack.c.h.b16 %v744
        %v981 = vunpack.c.l.b16 %v745
        %v982 = vunpack.c.h.b16 %v745
        %v983 = vunpack.c.l.b16 %v746
        %v984 = vunpack.c.h.b16 %v746
        %v985 = vunpack.c.l.b16 %v747
        %v986 = vunpack.c.h.b16 %v747
        %v987 = vunpack.c.l.b16 %v748
        %v988 = vunpack.c.h.b16 %v748
        %v989 = vunpack.c.l.b16 %v749
        %v990 = vunpack.c.h.b16 %v749
        %v991 = vunpack.c.l.b16 %v750
        %v992 = vunpack.c.h.b16 %v750
        %v993 = vunpack.c.l.b16 %v751
        %v994 = vunpack.c.h.b16 %v751
        %v995 = vunpack.c.l.b16 %v752
        %v996 = vunpack.c.h.b16 %v752
        %v997 = vunpack.c.l.b16 %v753
        %v998 = vunpack.c.h.b16 %v753
        %v999 = vunpack.c.l.b16 %v754
        %v1000 = vunpack.c.h.b16 %v754
        %v1001 = vunpack.c.l.b16 %v755
        %v1002 = vunpack.c.h.b16 %v755
        %v1003 = vunpack.c.l.b16 %v756
        %v1004 = vunpack.c.h.b16 %v756
        %v1005 = vunpack.c.l.b16 %v757
        %v1006 = vunpack.c.h.b16 %v757
        %v1007 = vunpack.c.l.b16 %v758
        %v1008 = vunpack.c.h.b16 %v758
        %v1009 = vunpack.c.l.b16 %v759
        %v1010 = vunpack.c.h.b16 %v759
        %v1011 = vunpack.c.l.b16 %v760
        %v1012 = vunpack.c.h.b16 %v760
        %v1013 = vunpack.c.l.b16 %v761
        %v1014 = vunpack.c.h.b16 %v761
        %v1015 = vunpack.c.l.b16 %v762
        %v1016 = vunpack.c.h.b16 %v762
        %v1017 = vunpack.c.l.b16 %v763
        %v1018 = vunpack.c.h.b16 %v763
        %v1019 = vunpack.c.l.b16 %v764
        %v1020 = vunpack.c.h.b16 %v764
        %v1021 = vunpack.c.l.b16 %v765
        %v1022 = vunpack.c.h.b16 %v765
        %v1023 = vunpack.c.l.b16 %v766
        %v1024 = vunpack.c.h.b16 %v766
        %v1025 = vunpack.c.l.b16 %v767
        %v1026 = vunpack.c.h.b16 %v767
        %v1027 = vunpack.c.l.b16 %v768
        %v1028 = vunpack.c.h.b16 %v768
        %v1029 = vunpack.c.l.b16 %v769
        %v1030 = vunpack.c.h.b16 %v769
        %v1031 = vunpack.c.l.b16 %v770
        %v1032 = vunpack.c.h.b16 %v770
        %v1033 = vunpack.c.l.b16 %v771
        %v1034 = vunpack.c.h.b16 %v771
        %v1035 = vunpack.c.l.b16 %v772
        %v1036 = vunpack.c.h.b16 %v772
        %v1037 = vunpack.c.l.b16 %v773
        %v1038 = vunpack.c.h.b16 %v773
        %v1039 = vunpack.c.l.b16 %v774
        %v1040 = vunpack.c.h.b16 %v774
        %v1041 = vunpack.c.l.b16 %v775
        %v1042 = vunpack.c.h.b16 %v775
        %v1043 = vunpack.c.l.b16 %v776
        %v1044 = vunpack.c.h.b16 %v776
        %v1045 = vunpack.c.l.b16 %v777
        %v1046 = vunpack.c.h.b16 %v777
        %v1047 = vunpack.c.l.b16 %v778
        %v1048 = vunpack.c.h.b16 %v778
        %v1049 = vunpack.c.l.b16 %v779
        %v1050 = vunpack.c.h.b16 %v779
        %v1051 = vunpack.c.l.b16 %v780
        %v1052 = vunpack.c.h.b16 %v780
        %v1053 = vunpack.c.l.b16 %v781
        %v1054 = vunpack.c.h.b16 %v781
        %v1055 = vunpack.c.l.b16 %v782
        %v1056 = vunpack.c.h.b16 %v782
        %v1057 = vunpack.c.l.b16 %v783
        %v1058 = vunpack.c.h.b16 %v783
        %v1059 = vunpack.c.l.b16 %v784
        %v1060 = vunpack.c.h.b16 %v784
        %v1061 = vunpack.c.l.b16 %v785
        %v1062 = vunpack.c.h.b16 %v785
        %v1063 = vunpack.c.l.b16 %v786
        %v1064 = vunpack.c.h.b16 %v786
        %v1065 = vunpack.c.l.b16 %v787
        %v1066 = vunpack.c.h.b16 %v787
        %v1067 = vunpack.c.l.b16 %v788
        %v1068 = vunpack.c.h.b16 %v788
        %v1069 = vunpack.c.l.b16 %v789
        %v1070 = vunpack.c.h.b16 %v789
        %v1071 = vunpack.c.l.b16 %v790
        %v1072 = vunpack.c.h.b16 %v790
        %v1073 = vunpack.c.l.b16 %v791
        %v1074 = vunpack.c.h.b16 %v791
        %v1075 = vunpack.c.l.b16 %v792
        %v1076 = vunpack.c.h.b16 %v792
        %v1077 = vunpack.c.l.b16 %v793
        %v1078 = vunpack.c.h.b16 %v793
        %v1079 = vunpack.c.l.b16 %v794
        %v1080 = vunpack.c.h.b16 %v794
        %v1081 = vunpack.c.l.b16 %v795
        %v1082 = vunpack.c.h.b16 %v795
        %v1083 = vunpack.c.l.b16 %v796
        %v1084 = vunpack.c.h.b16 %v796
        %v1085 = vunpack.c.l.b16 %v797
        %v1086 = vunpack.c.h.b16 %v797
        %v1087 = vunpack.c.l.b16 %v798
        %v1088 = vunpack.c.h.b16 %v798
        %v1089 = vunpack.c.l.b16 %v799
        %v1090 = vunpack.c.h.b16 %v799
        %v1091 = vunpack.c.l.b16 %v800
        %v1092 = vunpack.c.h.b16 %v800
        %v1093 = vunpack.c.l.b16 %v801
        %v1094 = vunpack.c.h.b16 %v801
        %v1095 = vunpack.c.l.b16 %v802
        %v1096 = vunpack.c.h.b16 %v802
        %v1097 = vunpack.c.l.b16 %v803
        %v1098 = vunpack.c.h.b16 %v803
        %v1099 = vunpack.c.l.b16 %v804
        %v1100 = vunpack.c.h.b16 %v804
        %v1101 = vunpack.c.l.b16 %v805
        %v1102 = vunpack.c.h.b16 %v805
        %v1103 = vunpack.c.l.b16 %v806
        %v1104 = vunpack.c.h.b16 %v806
        %v1105 = vunpack.c.l.b16 %v807
        %v1106 = vunpack.c.h.b16 %v807
        %v1107 = vunpack.c.l.b16 %v808
        %v1108 = vunpack.c.h.b16 %v808
        %v1109 = vunpack.c.l.b16 %v809
        %v1110 = vunpack.c.h.b16 %v809
        %v1111 = vunpack.c.l.b16 %v810
        %v1112 = vunpack.c.h.b16 %v810
        %v1113 = vunpack.c.l.b16 %v811
        %v1114 = vunpack.c.h.b16 %v811
        %v1115 = vunpack.c.l.b16 %v812
        %v1116 = vunpack.c.h.b16 %v812
        %v1117 = vunpack.c.l.b16 %v813
        %v1118 = vunpack.c.h.b16 %v813
        %v1119 = vunpack.c.l.b16 %v814
        %v1120 = vunpack.c.h.b16 %v814
        %v1121 = vpack.c.b16 %v927, %v925
        %v1122 = vpack.c.b16 %v928, %v926
        %v1123 = vpack.c.b16 %v931, %v929
        %v1124 = vpack.c.b16 %v932, %v930
        %v1125 = vpack.c.b16 %v935, %v933
        %v1126 = vpack.c.b16 %v936, %v934
        %v1127 = vpack.c.b16 %v939, %v937
        %v1128 = vpack.c.b16 %v940, %v938
        %v1129 = vpack.c.b16 %v943, %v941
        %v1130 = vpack.c.b16 %v944, %v942
        %v1131 = vpack.c.b16 %v947, %v945
        %v1132 = vpack.c.b16 %v948, %v946
        %v1133 = vpack.c.b16 %v951, %v949
        %v1134 = vpack.c.b16 %v952, %v950
        %v1135 = vpack.c.b16 %v955, %v953
        %v1136 = vpack.c.b16 %v956, %v954
        %v1137 = vpack.c.b16 %v959, %v957
        %v1138 = vpack.c.b16 %v960, %v958
        %v1139 = vpack.c.b16 %v963, %v961
        %v1140 = vpack.c.b16 %v964, %v962
        %v1141 = vpack.c.b16 %v967, %v965
        %v1142 = vpack.c.b16 %v968, %v966
        %v1143 = vpack.c.b16 %v971, %v969
        %v1144 = vpack.c.b16 %v972, %v970
        %v1145 = vpack.c.b16 %v975, %v973
        %v1146 = vpack.c.b16 %v976, %v974
        %v1147 = vpack.c.b16 %v979, %v977
        %v1148 = vpack.c.b16 %v980, %v978
        %v1149 = vpack.c.b16 %v983, %v981
        %v1150 = vpack.c.b16 %v984, %v982
        %v1151 = vpack.c.b16 %v987, %v985
        %v1152 = vpack.c.b16 %v988, %v986
        %v1153 = vpack.c.b16 %v991, %v989
        %v1154 = vpack.c.b16 %v992, %v990
        %v1155 = vpack.c.b16 %v995, %v993
        %v1156 = vpack.c.b16 %v996, %v994
        %v1157 = vpack.c.b16 %v999, %v997
        %v1158 = vpack.c.b16 %v1000, %v998
        %v1159 = vpack.c.b16 %v1003, %v1001
        %v1160 = vpack.c.b16 %v1004, %v1002
        %v1161 = vpack.c.b16 %v1007, %v1005
        %v1162 = vpack.c.b16 %v1008, %v1006
        %v1163 = vpack.c.b16 %v1011, %v1009
        %v1164 = vpack.c.b16 %v1012, %v1010
        %v1165 = vpack.c.b16 %v1015, %v1013
        %v1166 = vpack.c.b16 %v1016, %v1014
        %v1167 = vpack.c.b16 %v1019, %v1017
        %v1168 = vpack.c.b16 %v1020, %v1018
        %v1169 = vpack.c.b16 %v1023, %v1021
        %v1170 = vpack.c.b16 %v1024, %v1022
        %v1171 = vpack.c.b16 %v1027, %v1025
        %v1172 = vpack.c.b16 %v1028, %v1026
        %v1173 = vpack.c.b16 %v1031, %v1029
        %v1174 = vpack.c.b16 %v1032, %v1030
        %v1175 = vpack.c.b16 %v1035, %v1033
        %v1176 = vpack.c.b16 %v1036, %v1034
        %v1177 = vpack.c.b16 %v1039, %v1037
        %v1178 = vpack.c.b16 %v1040, %v1038
        %v1179 = vpack.c.b16 %v1043, %v1041
        %v1180 = vpack.c.b16 %v1044, %v1042
        %v1181 = vpack.c.b16 %v1047, %v1045
        %v1182 = vpack.c.b16 %v1048, %v1046
        %v1183 = vpack.c.b16 %v1051, %v1049
        %v1184 = vpack.c.b16 %v1052, %v1050
        %v1185 = vpack.c.b16 %v1055, %v1053
        %v1186 = vpack.c.b16 %v1056, %v1054
        %v1187 = vpack.c.b16 %v1059, %v1057
        %v1188 = vpack.c.b16 %v1060, %v1058
        %v1189 = vpack.c.b16 %v1063, %v1061
        %v1190 = vpack.c.b16 %v1064, %v1062
        %v1191 = vpack.c.b16 %v1067, %v1065
        %v1192 = vpack.c.b16 %v1068, %v1066
        %v1193 = vpack.c.b16 %v1071, %v1069
        %v1194 = vpack.c.b16 %v1072, %v1070
        %v1195 = vpack.c.b16 %v1075, %v1073
        %v1196 = vpack.c.b16 %v1076, %v1074
        %v1197 = vpack.c.b16 %v1079, %v1077
        %v1198 = vpack.c.b16 %v1080, %v1078
        %v1199 = vpack.c.b16 %v1083, %v1081
        %v1200 = vpack.c.b16 %v1084, %v1082
        %v1201 = vpack.c.b16 %v1087, %v1085
        %v1202 = vpack.c.b16 %v1088, %v1086
        %v1203 = vpack.c.b16 %v1091, %v1089
        %v1204 = vpack.c.b16 %v1092, %v1090
        %v1205 = vpack.c.b16 %v1095, %v1093
        %v1206 = vpack.c.b16 %v1096, %v1094
        %v1207 = vpack.c.b16 %v1099, %v1097
        %v1208 = vpack.c.b16 %v1100, %v1098
        %v1209 = vpack.c.b16 %v1103, %v1101
        %v1210 = vpack.c.b16 %v1104, %v1102
        %v1211 = vpack.c.b16 %v1107, %v1105
        %v1212 = vpack.c.b16 %v1108, %v1106
        %v1213 = vpack.c.b16 %v1111, %v1109
        %v1214 = vpack.c.b16 %v1112, %v1110
        %v1215 = vpack.c.b16 %v1115, %v1113
        %v1216 = vpack.c.b16 %v1116, %v1114
        %v1217 = vpack.c.b16 %v1119, %v1117
        %v1218 = vpack.c.b16 %v1120, %v1118
        %vm1317 = vcmask 130048
        %v1319 = vsel %vm1317, %v611, 0
        %v1322 = vsel %vm1317, %v618, 0
        %v1325 = vsel %vm1317, %v625, 0
        %v1328 = vsel %vm1317, %v632, 0
        %v1331 = vsel %vm1317, %v639, 0
        %v1334 = vsel %vm1317, %v646, 0
        %v1337 = vsel %vm1317, %v653, 0
        %v1340 = vsel %vm1317, %v660, 0
        %v1343 = vsel %vm1317, %v667, 0
        %v1346 = vsel %vm1317, %v674, 0
        %v1349 = vsel %vm1317, %v681, 0
        %v1352 = vsel %vm1317, %v688, 0
        %v1355 = vsel %vm1317, %v695, 0
        %v1358 = vsel %vm1317, %v702, 0
        %v1361 = vsel %vm1317, %v709, 0
        %v1364 = vsel %vm1317, %v716, 0
        %1366 = vmatprep.subr.bf16.mxu0 %v1122
        %1367 = vmatpush1.bf16.msra.mxu0 %v1121
        %1368 = vmatprep.subr.bf16.mxu0 %v1124
        %1369 = vmatpush1.bf16.msra.mxu0 %v1123
        %1370 = vmatprep.subr.bf16.mxu0 %v1126
        %1371 = vmatpush1.bf16.msra.mxu0 %v1125
        %1372 = vmatprep.subr.bf16.mxu0 %v1128
        %1373 = vmatpush1.bf16.msra.mxu0 %v1127
        %1374 = vmatprep.subr.bf16.mxu0 %v1130
        %1375 = vmatpush1.bf16.msra.mxu0 %v1129
        %1376 = vmatprep.subr.bf16.mxu0 %v1132
        %1377 = vmatpush1.bf16.msra.mxu0 %v1131
        %1378 = vmatprep.subr.bf16.mxu0 %v1134
        %1379 = vmatpush1.bf16.msra.mxu0 %v1133
        %1380 = vmatprep.subr.bf16.mxu0 %v1136
        %1381 = vmatpush1.bf16.msra.mxu0 %v1135
        %1382 = vmatprep.subr.bf16.mxu0 %v1138
        %1383 = vmatpush1.bf16.msra.mxu0 %v1137
        %1384 = vmatprep.subr.bf16.mxu0 %v1140
        %1385 = vmatpush1.bf16.msra.mxu0 %v1139
        %1386 = vmatprep.subr.bf16.mxu0 %v1142
        %1387 = vmatpush1.bf16.msra.mxu0 %v1141
        %1388 = vmatprep.subr.bf16.mxu0 %v1144
        %1389 = vmatpush1.bf16.msra.mxu0 %v1143
        %1390 = vmatprep.subr.bf16.mxu0 %v1146
        %1391 = vmatpush1.bf16.msra.mxu0 %v1145
        %1392 = vmatprep.subr.bf16.mxu0 %v1148
        %1393 = vmatpush1.bf16.msra.mxu0 %v1147
        %1394 = vmatprep.subr.bf16.mxu0 %v1150
        %1395 = vmatpush1.bf16.msra.mxu0 %v1149
        %1396 = vmatprep.subr.bf16.mxu0 %v1152
        %1397 = vmatpush1.bf16.msra.mxu0 %v1151
        %1398 = vmatprep.mubr.bf16.mxu0 %v606
        %1399 = vmatmul.mubr.bf16.gmra.mrb[0].mxu0 %v605
        %v1400 = vpop.f32.mrb[0].mxu0
        %v1401 = vadd.f32 %v820, %v1400
        %v1402 = vpop.f32.mrb[0].mxu0
        %v1403 = vadd.f32 %v824, %v1402
        %v1404 = vpop.f32.mrb[0].mxu0
        %v1405 = vadd.f32 %v820, %v1404
        %v1406 = vpop.f32.mrb[0].mxu0
        %v1407 = vadd.f32 %v824, %v1406
        %1408 = vmatprep.mubr.bf16.mxu0 %v613
        %1409 = vmatmul.mubr.bf16.gmra.mrb[0].mxu0 %v612
        %v1410 = vpop.f32.mrb[0].mxu0
        %v1411 = vadd.f32 %v820, %v1410
        %v1412 = vpop.f32.mrb[0].mxu0
        %v1413 = vadd.f32 %v824, %v1412
        %v1414 = vpop.f32.mrb[0].mxu0
        %v1415 = vadd.f32 %v820, %v1414
        %v1416 = vpop.f32.mrb[0].mxu0
        %v1417 = vadd.f32 %v824, %v1416
        %1418 = vmatprep.mubr.bf16.mxu0 %v620
        %1419 = vmatmul.mubr.bf16.gmra.mrb[0].mxu0 %v619
        %v1420 = vpop.f32.mrb[0].mxu0
        %v1421 = vadd.f32 %v820, %v1420
        %v1422 = vpop.f32.mrb[0].mxu0
        %v1423 = vadd.f32 %v824, %v1422
        %v1424 = vpop.f32.mrb[0].mxu0
        %v1425 = vadd.f32 %v820, %v1424
        %v1426 = vpop.f32.mrb[0].mxu0
        %v1427 = vadd.f32 %v824, %v1426
        %1428 = vmatprep.mubr.bf16.mxu0 %v627
        %1429 = vmatmul.mubr.bf16.gmra.mrb[0].mxu0 %v626
        %v1430 = vpop.f32.mrb[0].mxu0
        %v1431 = vadd.f32 %v820, %v1430
        %v1432 = vpop.f32.mrb[0].mxu0
        %v1433 = vadd.f32 %v824, %v1432
        %v1434 = vpop.f32.mrb[0].mxu0
        %v1435 = vadd.f32 %v820, %v1434
        %v1436 = vpop.f32.mrb[0].mxu0
        %v1437 = vadd.f32 %v824, %v1436
        %1438 = vmatprep.mubr.bf16.mxu0 %v634
        %1439 = vmatmul.mubr.bf16.gmra.mrb[0].mxu0 %v633
        %v1440 = vpop.f32.mrb[0].mxu0
        %v1441 = vadd.f32 %v820, %v1440
        %v1442 = vpop.f32.mrb[0].mxu0
        %v1443 = vadd.f32 %v824, %v1442
        %v1444 = vpop.f32.mrb[0].mxu0
        %v1445 = vadd.f32 %v820, %v1444
        %v1446 = vpop.f32.mrb[0].mxu0
        %v1447 = vadd.f32 %v824, %v1446
        %1448 = vmatprep.mubr.bf16.mxu0 %v641
        %1449 = vmatmul.mubr.bf16.gmra.mrb[0].mxu0 %v640
        %v1450 = vpop.f32.mrb[0].mxu0
        %v1451 = vadd.f32 %v820, %v1450
        %v1452 = vpop.f32.mrb[0].mxu0
        %v1453 = vadd.f32 %v824, %v1452
        %v1454 = vpop.f32.mrb[0].mxu0
        %v1455 = vadd.f32 %v820, %v1454
        %v1456 = vpop.f32.mrb[0].mxu0
        %v1457 = vadd.f32 %v824, %v1456
        %1458 = vmatprep.mubr.bf16.mxu0 %v648
        %1459 = vmatmul.mubr.bf16.gmra.mrb[0].mxu0 %v647
        %v1460 = vpop.f32.mrb[0].mxu0
        %v1461 = vadd.f32 %v820, %v1460
        %v1462 = vpop.f32.mrb[0].mxu0
        %v1463 = vadd.f32 %v824, %v1462
        %v1464 = vpop.f32.mrb[0].mxu0
        %v1465 = vadd.f32 %v820, %v1464
        %v1466 = vpop.f32.mrb[0].mxu0
        %v1467 = vadd.f32 %v824, %v1466
        %1468 = vmatprep.mubr.bf16.mxu0 %v655
        %1469 = vmatmul.mubr.bf16.gmra.mrb[0].mxu0 %v654
        %v1470 = vpop.f32.mrb[0].mxu0
        %v1471 = vadd.f32 %v820, %v1470
        %v1472 = vpop.f32.mrb[0].mxu0
        %v1473 = vadd.f32 %v824, %v1472
        %v1474 = vpop.f32.mrb[0].mxu0
        %v1475 = vadd.f32 %v820, %v1474
        %v1476 = vpop.f32.mrb[0].mxu0
        %v1477 = vadd.f32 %v824, %v1476
        %1478 = vmatprep.mubr.bf16.mxu0 %v662
        %1479 = vmatmul.mubr.bf16.gmra.mrb[0].mxu0 %v661
        %v1480 = vpop.f32.mrb[0].mxu0
        %v1481 = vadd.f32 %v820, %v1480
        %v1482 = vpop.f32.mrb[0].mxu0
        %v1483 = vadd.f32 %v824, %v1482
        %v1484 = vpop.f32.mrb[0].mxu0
        %v1485 = vadd.f32 %v820, %v1484
        %v1486 = vpop.f32.mrb[0].mxu0
        %v1487 = vadd.f32 %v824, %v1486
        %1488 = vmatprep.mubr.bf16.mxu0 %v669
        %1489 = vmatmul.mubr.bf16.gmra.mrb[0].mxu0 %v668
        %v1490 = vpop.f32.mrb[0].mxu0
        %v1491 = vadd.f32 %v820, %v1490
        %v1492 = vpop.f32.mrb[0].mxu0
        %v1493 = vadd.f32 %v824, %v1492
        %v1494 = vpop.f32.mrb[0].mxu0
        %v1495 = vadd.f32 %v820, %v1494
        %v1496 = vpop.f32.mrb[0].mxu0
        %v1497 = vadd.f32 %v824, %v1496
        %1498 = vmatprep.mubr.bf16.mxu0 %v676
        %1499 = vmatmul.mubr.bf16.gmra.mrb[0].mxu0 %v675
        %v1500 = vpop.f32.mrb[0].mxu0
        %v1501 = vadd.f32 %v820, %v1500
        %v1502 = vpop.f32.mrb[0].mxu0
        %v1503 = vadd.f32 %v824, %v1502
        %v1504 = vpop.f32.mrb[0].mxu0
        %v1505 = vadd.f32 %v820, %v1504
        %v1506 = vpop.f32.mrb[0].mxu0
        %v1507 = vadd.f32 %v824, %v1506
        %1508 = vmatprep.mubr.bf16.mxu0 %v683
        %1509 = vmatmul.mubr.bf16.gmra.mrb[0].mxu0 %v682
        %v1510 = vpop.f32.mrb[0].mxu0
        %v1511 = vadd.f32 %v820, %v1510
        %v1512 = vpop.f32.mrb[0].mxu0
        %v1513 = vadd.f32 %v824, %v1512
        %v1514 = vpop.f32.mrb[0].mxu0
        %v1515 = vadd.f32 %v820, %v1514
        %v1516 = vpop.f32.mrb[0].mxu0
        %v1517 = vadd.f32 %v824, %v1516
        %1518 = vmatprep.mubr.bf16.mxu0 %v690
        %1519 = vmatmul.mubr.bf16.gmra.mrb[0].mxu0 %v689
        %v1520 = vpop.f32.mrb[0].mxu0
        %v1521 = vadd.f32 %v820, %v1520
        %v1522 = vpop.f32.mrb[0].mxu0
        %v1523 = vadd.f32 %v824, %v1522
        %v1524 = vpop.f32.mrb[0].mxu0
        %v1525 = vadd.f32 %v820, %v1524
        %v1526 = vpop.f32.mrb[0].mxu0
        %v1527 = vadd.f32 %v824, %v1526
        %1528 = vmatprep.mubr.bf16.mxu0 %v697
        %1529 = vmatmul.mubr.bf16.gmra.mrb[0].mxu0 %v696
        %v1530 = vpop.f32.mrb[0].mxu0
        %v1531 = vadd.f32 %v820, %v1530
        %v1532 = vpop.f32.mrb[0].mxu0
        %v1533 = vadd.f32 %v824, %v1532
        %v1534 = vpop.f32.mrb[0].mxu0
        %v1535 = vadd.f32 %v820, %v1534
        %v1536 = vpop.f32.mrb[0].mxu0
        %v1537 = vadd.f32 %v824, %v1536
        %1538 = vmatprep.mubr.bf16.mxu0 %v704
        %1539 = vmatmul.mubr.bf16.gmra.mrb[0].mxu0 %v703
        %v1540 = vpop.f32.mrb[0].mxu0
        %v1541 = vadd.f32 %v820, %v1540
        %v1542 = vpop.f32.mrb[0].mxu0
        %v1543 = vadd.f32 %v824, %v1542
        %v1544 = vpop.f32.mrb[0].mxu0
        %v1545 = vadd.f32 %v820, %v1544
        %v1546 = vpop.f32.mrb[0].mxu0
        %v1547 = vadd.f32 %v824, %v1546
        %1548 = vmatprep.mubr.bf16.mxu0 %v711
        %1549 = vmatmul.mubr.bf16.gmra.mrb[0].mxu0 %v710
        %v1550 = vpop.f32.mrb[0].mxu0
        %v1551 = vadd.f32 %v820, %v1550
        %v1552 = vpop.f32.mrb[0].mxu0
        %v1553 = vadd.f32 %v824, %v1552
        %v1554 = vpop.f32.mrb[0].mxu0
        %v1555 = vadd.f32 %v820, %v1554
        %v1556 = vpop.f32.mrb[0].mxu0
        %v1557 = vadd.f32 %v824, %v1556
        %1558 = vdwg.mxu0
        %1559 = vmatprep.subr.bf16.mxu0 %v1154
        %1560 = vmatpush1.bf16.msra.mxu0 %v1153
        %1561 = vmatprep.subr.bf16.mxu0 %v1156
        %1562 = vmatpush1.bf16.msra.mxu0 %v1155
        %1563 = vmatprep.subr.bf16.mxu0 %v1158
        %1564 = vmatpush1.bf16.msra.mxu0 %v1157
        %1565 = vmatprep.subr.bf16.mxu0 %v1160
        %1566 = vmatpush1.bf16.msra.mxu0 %v1159
        %1567 = vmatprep.subr.bf16.mxu0 %v1162
        %1568 = vmatpush1.bf16.msra.mxu0 %v1161
        %1569 = vmatprep.subr.bf16.mxu0 %v1164
        %1570 = vmatpush1.bf16.msra.mxu0 %v1163
        %1571 = vmatprep.subr.bf16.mxu0 %v1166
        %1572 = vmatpush1.bf16.msra.mxu0 %v1165
        %1573 = vmatprep.subr.bf16.mxu0 %v1168
        %1574 = vmatpush1.bf16.msra.mxu0 %v1167
        %1575 = vmatprep.subr.bf16.mxu0 %v1170
        %1576 = vmatpush1.bf16.msra.mxu0 %v1169
        %1577 = vmatprep.subr.bf16.mxu0 %v1172
        %1578 = vmatpush1.bf16.msra.mxu0 %v1171
        %1579 = vmatprep.subr.bf16.mxu0 %v1174
        %1580 = vmatpush1.bf16.msra.mxu0 %v1173
        %1581 = vmatprep.subr.bf16.mxu0 %v1176
        %1582 = vmatpush1.bf16.msra.mxu0 %v1175
        %1583 = vmatprep.subr.bf16.mxu0 %v1178
        %1584 = vmatpush1.bf16.msra.mxu0 %v1177
        %1585 = vmatprep.subr.bf16.mxu0 %v1180
        %1586 = vmatpush1.bf16.msra.mxu0 %v1179
        %1587 = vmatprep.subr.bf16.mxu0 %v1182
        %1588 = vmatpush1.bf16.msra.mxu0 %v1181
        %1589 = vmatprep.subr.bf16.mxu0 %v1184
        %1590 = vmatpush1.bf16.msra.mxu0 %v1183
        %1591 = vmatprep.mubr.bf16.mxu0 %v608
        %1592 = vmatmul.mubr.bf16.gmra.mrb[0].mxu0 %v607
        %v1593 = vpop.f32.mrb[0].mxu0
        %v1594 = vadd.f32 %v1401, %v1593
        %v1595 = vpop.f32.mrb[0].mxu0
        %v1596 = vadd.f32 %v1403, %v1595
        %v1597 = vpop.f32.mrb[0].mxu0
        %v1598 = vadd.f32 %v1405, %v1597
        %v1599 = vpop.f32.mrb[0].mxu0
        %v1600 = vadd.f32 %v1407, %v1599
        %1601 = vmatprep.mubr.bf16.mxu0 %v615
        %1602 = vmatmul.mubr.bf16.gmra.mrb[0].mxu0 %v614
        %v1603 = vpop.f32.mrb[0].mxu0
        %v1604 = vadd.f32 %v1411, %v1603
        %v1605 = vpop.f32.mrb[0].mxu0
        %v1606 = vadd.f32 %v1413, %v1605
        %v1607 = vpop.f32.mrb[0].mxu0
        %v1608 = vadd.f32 %v1415, %v1607
        %v1609 = vpop.f32.mrb[0].mxu0
        %v1610 = vadd.f32 %v1417, %v1609
        %1611 = vmatprep.mubr.bf16.mxu0 %v622
        %1612 = vmatmul.mubr.bf16.gmra.mrb[0].mxu0 %v621
        %v1613 = vpop.f32.mrb[0].mxu0
        %v1614 = vadd.f32 %v1421, %v1613
        %v1615 = vpop.f32.mrb[0].mxu0
        %v1616 = vadd.f32 %v1423, %v1615
        %v1617 = vpop.f32.mrb[0].mxu0
        %v1618 = vadd.f32 %v1425, %v1617
        %v1619 = vpop.f32.mrb[0].mxu0
        %v1620 = vadd.f32 %v1427, %v1619
        %1621 = vmatprep.mubr.bf16.mxu0 %v629
        %1622 = vmatmul.mubr.bf16.gmra.mrb[0].mxu0 %v628
        %v1623 = vpop.f32.mrb[0].mxu0
        %v1624 = vadd.f32 %v1431, %v1623
        %v1625 = vpop.f32.mrb[0].mxu0
        %v1626 = vadd.f32 %v1433, %v1625
        %v1627 = vpop.f32.mrb[0].mxu0
        %v1628 = vadd.f32 %v1435, %v1627
        %v1629 = vpop.f32.mrb[0].mxu0
        %v1630 = vadd.f32 %v1437, %v1629
        %1631 = vmatprep.mubr.bf16.mxu0 %v636
        %1632 = vmatmul.mubr.bf16.gmra.mrb[0].mxu0 %v635
        %v1633 = vpop.f32.mrb[0].mxu0
        %v1634 = vadd.f32 %v1441, %v1633
        %v1635 = vpop.f32.mrb[0].mxu0
        %v1636 = vadd.f32 %v1443, %v1635
        %v1637 = vpop.f32.mrb[0].mxu0
        %v1638 = vadd.f32 %v1445, %v1637
        %v1639 = vpop.f32.mrb[0].mxu0
        %v1640 = vadd.f32 %v1447, %v1639
        %1641 = vmatprep.mubr.bf16.mxu0 %v643
        %1642 = vmatmul.mubr.bf16.gmra.mrb[0].mxu0 %v642
        %v1643 = vpop.f32.mrb[0].mxu0
        %v1644 = vadd.f32 %v1451, %v1643
        %v1645 = vpop.f32.mrb[0].mxu0
        %v1646 = vadd.f32 %v1453, %v1645
        %v1647 = vpop.f32.mrb[0].mxu0
        %v1648 = vadd.f32 %v1455, %v1647
        %v1649 = vpop.f32.mrb[0].mxu0
        %v1650 = vadd.f32 %v1457, %v1649
        %1651 = vmatprep.mubr.bf16.mxu0 %v650
        %1652 = vmatmul.mubr.bf16.gmra.mrb[0].mxu0 %v649
        %v1653 = vpop.f32.mrb[0].mxu0
        %v1654 = vadd.f32 %v1461, %v1653
        %v1655 = vpop.f32.mrb[0].mxu0
        %v1656 = vadd.f32 %v1463, %v1655
        %v1657 = vpop.f32.mrb[0].mxu0
        %v1658 = vadd.f32 %v1465, %v1657
        %v1659 = vpop.f32.mrb[0].mxu0
        %v1660 = vadd.f32 %v1467, %v1659
        %1661 = vmatprep.mubr.bf16.mxu0 %v657
        %1662 = vmatmul.mubr.bf16.gmra.mrb[0].mxu0 %v656
        %v1663 = vpop.f32.mrb[0].mxu0
        %v1664 = vadd.f32 %v1471, %v1663
        %v1665 = vpop.f32.mrb[0].mxu0
        %v1666 = vadd.f32 %v1473, %v1665
        %v1667 = vpop.f32.mrb[0].mxu0
        %v1668 = vadd.f32 %v1475, %v1667
        %v1669 = vpop.f32.mrb[0].mxu0
        %v1670 = vadd.f32 %v1477, %v1669
        %1671 = vmatprep.mubr.bf16.mxu0 %v664
        %1672 = vmatmul.mubr.bf16.gmra.mrb[0].mxu0 %v663
        %v1673 = vpop.f32.mrb[0].mxu0
        %v1674 = vadd.f32 %v1481, %v1673
        %v1675 = vpop.f32.mrb[0].mxu0
        %v1676 = vadd.f32 %v1483, %v1675
        %v1677 = vpop.f32.mrb[0].mxu0
        %v1678 = vadd.f32 %v1485, %v1677
        %v1679 = vpop.f32.mrb[0].mxu0
        %v1680 = vadd.f32 %v1487, %v1679
        %1681 = vmatprep.mubr.bf16.mxu0 %v671
        %1682 = vmatmul.mubr.bf16.gmra.mrb[0].mxu0 %v670
        %v1683 = vpop.f32.mrb[0].mxu0
        %v1684 = vadd.f32 %v1491, %v1683
        %v1685 = vpop.f32.mrb[0].mxu0
        %v1686 = vadd.f32 %v1493, %v1685
        %v1687 = vpop.f32.mrb[0].mxu0
        %v1688 = vadd.f32 %v1495, %v1687
        %v1689 = vpop.f32.mrb[0].mxu0
        %v1690 = vadd.f32 %v1497, %v1689
        %1691 = vmatprep.mubr.bf16.mxu0 %v678
        %1692 = vmatmul.mubr.bf16.gmra.mrb[0].mxu0 %v677
        %v1693 = vpop.f32.mrb[0].mxu0
        %v1694 = vadd.f32 %v1501, %v1693
        %v1695 = vpop.f32.mrb[0].mxu0
        %v1696 = vadd.f32 %v1503, %v1695
        %v1697 = vpop.f32.mrb[0].mxu0
        %v1698 = vadd.f32 %v1505, %v1697
        %v1699 = vpop.f32.mrb[0].mxu0
        %v1700 = vadd.f32 %v1507, %v1699
        %1701 = vmatprep.mubr.bf16.mxu0 %v685
        %1702 = vmatmul.mubr.bf16.gmra.mrb[0].mxu0 %v684
        %v1703 = vpop.f32.mrb[0].mxu0
        %v1704 = vadd.f32 %v1511, %v1703
        %v1705 = vpop.f32.mrb[0].mxu0
        %v1706 = vadd.f32 %v1513, %v1705
        %v1707 = vpop.f32.mrb[0].mxu0
        %v1708 = vadd.f32 %v1515, %v1707
        %v1709 = vpop.f32.mrb[0].mxu0
        %v1710 = vadd.f32 %v1517, %v1709
        %1711 = vmatprep.mubr.bf16.mxu0 %v692
        %1712 = vmatmul.mubr.bf16.gmra.mrb[0].mxu0 %v691
        %v1713 = vpop.f32.mrb[0].mxu0
        %v1714 = vadd.f32 %v1521, %v1713
        %v1715 = vpop.f32.mrb[0].mxu0
        %v1716 = vadd.f32 %v1523, %v1715
        %v1717 = vpop.f32.mrb[0].mxu0
        %v1718 = vadd.f32 %v1525, %v1717
        %v1719 = vpop.f32.mrb[0].mxu0
        %v1720 = vadd.f32 %v1527, %v1719
        %1721 = vmatprep.mubr.bf16.mxu0 %v699
        %1722 = vmatmul.mubr.bf16.gmra.mrb[0].mxu0 %v698
        %v1723 = vpop.f32.mrb[0].mxu0
        %v1724 = vadd.f32 %v1531, %v1723
        %v1725 = vpop.f32.mrb[0].mxu0
        %v1726 = vadd.f32 %v1533, %v1725
        %v1727 = vpop.f32.mrb[0].mxu0
        %v1728 = vadd.f32 %v1535, %v1727
        %v1729 = vpop.f32.mrb[0].mxu0
        %v1730 = vadd.f32 %v1537, %v1729
        %1731 = vmatprep.mubr.bf16.mxu0 %v706
        %1732 = vmatmul.mubr.bf16.gmra.mrb[0].mxu0 %v705
        %v1733 = vpop.f32.mrb[0].mxu0
        %v1734 = vadd.f32 %v1541, %v1733
        %v1735 = vpop.f32.mrb[0].mxu0
        %v1736 = vadd.f32 %v1543, %v1735
        %v1737 = vpop.f32.mrb[0].mxu0
        %v1738 = vadd.f32 %v1545, %v1737
        %v1739 = vpop.f32.mrb[0].mxu0
        %v1740 = vadd.f32 %v1547, %v1739
        %1741 = vmatprep.mubr.bf16.mxu0 %v713
        %1742 = vmatmul.mubr.bf16.gmra.mrb[0].mxu0 %v712
        %v1743 = vpop.f32.mrb[0].mxu0
        %v1744 = vadd.f32 %v1551, %v1743
        %v1745 = vpop.f32.mrb[0].mxu0
        %v1746 = vadd.f32 %v1553, %v1745
        %v1747 = vpop.f32.mrb[0].mxu0
        %v1748 = vadd.f32 %v1555, %v1747
        %v1749 = vpop.f32.mrb[0].mxu0
        %v1750 = vadd.f32 %v1557, %v1749
        %1751 = vdwg.mxu0
        %1752 = vmatprep.subr.bf16.mxu0 %v1186
        %1753 = vmatpush1.bf16.msra.mxu0 %v1185
        %1754 = vmatprep.subr.bf16.mxu0 %v1188
        %1755 = vmatpush1.bf16.msra.mxu0 %v1187
        %1756 = vmatprep.subr.bf16.mxu0 %v1190
        %1757 = vmatpush1.bf16.msra.mxu0 %v1189
        %1758 = vmatprep.subr.bf16.mxu0 %v1192
        %1759 = vmatpush1.bf16.msra.mxu0 %v1191
        %1760 = vmatprep.subr.bf16.mxu0 %v1194
        %1761 = vmatpush1.bf16.msra.mxu0 %v1193
        %1762 = vmatprep.subr.bf16.mxu0 %v1196
        %1763 = vmatpush1.bf16.msra.mxu0 %v1195
        %1764 = vmatprep.subr.bf16.mxu0 %v1198
        %1765 = vmatpush1.bf16.msra.mxu0 %v1197
        %1766 = vmatprep.subr.bf16.mxu0 %v1200
        %1767 = vmatpush1.bf16.msra.mxu0 %v1199
        %1768 = vmatprep.subr.bf16.mxu0 %v1202
        %1769 = vmatpush1.bf16.msra.mxu0 %v1201
        %1770 = vmatprep.subr.bf16.mxu0 %v1204
        %1771 = vmatpush1.bf16.msra.mxu0 %v1203
        %1772 = vmatprep.subr.bf16.mxu0 %v1206
        %1773 = vmatpush1.bf16.msra.mxu0 %v1205
        %1774 = vmatprep.subr.bf16.mxu0 %v1208
        %1775 = vmatpush1.bf16.msra.mxu0 %v1207
        %1776 = vmatprep.subr.bf16.mxu0 %v1210
        %1777 = vmatpush1.bf16.msra.mxu0 %v1209
        %1778 = vmatprep.subr.bf16.mxu0 %v1212
        %1779 = vmatpush1.bf16.msra.mxu0 %v1211
        %1780 = vmatprep.subr.bf16.mxu0 %v1214
        %1781 = vmatpush1.bf16.msra.mxu0 %v1213
        %1782 = vmatprep.subr.bf16.mxu0 %v1216
        %1783 = vmatpush1.bf16.msra.mxu0 %v1215
        %1784 = vmatprep.mubr.bf16.mxu0 %v610
        %1785 = vmatmul.mubr.bf16.gmra.mrb[0].mxu0 %v609
        %v1786 = vpop.f32.mrb[0].mxu0
        %v1787 = vadd.f32 %v1594, %v1786
        %v1788 = vpop.f32.mrb[0].mxu0
        %v1789 = vadd.f32 %v1596, %v1788
        %v1790 = vpop.f32.mrb[0].mxu0
        %v1791 = vadd.f32 %v1598, %v1790
        %v1792 = vpop.f32.mrb[0].mxu0
        %v1793 = vadd.f32 %v1600, %v1792
        %1794 = vmatprep.mubr.bf16.mxu0 %v617
        %1795 = vmatmul.mubr.bf16.gmra.mrb[0].mxu0 %v616
        %v1796 = vpop.f32.mrb[0].mxu0
        %v1797 = vadd.f32 %v1604, %v1796
        %v1798 = vpop.f32.mrb[0].mxu0
        %v1799 = vadd.f32 %v1606, %v1798
        %v1800 = vpop.f32.mrb[0].mxu0
        %v1801 = vadd.f32 %v1608, %v1800
        %v1802 = vpop.f32.mrb[0].mxu0
        %v1803 = vadd.f32 %v1610, %v1802
        %1804 = vmatprep.mubr.bf16.mxu0 %v624
        %1805 = vmatmul.mubr.bf16.gmra.mrb[0].mxu0 %v623
        %v1806 = vpop.f32.mrb[0].mxu0
        %v1807 = vadd.f32 %v1614, %v1806
        %v1808 = vpop.f32.mrb[0].mxu0
        %v1809 = vadd.f32 %v1616, %v1808
        %v1810 = vpop.f32.mrb[0].mxu0
        %v1811 = vadd.f32 %v1618, %v1810
        %v1812 = vpop.f32.mrb[0].mxu0
        %v1813 = vadd.f32 %v1620, %v1812
        %1814 = vmatprep.mubr.bf16.mxu0 %v631
        %1815 = vmatmul.mubr.bf16.gmra.mrb[0].mxu0 %v630
        %v1816 = vpop.f32.mrb[0].mxu0
        %v1817 = vadd.f32 %v1624, %v1816
        %v1818 = vpop.f32.mrb[0].mxu0
        %v1819 = vadd.f32 %v1626, %v1818
        %v1820 = vpop.f32.mrb[0].mxu0
        %v1821 = vadd.f32 %v1628, %v1820
        %v1822 = vpop.f32.mrb[0].mxu0
        %v1823 = vadd.f32 %v1630, %v1822
        %1824 = vmatprep.mubr.bf16.mxu0 %v638
        %1825 = vmatmul.mubr.bf16.gmra.mrb[0].mxu0 %v637
        %v1826 = vpop.f32.mrb[0].mxu0
        %v1827 = vadd.f32 %v1634, %v1826
        %v1828 = vpop.f32.mrb[0].mxu0
        %v1829 = vadd.f32 %v1636, %v1828
        %v1830 = vpop.f32.mrb[0].mxu0
        %v1831 = vadd.f32 %v1638, %v1830
        %v1832 = vpop.f32.mrb[0].mxu0
        %v1833 = vadd.f32 %v1640, %v1832
        %1834 = vmatprep.mubr.bf16.mxu0 %v645
        %1835 = vmatmul.mubr.bf16.gmra.mrb[0].mxu0 %v644
        %v1836 = vpop.f32.mrb[0].mxu0
        %v1837 = vadd.f32 %v1644, %v1836
        %v1838 = vpop.f32.mrb[0].mxu0
        %v1839 = vadd.f32 %v1646, %v1838
        %v1840 = vpop.f32.mrb[0].mxu0
        %v1841 = vadd.f32 %v1648, %v1840
        %v1842 = vpop.f32.mrb[0].mxu0
        %v1843 = vadd.f32 %v1650, %v1842
        %1844 = vmatprep.mubr.bf16.mxu0 %v652
        %1845 = vmatmul.mubr.bf16.gmra.mrb[0].mxu0 %v651
        %v1846 = vpop.f32.mrb[0].mxu0
        %v1847 = vadd.f32 %v1654, %v1846
        %v1848 = vpop.f32.mrb[0].mxu0
        %v1849 = vadd.f32 %v1656, %v1848
        %v1850 = vpop.f32.mrb[0].mxu0
        %v1851 = vadd.f32 %v1658, %v1850
        %v1852 = vpop.f32.mrb[0].mxu0
        %v1853 = vadd.f32 %v1660, %v1852
        %1854 = vmatprep.mubr.bf16.mxu0 %v659
        %1855 = vmatmul.mubr.bf16.gmra.mrb[0].mxu0 %v658
        %v1856 = vpop.f32.mrb[0].mxu0
        %v1857 = vadd.f32 %v1664, %v1856
        %v1858 = vpop.f32.mrb[0].mxu0
        %v1859 = vadd.f32 %v1666, %v1858
        %v1860 = vpop.f32.mrb[0].mxu0
        %v1861 = vadd.f32 %v1668, %v1860
        %v1862 = vpop.f32.mrb[0].mxu0
        %v1863 = vadd.f32 %v1670, %v1862
        %1864 = vmatprep.mubr.bf16.mxu0 %v666
        %1865 = vmatmul.mubr.bf16.gmra.mrb[0].mxu0 %v665
        %v1866 = vpop.f32.mrb[0].mxu0
        %v1867 = vadd.f32 %v1674, %v1866
        %v1868 = vpop.f32.mrb[0].mxu0
        %v1869 = vadd.f32 %v1676, %v1868
        %v1870 = vpop.f32.mrb[0].mxu0
        %v1871 = vadd.f32 %v1678, %v1870
        %v1872 = vpop.f32.mrb[0].mxu0
        %v1873 = vadd.f32 %v1680, %v1872
        %1874 = vmatprep.mubr.bf16.mxu0 %v673
        %1875 = vmatmul.mubr.bf16.gmra.mrb[0].mxu0 %v672
        %v1876 = vpop.f32.mrb[0].mxu0
        %v1877 = vadd.f32 %v1684, %v1876
        %v1878 = vpop.f32.mrb[0].mxu0
        %v1879 = vadd.f32 %v1686, %v1878
        %v1880 = vpop.f32.mrb[0].mxu0
        %v1881 = vadd.f32 %v1688, %v1880
        %v1882 = vpop.f32.mrb[0].mxu0
        %v1883 = vadd.f32 %v1690, %v1882
        %1884 = vmatprep.mubr.bf16.mxu0 %v680
        %1885 = vmatmul.mubr.bf16.gmra.mrb[0].mxu0 %v679
        %v1886 = vpop.f32.mrb[0].mxu0
        %v1887 = vadd.f32 %v1694, %v1886
        %v1888 = vpop.f32.mrb[0].mxu0
        %v1889 = vadd.f32 %v1696, %v1888
        %v1890 = vpop.f32.mrb[0].mxu0
        %v1891 = vadd.f32 %v1698, %v1890
        %v1892 = vpop.f32.mrb[0].mxu0
        %v1893 = vadd.f32 %v1700, %v1892
        %1894 = vmatprep.mubr.bf16.mxu0 %v687
        %1895 = vmatmul.mubr.bf16.gmra.mrb[0].mxu0 %v686
        %v1896 = vpop.f32.mrb[0].mxu0
        %v1897 = vadd.f32 %v1704, %v1896
        %v1898 = vpop.f32.mrb[0].mxu0
        %v1899 = vadd.f32 %v1706, %v1898
        %v1900 = vpop.f32.mrb[0].mxu0
        %v1901 = vadd.f32 %v1708, %v1900
        %v1902 = vpop.f32.mrb[0].mxu0
        %v1903 = vadd.f32 %v1710, %v1902
        %1904 = vmatprep.mubr.bf16.mxu0 %v694
        %1905 = vmatmul.mubr.bf16.gmra.mrb[0].mxu0 %v693
        %v1906 = vpop.f32.mrb[0].mxu0
        %v1907 = vadd.f32 %v1714, %v1906
        %v1908 = vpop.f32.mrb[0].mxu0
        %v1909 = vadd.f32 %v1716, %v1908
        %v1910 = vpop.f32.mrb[0].mxu0
        %v1911 = vadd.f32 %v1718, %v1910
        %v1912 = vpop.f32.mrb[0].mxu0
        %v1913 = vadd.f32 %v1720, %v1912
        %1914 = vmatprep.mubr.bf16.mxu0 %v701
        %1915 = vmatmul.mubr.bf16.gmra.mrb[0].mxu0 %v700
        %v1916 = vpop.f32.mrb[0].mxu0
        %v1917 = vadd.f32 %v1724, %v1916
        %v1918 = vpop.f32.mrb[0].mxu0
        %v1919 = vadd.f32 %v1726, %v1918
        %v1920 = vpop.f32.mrb[0].mxu0
        %v1921 = vadd.f32 %v1728, %v1920
        %v1922 = vpop.f32.mrb[0].mxu0
        %v1923 = vadd.f32 %v1730, %v1922
        %1924 = vmatprep.mubr.bf16.mxu0 %v708
        %1925 = vmatmul.mubr.bf16.gmra.mrb[0].mxu0 %v707
        %v1926 = vpop.f32.mrb[0].mxu0
        %v1927 = vadd.f32 %v1734, %v1926
        %v1928 = vpop.f32.mrb[0].mxu0
        %v1929 = vadd.f32 %v1736, %v1928
        %v1930 = vpop.f32.mrb[0].mxu0
        %v1931 = vadd.f32 %v1738, %v1930
        %v1932 = vpop.f32.mrb[0].mxu0
        %v1933 = vadd.f32 %v1740, %v1932
        %1934 = vmatprep.mubr.bf16.mxu0 %v715
        %1935 = vmatmul.mubr.bf16.gmra.mrb[0].mxu0 %v714
        %v1936 = vpop.f32.mrb[0].mxu0
        %v1937 = vadd.f32 %v1744, %v1936
        %v1938 = vpop.f32.mrb[0].mxu0
        %v1939 = vadd.f32 %v1746, %v1938
        %v1940 = vpop.f32.mrb[0].mxu0
        %v1941 = vadd.f32 %v1748, %v1940
        %v1942 = vpop.f32.mrb[0].mxu0
        %v1943 = vadd.f32 %v1750, %v1942
        %1944 = vdwg.mxu0
        %1945 = vmatprep.subr.bf16.mxu0 %v1218
        %1946 = vmatpush1.bf16.msra.mxu0 %v1217
        %1947 = vmatprep.subr.bf16.mxu0 0
        %1948 = vmatpush1.bf16.msra.mxu0 0
        %1949 = vmatprep.subr.bf16.mxu0 0
        %1950 = vmatpush1.bf16.msra.mxu0 0
        %1951 = vmatprep.subr.bf16.mxu0 0
        %1952 = vmatpush1.bf16.msra.mxu0 0
        %1953 = vmatprep.subr.bf16.mxu0 0
        %1954 = vmatpush1.bf16.msra.mxu0 0
        %1955 = vmatprep.subr.bf16.mxu0 0
        %1956 = vmatpush1.bf16.msra.mxu0 0
        %1957 = vmatprep.subr.bf16.mxu0 0
        %1958 = vmatpush1.bf16.msra.mxu0 0
        %1959 = vmatprep.subr.bf16.mxu0 0
        %1960 = vmatpush1.bf16.msra.mxu0 0
        %1961 = vmatprep.subr.bf16.mxu0 0
        %1962 = vmatpush1.bf16.msra.mxu0 0
        %1963 = vmatprep.subr.bf16.mxu0 0
        %1964 = vmatpush1.bf16.msra.mxu0 0
        %1965 = vmatprep.subr.bf16.mxu0 0
        %1966 = vmatpush1.bf16.msra.mxu0 0
        %1967 = vmatprep.subr.bf16.mxu0 0
        %1968 = vmatpush1.bf16.msra.mxu0 0
        %1969 = vmatprep.subr.bf16.mxu0 0
        %1970 = vmatpush1.bf16.msra.mxu0 0
        %1971 = vmatprep.subr.bf16.mxu0 0
        %1972 = vmatpush1.bf16.msra.mxu0 0
        %1973 = vmatprep.subr.bf16.mxu0 0
        %1974 = vmatpush1.bf16.msra.mxu0 0
        %1975 = vmatprep.subr.bf16.mxu0 0
        %1976 = vmatpush1.bf16.msra.mxu0 0
        %1977 = vmatprep.mubr.bf16.mxu0 0
        %1978 = vmatmul.mubr.bf16.gmra.mrb[0].mxu0 %v1319
        %v1979 = vpop.f32.mrb[0].mxu0
        %v1980 = vadd.f32 %v1787, %v1979
        %v1981 = vpop.f32.mrb[0].mxu0
        %v1982 = vadd.f32 %v1789, %v1981
        %v1983 = vpop.f32.mrb[0].mxu0
        %v1984 = vadd.f32 %v1791, %v1983
        %v1985 = vpop.f32.mrb[0].mxu0
        %v1986 = vadd.f32 %v1793, %v1985
        %1987 = vmatprep.mubr.bf16.mxu0 0
        %1988 = vmatmul.mubr.bf16.gmra.mrb[0].mxu0 %v1322
        %v1989 = vpop.f32.mrb[0].mxu0
        %v1990 = vadd.f32 %v1797, %v1989
        %v1991 = vpop.f32.mrb[0].mxu0
        %v1992 = vadd.f32 %v1799, %v1991
        %v1993 = vpop.f32.mrb[0].mxu0
        %v1994 = vadd.f32 %v1801, %v1993
        %v1995 = vpop.f32.mrb[0].mxu0
        %v1996 = vadd.f32 %v1803, %v1995
        %1997 = vmatprep.mubr.bf16.mxu0 0
        %1998 = vmatmul.mubr.bf16.gmra.mrb[0].mxu0 %v1325
        %v1999 = vpop.f32.mrb[0].mxu0
        %v2000 = vadd.f32 %v1807, %v1999
        %v2001 = vpop.f32.mrb[0].mxu0
        %v2002 = vadd.f32 %v1809, %v2001
        %v2003 = vpop.f32.mrb[0].mxu0
        %v2004 = vadd.f32 %v1811, %v2003
        %v2005 = vpop.f32.mrb[0].mxu0
        %v2006 = vadd.f32 %v1813, %v2005
        %2007 = vmatprep.mubr.bf16.mxu0 0
        %2008 = vmatmul.mubr.bf16.gmra.mrb[0].mxu0 %v1328
        %v2009 = vpop.f32.mrb[0].mxu0
        %v2010 = vadd.f32 %v1817, %v2009
        %v2011 = vpop.f32.mrb[0].mxu0
        %v2012 = vadd.f32 %v1819, %v2011
        %v2013 = vpop.f32.mrb[0].mxu0
        %v2014 = vadd.f32 %v1821, %v2013
        %v2015 = vpop.f32.mrb[0].mxu0
        %v2016 = vadd.f32 %v1823, %v2015
        %2017 = vmatprep.mubr.bf16.mxu0 0
        %2018 = vmatmul.mubr.bf16.gmra.mrb[0].mxu0 %v1331
        %v2019 = vpop.f32.mrb[0].mxu0
        %v2020 = vadd.f32 %v1827, %v2019
        %v2021 = vpop.f32.mrb[0].mxu0
        %v2022 = vadd.f32 %v1829, %v2021
        %v2023 = vpop.f32.mrb[0].mxu0
        %v2024 = vadd.f32 %v1831, %v2023
        %v2025 = vpop.f32.mrb[0].mxu0
        %v2026 = vadd.f32 %v1833, %v2025
        %2027 = vmatprep.mubr.bf16.mxu0 0
        %2028 = vmatmul.mubr.bf16.gmra.mrb[0].mxu0 %v1334
        %v2029 = vpop.f32.mrb[0].mxu0
        %v2030 = vadd.f32 %v1837, %v2029
        %v2031 = vpop.f32.mrb[0].mxu0
        %v2032 = vadd.f32 %v1839, %v2031
        %v2033 = vpop.f32.mrb[0].mxu0
        %v2034 = vadd.f32 %v1841, %v2033
        %v2035 = vpop.f32.mrb[0].mxu0
        %v2036 = vadd.f32 %v1843, %v2035
        %2037 = vmatprep.mubr.bf16.mxu0 0
        %2038 = vmatmul.mubr.bf16.gmra.mrb[0].mxu0 %v1337
        %v2039 = vpop.f32.mrb[0].mxu0
        %v2040 = vadd.f32 %v1847, %v2039
        %v2041 = vpop.f32.mrb[0].mxu0
        %v2042 = vadd.f32 %v1849, %v2041
        %v2043 = vpop.f32.mrb[0].mxu0
        %v2044 = vadd.f32 %v1851, %v2043
        %v2045 = vpop.f32.mrb[0].mxu0
        %v2046 = vadd.f32 %v1853, %v2045
        %2047 = vmatprep.mubr.bf16.mxu0 0
        %2048 = vmatmul.mubr.bf16.gmra.mrb[0].mxu0 %v1340
        %v2049 = vpop.f32.mrb[0].mxu0
        %v2050 = vadd.f32 %v1857, %v2049
        %v2051 = vpop.f32.mrb[0].mxu0
        %v2052 = vadd.f32 %v1859, %v2051
        %v2053 = vpop.f32.mrb[0].mxu0
        %v2054 = vadd.f32 %v1861, %v2053
        %v2055 = vpop.f32.mrb[0].mxu0
        %v2056 = vadd.f32 %v1863, %v2055
        %2057 = vmatprep.mubr.bf16.mxu0 0
        %2058 = vmatmul.mubr.bf16.gmra.mrb[0].mxu0 %v1343
        %v2059 = vpop.f32.mrb[0].mxu0
        %v2060 = vadd.f32 %v1867, %v2059
        %v2061 = vpop.f32.mrb[0].mxu0
        %v2062 = vadd.f32 %v1869, %v2061
        %v2063 = vpop.f32.mrb[0].mxu0
        %v2064 = vadd.f32 %v1871, %v2063
        %v2065 = vpop.f32.mrb[0].mxu0
        %v2066 = vadd.f32 %v1873, %v2065
        %2067 = vmatprep.mubr.bf16.mxu0 0
        %2068 = vmatmul.mubr.bf16.gmra.mrb[0].mxu0 %v1346
        %v2069 = vpop.f32.mrb[0].mxu0
        %v2070 = vadd.f32 %v1877, %v2069
        %v2071 = vpop.f32.mrb[0].mxu0
        %v2072 = vadd.f32 %v1879, %v2071
        %v2073 = vpop.f32.mrb[0].mxu0
        %v2074 = vadd.f32 %v1881, %v2073
        %v2075 = vpop.f32.mrb[0].mxu0
        %v2076 = vadd.f32 %v1883, %v2075
        %2077 = vmatprep.mubr.bf16.mxu0 0
        %2078 = vmatmul.mubr.bf16.gmra.mrb[0].mxu0 %v1349
        %v2079 = vpop.f32.mrb[0].mxu0
        %v2080 = vadd.f32 %v1887, %v2079
        %v2081 = vpop.f32.mrb[0].mxu0
        %v2082 = vadd.f32 %v1889, %v2081
        %v2083 = vpop.f32.mrb[0].mxu0
        %v2084 = vadd.f32 %v1891, %v2083
        %v2085 = vpop.f32.mrb[0].mxu0
        %v2086 = vadd.f32 %v1893, %v2085
        %2087 = vmatprep.mubr.bf16.mxu0 0
        %2088 = vmatmul.mubr.bf16.gmra.mrb[0].mxu0 %v1352
        %v2089 = vpop.f32.mrb[0].mxu0
        %v2090 = vadd.f32 %v1897, %v2089
        %v2091 = vpop.f32.mrb[0].mxu0
        %v2092 = vadd.f32 %v1899, %v2091
        %v2093 = vpop.f32.mrb[0].mxu0
        %v2094 = vadd.f32 %v1901, %v2093
        %v2095 = vpop.f32.mrb[0].mxu0
        %v2096 = vadd.f32 %v1903, %v2095
        %2097 = vmatprep.mubr.bf16.mxu0 0
        %2098 = vmatmul.mubr.bf16.gmra.mrb[0].mxu0 %v1355
        %v2099 = vpop.f32.mrb[0].mxu0
        %v2100 = vadd.f32 %v1907, %v2099
        %v2101 = vpop.f32.mrb[0].mxu0
        %v2102 = vadd.f32 %v1909, %v2101
        %v2103 = vpop.f32.mrb[0].mxu0
        %v2104 = vadd.f32 %v1911, %v2103
        %v2105 = vpop.f32.mrb[0].mxu0
        %v2106 = vadd.f32 %v1913, %v2105
        %2107 = vmatprep.mubr.bf16.mxu0 0
        %2108 = vmatmul.mubr.bf16.gmra.mrb[0].mxu0 %v1358
        %v2109 = vpop.f32.mrb[0].mxu0
        %v2110 = vadd.f32 %v1917, %v2109
        %v2111 = vpop.f32.mrb[0].mxu0
        %v2112 = vadd.f32 %v1919, %v2111
        %v2113 = vpop.f32.mrb[0].mxu0
        %v2114 = vadd.f32 %v1921, %v2113
        %v2115 = vpop.f32.mrb[0].mxu0
        %v2116 = vadd.f32 %v1923, %v2115
        %2117 = vmatprep.mubr.bf16.mxu0 0
        %2118 = vmatmul.mubr.bf16.gmra.mrb[0].mxu0 %v1361
        %v2119 = vpop.f32.mrb[0].mxu0
        %v2120 = vadd.f32 %v1927, %v2119
        %v2121 = vpop.f32.mrb[0].mxu0
        %v2122 = vadd.f32 %v1929, %v2121
        %v2123 = vpop.f32.mrb[0].mxu0
        %v2124 = vadd.f32 %v1931, %v2123
        %v2125 = vpop.f32.mrb[0].mxu0
        %v2126 = vadd.f32 %v1933, %v2125
        %2127 = vmatprep.mubr.bf16.mxu0 0
        %2128 = vmatmul.mubr.bf16.gmra.mrb[0].mxu0 %v1364
        %v2129 = vpop.f32.mrb[0].mxu0
        %v2130 = vadd.f32 %v1937, %v2129
        %v2131 = vpop.f32.mrb[0].mxu0
        %v2132 = vadd.f32 %v1939, %v2131
        %v2133 = vpop.f32.mrb[0].mxu0
        %v2134 = vadd.f32 %v1941, %v2133
        %v2135 = vpop.f32.mrb[0].mxu0
        %v2136 = vadd.f32 %v1943, %v2135
        %2137 = vdwg.mxu0
        %vm2138 = vcmp.gt.f32.partialorder %v1980, 0.0
        %vm2139 = vcmp.gt.f32.partialorder %v1982, 0.0
        %vm2140 = vcmp.gt.f32.partialorder %v1984, 0.0
        %vm2141 = vcmp.gt.f32.partialorder %v1986, 0.0
        %vm2142 = vcmp.gt.f32.partialorder %v1990, 0.0
        %vm2143 = vcmp.gt.f32.partialorder %v1992, 0.0
        %vm2144 = vcmp.gt.f32.partialorder %v1994, 0.0
        %vm2145 = vcmp.gt.f32.partialorder %v1996, 0.0
        %vm2146 = vcmp.gt.f32.partialorder %v2000, 0.0
        %vm2147 = vcmp.gt.f32.partialorder %v2002, 0.0
        %vm2148 = vcmp.gt.f32.partialorder %v2004, 0.0
        %vm2149 = vcmp.gt.f32.partialorder %v2006, 0.0
        %vm2150 = vcmp.gt.f32.partialorder %v2010, 0.0
        %vm2151 = vcmp.gt.f32.partialorder %v2012, 0.0
        %vm2152 = vcmp.gt.f32.partialorder %v2014, 0.0
        %vm2153 = vcmp.gt.f32.partialorder %v2016, 0.0
        %vm2154 = vcmp.gt.f32.partialorder %v2020, 0.0
        %vm2155 = vcmp.gt.f32.partialorder %v2022, 0.0
        %vm2156 = vcmp.gt.f32.partialorder %v2024, 0.0
        %vm2157 = vcmp.gt.f32.partialorder %v2026, 0.0
        %vm2158 = vcmp.gt.f32.partialorder %v2030, 0.0
        %vm2159 = vcmp.gt.f32.partialorder %v2032, 0.0
        %vm2160 = vcmp.gt.f32.partialorder %v2034, 0.0
        %vm2161 = vcmp.gt.f32.partialorder %v2036, 0.0
        %vm2162 = vcmp.gt.f32.partialorder %v2040, 0.0
        %vm2163 = vcmp.gt.f32.partialorder %v2042, 0.0
        %vm2164 = vcmp.gt.f32.partialorder %v2044, 0.0
        %vm2165 = vcmp.gt.f32.partialorder %v2046, 0.0
        %vm2166 = vcmp.gt.f32.partialorder %v2050, 0.0
        %vm2167 = vcmp.gt.f32.partialorder %v2052, 0.0
        %vm2168 = vcmp.gt.f32.partialorder %v2054, 0.0
        %vm2169 = vcmp.gt.f32.partialorder %v2056, 0.0
        %vm2170 = vcmp.gt.f32.partialorder %v2060, 0.0
        %vm2171 = vcmp.gt.f32.partialorder %v2062, 0.0
        %vm2172 = vcmp.gt.f32.partialorder %v2064, 0.0
        %vm2173 = vcmp.gt.f32.partialorder %v2066, 0.0
        %vm2174 = vcmp.gt.f32.partialorder %v2070, 0.0
        %vm2175 = vcmp.gt.f32.partialorder %v2072, 0.0
        %vm2176 = vcmp.gt.f32.partialorder %v2074, 0.0
        %vm2177 = vcmp.gt.f32.partialorder %v2076, 0.0
        %vm2178 = vcmp.gt.f32.partialorder %v2080, 0.0
        %vm2179 = vcmp.gt.f32.partialorder %v2082, 0.0
        %vm2180 = vcmp.gt.f32.partialorder %v2084, 0.0
        %vm2181 = vcmp.gt.f32.partialorder %v2086, 0.0
        %vm2182 = vcmp.gt.f32.partialorder %v2090, 0.0
        %vm2183 = vcmp.gt.f32.partialorder %v2092, 0.0
        %vm2184 = vcmp.gt.f32.partialorder %v2094, 0.0
        %vm2185 = vcmp.gt.f32.partialorder %v2096, 0.0
        %vm2186 = vcmp.gt.f32.partialorder %v2100, 0.0
        %vm2187 = vcmp.gt.f32.partialorder %v2102, 0.0
        %vm2188 = vcmp.gt.f32.partialorder %v2104, 0.0
        %vm2189 = vcmp.gt.f32.partialorder %v2106, 0.0
        %vm2190 = vcmp.gt.f32.partialorder %v2110, 0.0
        %vm2191 = vcmp.gt.f32.partialorder %v2112, 0.0
        %vm2192 = vcmp.gt.f32.partialorder %v2114, 0.0
        %vm2193 = vcmp.gt.f32.partialorder %v2116, 0.0
        %vm2194 = vcmp.gt.f32.partialorder %v2120, 0.0
        %vm2195 = vcmp.gt.f32.partialorder %v2122, 0.0
        %vm2196 = vcmp.gt.f32.partialorder %v2124, 0.0
        %vm2197 = vcmp.gt.f32.partialorder %v2126, 0.0
        %vm2198 = vcmp.gt.f32.partialorder %v2130, 0.0
        %vm2199 = vcmp.gt.f32.partialorder %v2132, 0.0
        %vm2200 = vcmp.gt.f32.partialorder %v2134, 0.0
        %vm2201 = vcmp.gt.f32.partialorder %v2136, 0.0
        %v2202 = vmul.f32 %v1980, 0.2
        %v2203 = vmul.f32 %v1982, 0.2
        %v2204 = vmul.f32 %v1984, 0.2
        %v2205 = vmul.f32 %v1986, 0.2
        %v2206 = vmul.f32 %v1990, 0.2
        %v2207 = vmul.f32 %v1992, 0.2
        %v2208 = vmul.f32 %v1994, 0.2
        %v2209 = vmul.f32 %v1996, 0.2
        %v2210 = vmul.f32 %v2000, 0.2
        %v2211 = vmul.f32 %v2002, 0.2
        %v2212 = vmul.f32 %v2004, 0.2
        %v2213 = vmul.f32 %v2006, 0.2
        %v2214 = vmul.f32 %v2010, 0.2
        %v2215 = vmul.f32 %v2012, 0.2
        %v2216 = vmul.f32 %v2014, 0.2
        %v2217 = vmul.f32 %v2016, 0.2
        %v2218 = vmul.f32 %v2020, 0.2
        %v2219 = vmul.f32 %v2022, 0.2
        %v2220 = vmul.f32 %v2024, 0.2
        %v2221 = vmul.f32 %v2026, 0.2
        %v2222 = vmul.f32 %v2030, 0.2
        %v2223 = vmul.f32 %v2032, 0.2
        %v2224 = vmul.f32 %v2034, 0.2
        %v2225 = vmul.f32 %v2036, 0.2
        %v2226 = vmul.f32 %v2040, 0.2
        %v2227 = vmul.f32 %v2042, 0.2
        %v2228 = vmul.f32 %v2044, 0.2
        %v2229 = vmul.f32 %v2046, 0.2
        %v2230 = vmul.f32 %v2050, 0.2
        %v2231 = vmul.f32 %v2052, 0.2
        %v2232 = vmul.f32 %v2054, 0.2
        %v2233 = vmul.f32 %v2056, 0.2
        %v2234 = vmul.f32 %v2060, 0.2
        %v2235 = vmul.f32 %v2062, 0.2
        %v2236 = vmul.f32 %v2064, 0.2
        %v2237 = vmul.f32 %v2066, 0.2
        %v2238 = vmul.f32 %v2070, 0.2
        %v2239 = vmul.f32 %v2072, 0.2
        %v2240 = vmul.f32 %v2074, 0.2
        %v2241 = vmul.f32 %v2076, 0.2
        %v2242 = vmul.f32 %v2080, 0.2
        %v2243 = vmul.f32 %v2082, 0.2
        %v2244 = vmul.f32 %v2084, 0.2
        %v2245 = vmul.f32 %v2086, 0.2
        %v2246 = vmul.f32 %v2090, 0.2
        %v2247 = vmul.f32 %v2092, 0.2
        %v2248 = vmul.f32 %v2094, 0.2
        %v2249 = vmul.f32 %v2096, 0.2
        %v2250 = vmul.f32 %v2100, 0.2
        %v2251 = vmul.f32 %v2102, 0.2
        %v2252 = vmul.f32 %v2104, 0.2
        %v2253 = vmul.f32 %v2106, 0.2
        %v2254 = vmul.f32 %v2110, 0.2
        %v2255 = vmul.f32 %v2112, 0.2
        %v2256 = vmul.f32 %v2114, 0.2
        %v2257 = vmul.f32 %v2116, 0.2
        %v2258 = vmul.f32 %v2120, 0.2
        %v2259 = vmul.f32 %v2122, 0.2
        %v2260 = vmul.f32 %v2124, 0.2
        %v2261 = vmul.f32 %v2126, 0.2
        %v2262 = vmul.f32 %v2130, 0.2
        %v2263 = vmul.f32 %v2132, 0.2
        %v2264 = vmul.f32 %v2134, 0.2
        %v2265 = vmul.f32 %v2136, 0.2
        %v2266 = vsel %vm2138, %v1980, %v2202
        %v2267 = vsel %vm2139, %v1982, %v2203
        %v2268 = vsel %vm2140, %v1984, %v2204
        %v2269 = vsel %vm2141, %v1986, %v2205
        %v2270 = vsel %vm2142, %v1990, %v2206
        %v2271 = vsel %vm2143, %v1992, %v2207
        %v2272 = vsel %vm2144, %v1994, %v2208
        %v2273 = vsel %vm2145, %v1996, %v2209
        %v2274 = vsel %vm2146, %v2000, %v2210
        %v2275 = vsel %vm2147, %v2002, %v2211
        %v2276 = vsel %vm2148, %v2004, %v2212
        %v2277 = vsel %vm2149, %v2006, %v2213
        %v2278 = vsel %vm2150, %v2010, %v2214
        %v2279 = vsel %vm2151, %v2012, %v2215
        %v2280 = vsel %vm2152, %v2014, %v2216
        %v2281 = vsel %vm2153, %v2016, %v2217
        %v2282 = vsel %vm2154, %v2020, %v2218
        %v2283 = vsel %vm2155, %v2022, %v2219
        %v2284 = vsel %vm2156, %v2024, %v2220
        %v2285 = vsel %vm2157, %v2026, %v2221
        %v2286 = vsel %vm2158, %v2030, %v2222
        %v2287 = vsel %vm2159, %v2032, %v2223
        %v2288 = vsel %vm2160, %v2034, %v2224
        %v2289 = vsel %vm2161, %v2036, %v2225
        %v2290 = vsel %vm2162, %v2040, %v2226
        %v2291 = vsel %vm2163, %v2042, %v2227
        %v2292 = vsel %vm2164, %v2044, %v2228
        %v2293 = vsel %vm2165, %v2046, %v2229
        %v2294 = vsel %vm2166, %v2050, %v2230
        %v2295 = vsel %vm2167, %v2052, %v2231
        %v2296 = vsel %vm2168, %v2054, %v2232
        %v2297 = vsel %vm2169, %v2056, %v2233
        %v2298 = vsel %vm2170, %v2060, %v2234
        %v2299 = vsel %vm2171, %v2062, %v2235
        %v2300 = vsel %vm2172, %v2064, %v2236
        %v2301 = vsel %vm2173, %v2066, %v2237
        %v2302 = vsel %vm2174, %v2070, %v2238
        %v2303 = vsel %vm2175, %v2072, %v2239
        %v2304 = vsel %vm2176, %v2074, %v2240
        %v2305 = vsel %vm2177, %v2076, %v2241
        %v2306 = vsel %vm2178, %v2080, %v2242
        %v2307 = vsel %vm2179, %v2082, %v2243
        %v2308 = vsel %vm2180, %v2084, %v2244
        %v2309 = vsel %vm2181, %v2086, %v2245
        %v2310 = vsel %vm2182, %v2090, %v2246
        %v2311 = vsel %vm2183, %v2092, %v2247
        %v2312 = vsel %vm2184, %v2094, %v2248
        %v2313 = vsel %vm2185, %v2096, %v2249
        %v2314 = vsel %vm2186, %v2100, %v2250
        %v2315 = vsel %vm2187, %v2102, %v2251
        %v2316 = vsel %vm2188, %v2104, %v2252
        %v2317 = vsel %vm2189, %v2106, %v2253
        %v2318 = vsel %vm2190, %v2110, %v2254
        %v2319 = vsel %vm2191, %v2112, %v2255
        %v2320 = vsel %vm2192, %v2114, %v2256
        %v2321 = vsel %vm2193, %v2116, %v2257
        %v2322 = vsel %vm2194, %v2120, %v2258
        %v2323 = vsel %vm2195, %v2122, %v2259
        %v2324 = vsel %vm2196, %v2124, %v2260
        %v2325 = vsel %vm2197, %v2126, %v2261
        %v2326 = vsel %vm2198, %v2130, %v2262
        %v2327 = vsel %vm2199, %v2132, %v2263
        %v2328 = vsel %vm2200, %v2134, %v2264
        %v2329 = vsel %vm2201, %v2136, %v2265
        %v2330 = vpack.c.bf16 %v2268, %v2266
        %v2331 = vpack.c.bf16 %v2269, %v2267
        %v2332 = vpack.c.bf16 %v2272, %v2270
        %v2333 = vpack.c.bf16 %v2273, %v2271
        %v2334 = vpack.c.bf16 %v2276, %v2274
        %v2335 = vpack.c.bf16 %v2277, %v2275
        %v2336 = vpack.c.bf16 %v2280, %v2278
        %v2337 = vpack.c.bf16 %v2281, %v2279
        %v2338 = vpack.c.bf16 %v2284, %v2282
        %v2339 = vpack.c.bf16 %v2285, %v2283
        %v2340 = vpack.c.bf16 %v2288, %v2286
        %v2341 = vpack.c.bf16 %v2289, %v2287
        %v2342 = vpack.c.bf16 %v2292, %v2290
        %v2343 = vpack.c.bf16 %v2293, %v2291
        %v2344 = vpack.c.bf16 %v2296, %v2294
        %v2345 = vpack.c.bf16 %v2297, %v2295
        %v2346 = vpack.c.bf16 %v2300, %v2298
        %v2347 = vpack.c.bf16 %v2301, %v2299
        %v2348 = vpack.c.bf16 %v2304, %v2302
        %v2349 = vpack.c.bf16 %v2305, %v2303
        %v2350 = vpack.c.bf16 %v2308, %v2306
        %v2351 = vpack.c.bf16 %v2309, %v2307
        %v2352 = vpack.c.bf16 %v2312, %v2310
        %v2353 = vpack.c.bf16 %v2313, %v2311
        %v2354 = vpack.c.bf16 %v2316, %v2314
        %v2355 = vpack.c.bf16 %v2317, %v2315
        %v2356 = vpack.c.bf16 %v2320, %v2318
        %v2357 = vpack.c.bf16 %v2321, %v2319
        %v2358 = vpack.c.bf16 %v2324, %v2322
        %v2359 = vpack.c.bf16 %v2325, %v2323
        %v2360 = vpack.c.bf16 %v2328, %v2326
        %v2361 = vpack.c.bf16 %v2329, %v2327
        %v2362 = vld [vmem:[#allocation9] sm:$0xff]
        %v2363 = vld [vmem:[#allocation9 + $0x8] sm:$0xff]
        %v2364 = vld [vmem:[#allocation9 + $0x10] sm:$0xff]
        %v2365 = vld [vmem:[#allocation9 + $0x18] sm:$0xff]
        %v2366 = vld [vmem:[#allocation9 + $0x20] sm:$0xff]
        %v2367 = vld [vmem:[#allocation9 + $0x28] sm:$0xff]
        %v2368 = vld [vmem:[#allocation9 + $0x30] sm:$0xff]
        %v2369 = vld [vmem:[#allocation9 + $0x38] sm:$0xff]
        %v2370 = vld [vmem:[#allocation9 + $0x40] sm:$0xff]
        %v2371 = vld [vmem:[#allocation9 + $0x48] sm:$0xff]
        %v2372 = vld [vmem:[#allocation9 + $0x50] sm:$0xff]
        %v2373 = vld [vmem:[#allocation9 + $0x58] sm:$0xff]
        %v2374 = vld [vmem:[#allocation9 + $0x60] sm:$0xff]
        %v2375 = vld [vmem:[#allocation9 + $0x68] sm:$0xff]
        %v2376 = vld [vmem:[#allocation9 + $0x70] sm:$0xff]
        %v2377 = vld [vmem:[#allocation9 + $0x78] sm:$0xff]
        %v2378 = vld [vmem:[#allocation9 + $0x80] sm:$0xff]
        %v2379 = vld [vmem:[#allocation9 + $0x88] sm:$0xff]
        %v2380 = vld [vmem:[#allocation9 + $0x90] sm:$0xff]
        %v2381 = vld [vmem:[#allocation9 + $0x98] sm:$0xff]
        %v2382 = vld [vmem:[#allocation9 + $0xa0] sm:$0xff]
        %v2383 = vld [vmem:[#allocation9 + $0xa8] sm:$0xff]
        %v2384 = vld [vmem:[#allocation9 + $0xb0] sm:$0xff]
        %v2385 = vld [vmem:[#allocation9 + $0xb8] sm:$0xff]
        %v2386 = vld [vmem:[#allocation9 + $0xc0] sm:$0xff]
        %v2387 = vld [vmem:[#allocation9 + $0xc8] sm:$0xff]
        %v2388 = vld [vmem:[#allocation9 + $0xd0] sm:$0xff]
        %v2389 = vld [vmem:[#allocation9 + $0xd8] sm:$0xff]
        %v2390 = vld [vmem:[#allocation9 + $0xe0] sm:$0xff]
        %v2391 = vld [vmem:[#allocation9 + $0xe8] sm:$0xff]
        %v2392 = vld [vmem:[#allocation9 + $0xf0] sm:$0xff]
        %v2393 = vld [vmem:[#allocation9 + $0xf8] sm:$0xff]
        %v2394 = vld [vmem:[#allocation11] sm:$0x3]
        %v2396 = vlaneseq
        %v2397 = vshrl.u32 %v2396, 7
        %v2398 = vsub.s32 0, %v2397
        %v2399 = vrot.slane %v2394, %v2398
        %v2400 = vlaneseq
        %v2401 = vshrl.u32 %v2400, 7
        %v2402 = vsub.s32 1, %v2401
        %v2403 = vrot.slane %v2394, %v2402
        %v2438 = vunpack.c.l.b16 %v2362
        %v2439 = vunpack.c.h.b16 %v2362
        %v2440 = vunpack.c.l.b16 %v2363
        %v2441 = vunpack.c.h.b16 %v2363
        %v2442 = vunpack.c.l.b16 %v2364
        %v2443 = vunpack.c.h.b16 %v2364
        %v2444 = vunpack.c.l.b16 %v2365
        %v2445 = vunpack.c.h.b16 %v2365
        %v2446 = vunpack.c.l.b16 %v2366
        %v2447 = vunpack.c.h.b16 %v2366
        %v2448 = vunpack.c.l.b16 %v2367
        %v2449 = vunpack.c.h.b16 %v2367
        %v2450 = vunpack.c.l.b16 %v2368
        %v2451 = vunpack.c.h.b16 %v2368
        %v2452 = vunpack.c.l.b16 %v2369
        %v2453 = vunpack.c.h.b16 %v2369
        %v2454 = vunpack.c.l.b16 %v2370
        %v2455 = vunpack.c.h.b16 %v2370
        %v2456 = vunpack.c.l.b16 %v2371
        %v2457 = vunpack.c.h.b16 %v2371
        %v2458 = vunpack.c.l.b16 %v2372
        %v2459 = vunpack.c.h.b16 %v2372
        %v2460 = vunpack.c.l.b16 %v2373
        %v2461 = vunpack.c.h.b16 %v2373
        %v2462 = vunpack.c.l.b16 %v2374
        %v2463 = vunpack.c.h.b16 %v2374
        %v2464 = vunpack.c.l.b16 %v2375
        %v2465 = vunpack.c.h.b16 %v2375
        %v2466 = vunpack.c.l.b16 %v2376
        %v2467 = vunpack.c.h.b16 %v2376
        %v2468 = vunpack.c.l.b16 %v2377
        %v2469 = vunpack.c.h.b16 %v2377
        %v2470 = vunpack.c.l.b16 %v2378
        %v2471 = vunpack.c.h.b16 %v2378
        %v2472 = vunpack.c.l.b16 %v2379
        %v2473 = vunpack.c.h.b16 %v2379
        %v2474 = vunpack.c.l.b16 %v2380
        %v2475 = vunpack.c.h.b16 %v2380
        %v2476 = vunpack.c.l.b16 %v2381
        %v2477 = vunpack.c.h.b16 %v2381
        %v2478 = vunpack.c.l.b16 %v2382
        %v2479 = vunpack.c.h.b16 %v2382
        %v2480 = vunpack.c.l.b16 %v2383
        %v2481 = vunpack.c.h.b16 %v2383
        %v2482 = vunpack.c.l.b16 %v2384
        %v2483 = vunpack.c.h.b16 %v2384
        %v2484 = vunpack.c.l.b16 %v2385
        %v2485 = vunpack.c.h.b16 %v2385
        %v2486 = vunpack.c.l.b16 %v2386
        %v2487 = vunpack.c.h.b16 %v2386
        %v2488 = vunpack.c.l.b16 %v2387
        %v2489 = vunpack.c.h.b16 %v2387
        %v2490 = vunpack.c.l.b16 %v2388
        %v2491 = vunpack.c.h.b16 %v2388
        %v2492 = vunpack.c.l.b16 %v2389
        %v2493 = vunpack.c.h.b16 %v2389
        %v2494 = vunpack.c.l.b16 %v2390
        %v2495 = vunpack.c.h.b16 %v2390
        %v2496 = vunpack.c.l.b16 %v2391
        %v2497 = vunpack.c.h.b16 %v2391
        %v2498 = vunpack.c.l.b16 %v2392
        %v2499 = vunpack.c.h.b16 %v2392
        %v2500 = vunpack.c.l.b16 %v2393
        %v2501 = vunpack.c.h.b16 %v2393
        %v2502 = vpack.c.b16 %v2440, %v2438
        %v2503 = vpack.c.b16 %v2441, %v2439
        %v2504 = vpack.c.b16 %v2444, %v2442
        %v2505 = vpack.c.b16 %v2445, %v2443
        %v2506 = vpack.c.b16 %v2448, %v2446
        %v2507 = vpack.c.b16 %v2449, %v2447
        %v2508 = vpack.c.b16 %v2452, %v2450
        %v2509 = vpack.c.b16 %v2453, %v2451
        %v2510 = vpack.c.b16 %v2456, %v2454
        %v2511 = vpack.c.b16 %v2457, %v2455
        %v2512 = vpack.c.b16 %v2460, %v2458
        %v2513 = vpack.c.b16 %v2461, %v2459
        %v2514 = vpack.c.b16 %v2464, %v2462
        %v2515 = vpack.c.b16 %v2465, %v2463
        %v2516 = vpack.c.b16 %v2468, %v2466
        %v2517 = vpack.c.b16 %v2469, %v2467
        %v2518 = vpack.c.b16 %v2472, %v2470
        %v2519 = vpack.c.b16 %v2473, %v2471
        %v2520 = vpack.c.b16 %v2476, %v2474
        %v2521 = vpack.c.b16 %v2477, %v2475
        %v2522 = vpack.c.b16 %v2480, %v2478
        %v2523 = vpack.c.b16 %v2481, %v2479
        %v2524 = vpack.c.b16 %v2484, %v2482
        %v2525 = vpack.c.b16 %v2485, %v2483
        %v2526 = vpack.c.b16 %v2488, %v2486
        %v2527 = vpack.c.b16 %v2489, %v2487
        %v2528 = vpack.c.b16 %v2492, %v2490
        %v2529 = vpack.c.b16 %v2493, %v2491
        %v2530 = vpack.c.b16 %v2496, %v2494
        %v2531 = vpack.c.b16 %v2497, %v2495
        %v2532 = vpack.c.b16 %v2500, %v2498
        %v2533 = vpack.c.b16 %v2501, %v2499
        %2566 = vmatprep.subr.bf16.mxu0 %v2503
        %2567 = vmatpush1.bf16.msra.mxu0 %v2502
        %2568 = vmatprep.subr.bf16.mxu0 %v2505
        %2569 = vmatpush1.bf16.msra.mxu0 %v2504
        %2570 = vmatprep.subr.bf16.mxu0 %v2507
        %2571 = vmatpush1.bf16.msra.mxu0 %v2506
        %2572 = vmatprep.subr.bf16.mxu0 %v2509
        %2573 = vmatpush1.bf16.msra.mxu0 %v2508
        %2574 = vmatprep.subr.bf16.mxu0 %v2511
        %2575 = vmatpush1.bf16.msra.mxu0 %v2510
        %2576 = vmatprep.subr.bf16.mxu0 %v2513
        %2577 = vmatpush1.bf16.msra.mxu0 %v2512
        %2578 = vmatprep.subr.bf16.mxu0 %v2515
        %2579 = vmatpush1.bf16.msra.mxu0 %v2514
        %2580 = vmatprep.subr.bf16.mxu0 %v2517
        %2581 = vmatpush1.bf16.msra.mxu0 %v2516
        %2582 = vmatprep.subr.bf16.mxu0 %v2519
        %2583 = vmatpush1.bf16.msra.mxu0 %v2518
        %2584 = vmatprep.subr.bf16.mxu0 %v2521
        %2585 = vmatpush1.bf16.msra.mxu0 %v2520
        %2586 = vmatprep.subr.bf16.mxu0 %v2523
        %2587 = vmatpush1.bf16.msra.mxu0 %v2522
        %2588 = vmatprep.subr.bf16.mxu0 %v2525
        %2589 = vmatpush1.bf16.msra.mxu0 %v2524
        %2590 = vmatprep.subr.bf16.mxu0 %v2527
        %2591 = vmatpush1.bf16.msra.mxu0 %v2526
        %2592 = vmatprep.subr.bf16.mxu0 %v2529
        %2593 = vmatpush1.bf16.msra.mxu0 %v2528
        %2594 = vmatprep.subr.bf16.mxu0 %v2531
        %2595 = vmatpush1.bf16.msra.mxu0 %v2530
        %2596 = vmatprep.subr.bf16.mxu0 %v2533
        %2597 = vmatpush1.bf16.msra.mxu0 %v2532
        %2598 = vmatprep.mubr.bf16.mxu0 %v2331
        %2599 = vmatmul.mubr.bf16.gmra.mrb[0].mxu0 %v2330
        %v2600 = vpop.f32.mrb[0].mxu0
        %v2601 = vadd.f32 %v2399, %v2600
        %v2602 = vpop.f32.mrb[0].mxu0
        %v2603 = vadd.f32 %v2403, %v2602
        %v2604 = vpop.f32.mrb[0].mxu0
        %v2605 = vadd.f32 %v2399, %v2604
        %v2606 = vpop.f32.mrb[0].mxu0
        %v2607 = vadd.f32 %v2403, %v2606
        %2608 = vmatprep.mubr.bf16.mxu0 %v2333
        %2609 = vmatmul.mubr.bf16.gmra.mrb[0].mxu0 %v2332
        %v2610 = vpop.f32.mrb[0].mxu0
        %v2611 = vadd.f32 %v2399, %v2610
        %v2612 = vpop.f32.mrb[0].mxu0
        %v2613 = vadd.f32 %v2403, %v2612
        %v2614 = vpop.f32.mrb[0].mxu0
        %v2615 = vadd.f32 %v2399, %v2614
        %v2616 = vpop.f32.mrb[0].mxu0
        %v2617 = vadd.f32 %v2403, %v2616
        %2618 = vmatprep.mubr.bf16.mxu0 %v2335
        %2619 = vmatmul.mubr.bf16.gmra.mrb[0].mxu0 %v2334
        %v2620 = vpop.f32.mrb[0].mxu0
        %v2621 = vadd.f32 %v2399, %v2620
        %v2622 = vpop.f32.mrb[0].mxu0
        %v2623 = vadd.f32 %v2403, %v2622
        %v2624 = vpop.f32.mrb[0].mxu0
        %v2625 = vadd.f32 %v2399, %v2624
        %v2626 = vpop.f32.mrb[0].mxu0
        %v2627 = vadd.f32 %v2403, %v2626
        %2628 = vmatprep.mubr.bf16.mxu0 %v2337
        %2629 = vmatmul.mubr.bf16.gmra.mrb[0].mxu0 %v2336
        %v2630 = vpop.f32.mrb[0].mxu0
        %v2631 = vadd.f32 %v2399, %v2630
        %v2632 = vpop.f32.mrb[0].mxu0
        %v2633 = vadd.f32 %v2403, %v2632
        %v2634 = vpop.f32.mrb[0].mxu0
        %v2635 = vadd.f32 %v2399, %v2634
        %v2636 = vpop.f32.mrb[0].mxu0
        %v2637 = vadd.f32 %v2403, %v2636
        %2638 = vmatprep.mubr.bf16.mxu0 %v2339
        %2639 = vmatmul.mubr.bf16.gmra.mrb[0].mxu0 %v2338
        %v2640 = vpop.f32.mrb[0].mxu0
        %v2641 = vadd.f32 %v2399, %v2640
        %v2642 = vpop.f32.mrb[0].mxu0
        %v2643 = vadd.f32 %v2403, %v2642
        %v2644 = vpop.f32.mrb[0].mxu0
        %v2645 = vadd.f32 %v2399, %v2644
        %v2646 = vpop.f32.mrb[0].mxu0
        %v2647 = vadd.f32 %v2403, %v2646
        %2648 = vmatprep.mubr.bf16.mxu0 %v2341
        %2649 = vmatmul.mubr.bf16.gmra.mrb[0].mxu0 %v2340
        %v2650 = vpop.f32.mrb[0].mxu0
        %v2651 = vadd.f32 %v2399, %v2650
        %v2652 = vpop.f32.mrb[0].mxu0
        %v2653 = vadd.f32 %v2403, %v2652
        %v2654 = vpop.f32.mrb[0].mxu0
        %v2655 = vadd.f32 %v2399, %v2654
        %v2656 = vpop.f32.mrb[0].mxu0
        %v2657 = vadd.f32 %v2403, %v2656
        %2658 = vmatprep.mubr.bf16.mxu0 %v2343
        %2659 = vmatmul.mubr.bf16.gmra.mrb[0].mxu0 %v2342
        %v2660 = vpop.f32.mrb[0].mxu0
        %v2661 = vadd.f32 %v2399, %v2660
        %v2662 = vpop.f32.mrb[0].mxu0
        %v2663 = vadd.f32 %v2403, %v2662
        %v2664 = vpop.f32.mrb[0].mxu0
        %v2665 = vadd.f32 %v2399, %v2664
        %v2666 = vpop.f32.mrb[0].mxu0
        %v2667 = vadd.f32 %v2403, %v2666
        %2668 = vmatprep.mubr.bf16.mxu0 %v2345
        %2669 = vmatmul.mubr.bf16.gmra.mrb[0].mxu0 %v2344
        %v2670 = vpop.f32.mrb[0].mxu0
        %v2671 = vadd.f32 %v2399, %v2670
        %v2672 = vpop.f32.mrb[0].mxu0
        %v2673 = vadd.f32 %v2403, %v2672
        %v2674 = vpop.f32.mrb[0].mxu0
        %v2675 = vadd.f32 %v2399, %v2674
        %v2676 = vpop.f32.mrb[0].mxu0
        %v2677 = vadd.f32 %v2403, %v2676
        %2678 = vmatprep.mubr.bf16.mxu0 %v2347
        %2679 = vmatmul.mubr.bf16.gmra.mrb[0].mxu0 %v2346
        %v2680 = vpop.f32.mrb[0].mxu0
        %v2681 = vadd.f32 %v2399, %v2680
        %v2682 = vpop.f32.mrb[0].mxu0
        %v2683 = vadd.f32 %v2403, %v2682
        %v2684 = vpop.f32.mrb[0].mxu0
        %v2685 = vadd.f32 %v2399, %v2684
        %v2686 = vpop.f32.mrb[0].mxu0
        %v2687 = vadd.f32 %v2403, %v2686
        %2688 = vmatprep.mubr.bf16.mxu0 %v2349
        %2689 = vmatmul.mubr.bf16.gmra.mrb[0].mxu0 %v2348
        %v2690 = vpop.f32.mrb[0].mxu0
        %v2691 = vadd.f32 %v2399, %v2690
        %v2692 = vpop.f32.mrb[0].mxu0
        %v2693 = vadd.f32 %v2403, %v2692
        %v2694 = vpop.f32.mrb[0].mxu0
        %v2695 = vadd.f32 %v2399, %v2694
        %v2696 = vpop.f32.mrb[0].mxu0
        %v2697 = vadd.f32 %v2403, %v2696
        %2698 = vmatprep.mubr.bf16.mxu0 %v2351
        %2699 = vmatmul.mubr.bf16.gmra.mrb[0].mxu0 %v2350
        %v2700 = vpop.f32.mrb[0].mxu0
        %v2701 = vadd.f32 %v2399, %v2700
        %v2702 = vpop.f32.mrb[0].mxu0
        %v2703 = vadd.f32 %v2403, %v2702
        %v2704 = vpop.f32.mrb[0].mxu0
        %v2705 = vadd.f32 %v2399, %v2704
        %v2706 = vpop.f32.mrb[0].mxu0
        %v2707 = vadd.f32 %v2403, %v2706
        %2708 = vmatprep.mubr.bf16.mxu0 %v2353
        %2709 = vmatmul.mubr.bf16.gmra.mrb[0].mxu0 %v2352
        %v2710 = vpop.f32.mrb[0].mxu0
        %v2711 = vadd.f32 %v2399, %v2710
        %v2712 = vpop.f32.mrb[0].mxu0
        %v2713 = vadd.f32 %v2403, %v2712
        %v2714 = vpop.f32.mrb[0].mxu0
        %v2715 = vadd.f32 %v2399, %v2714
        %v2716 = vpop.f32.mrb[0].mxu0
        %v2717 = vadd.f32 %v2403, %v2716
        %2718 = vmatprep.mubr.bf16.mxu0 %v2355
        %2719 = vmatmul.mubr.bf16.gmra.mrb[0].mxu0 %v2354
        %v2720 = vpop.f32.mrb[0].mxu0
        %v2721 = vadd.f32 %v2399, %v2720
        %v2722 = vpop.f32.mrb[0].mxu0
        %v2723 = vadd.f32 %v2403, %v2722
        %v2724 = vpop.f32.mrb[0].mxu0
        %v2725 = vadd.f32 %v2399, %v2724
        %v2726 = vpop.f32.mrb[0].mxu0
        %v2727 = vadd.f32 %v2403, %v2726
        %2728 = vmatprep.mubr.bf16.mxu0 %v2357
        %2729 = vmatmul.mubr.bf16.gmra.mrb[0].mxu0 %v2356
        %v2730 = vpop.f32.mrb[0].mxu0
        %v2731 = vadd.f32 %v2399, %v2730
        %v2732 = vpop.f32.mrb[0].mxu0
        %v2733 = vadd.f32 %v2403, %v2732
        %v2734 = vpop.f32.mrb[0].mxu0
        %v2735 = vadd.f32 %v2399, %v2734
        %v2736 = vpop.f32.mrb[0].mxu0
        %v2737 = vadd.f32 %v2403, %v2736
        %2738 = vmatprep.mubr.bf16.mxu0 %v2359
        %2739 = vmatmul.mubr.bf16.gmra.mrb[0].mxu0 %v2358
        %v2740 = vpop.f32.mrb[0].mxu0
        %v2741 = vadd.f32 %v2399, %v2740
        %v2742 = vpop.f32.mrb[0].mxu0
        %v2743 = vadd.f32 %v2403, %v2742
        %v2744 = vpop.f32.mrb[0].mxu0
        %v2745 = vadd.f32 %v2399, %v2744
        %v2746 = vpop.f32.mrb[0].mxu0
        %v2747 = vadd.f32 %v2403, %v2746
        %2748 = vmatprep.mubr.bf16.mxu0 %v2361
        %2749 = vmatmul.mubr.bf16.gmra.mrb[0].mxu0 %v2360
        %v2750 = vpop.f32.mrb[0].mxu0
        %v2751 = vadd.f32 %v2399, %v2750
        %v2752 = vpop.f32.mrb[0].mxu0
        %v2753 = vadd.f32 %v2403, %v2752
        %v2754 = vpop.f32.mrb[0].mxu0
        %v2755 = vadd.f32 %v2399, %v2754
        %v2756 = vpop.f32.mrb[0].mxu0
        %v2757 = vadd.f32 %v2403, %v2756
        %2758 = vdwg.mxu0
        %vm2759 = vcmp.gt.f32.partialorder %v2601, 0.0
        %vm2760 = vcmp.gt.f32.partialorder %v2603, 0.0
        %vm2761 = vcmp.gt.f32.partialorder %v2605, 0.0
        %vm2762 = vcmp.gt.f32.partialorder %v2607, 0.0
        %vm2763 = vcmp.gt.f32.partialorder %v2611, 0.0
        %vm2764 = vcmp.gt.f32.partialorder %v2613, 0.0
        %vm2765 = vcmp.gt.f32.partialorder %v2615, 0.0
        %vm2766 = vcmp.gt.f32.partialorder %v2617, 0.0
        %vm2767 = vcmp.gt.f32.partialorder %v2621, 0.0
        %vm2768 = vcmp.gt.f32.partialorder %v2623, 0.0
        %vm2769 = vcmp.gt.f32.partialorder %v2625, 0.0
        %vm2770 = vcmp.gt.f32.partialorder %v2627, 0.0
        %vm2771 = vcmp.gt.f32.partialorder %v2631, 0.0
        %vm2772 = vcmp.gt.f32.partialorder %v2633, 0.0
        %vm2773 = vcmp.gt.f32.partialorder %v2635, 0.0
        %vm2774 = vcmp.gt.f32.partialorder %v2637, 0.0
        %vm2775 = vcmp.gt.f32.partialorder %v2641, 0.0
        %vm2776 = vcmp.gt.f32.partialorder %v2643, 0.0
        %vm2777 = vcmp.gt.f32.partialorder %v2645, 0.0
        %vm2778 = vcmp.gt.f32.partialorder %v2647, 0.0
        %vm2779 = vcmp.gt.f32.partialorder %v2651, 0.0
        %vm2780 = vcmp.gt.f32.partialorder %v2653, 0.0
        %vm2781 = vcmp.gt.f32.partialorder %v2655, 0.0
        %vm2782 = vcmp.gt.f32.partialorder %v2657, 0.0
        %vm2783 = vcmp.gt.f32.partialorder %v2661, 0.0
        %vm2784 = vcmp.gt.f32.partialorder %v2663, 0.0
        %vm2785 = vcmp.gt.f32.partialorder %v2665, 0.0
        %vm2786 = vcmp.gt.f32.partialorder %v2667, 0.0
        %vm2787 = vcmp.gt.f32.partialorder %v2671, 0.0
        %vm2788 = vcmp.gt.f32.partialorder %v2673, 0.0
        %vm2789 = vcmp.gt.f32.partialorder %v2675, 0.0
        %vm2790 = vcmp.gt.f32.partialorder %v2677, 0.0
        %vm2791 = vcmp.gt.f32.partialorder %v2681, 0.0
        %vm2792 = vcmp.gt.f32.partialorder %v2683, 0.0
        %vm2793 = vcmp.gt.f32.partialorder %v2685, 0.0
        %vm2794 = vcmp.gt.f32.partialorder %v2687, 0.0
        %vm2795 = vcmp.gt.f32.partialorder %v2691, 0.0
        %vm2796 = vcmp.gt.f32.partialorder %v2693, 0.0
        %vm2797 = vcmp.gt.f32.partialorder %v2695, 0.0
        %vm2798 = vcmp.gt.f32.partialorder %v2697, 0.0
        %vm2799 = vcmp.gt.f32.partialorder %v2701, 0.0
        %vm2800 = vcmp.gt.f32.partialorder %v2703, 0.0
        %vm2801 = vcmp.gt.f32.partialorder %v2705, 0.0
        %vm2802 = vcmp.gt.f32.partialorder %v2707, 0.0
        %vm2803 = vcmp.gt.f32.partialorder %v2711, 0.0
        %vm2804 = vcmp.gt.f32.partialorder %v2713, 0.0
        %vm2805 = vcmp.gt.f32.partialorder %v2715, 0.0
        %vm2806 = vcmp.gt.f32.partialorder %v2717, 0.0
        %vm2807 = vcmp.gt.f32.partialorder %v2721, 0.0
        %vm2808 = vcmp.gt.f32.partialorder %v2723, 0.0
        %vm2809 = vcmp.gt.f32.partialorder %v2725, 0.0
        %vm2810 = vcmp.gt.f32.partialorder %v2727, 0.0
        %vm2811 = vcmp.gt.f32.partialorder %v2731, 0.0
        %vm2812 = vcmp.gt.f32.partialorder %v2733, 0.0
        %vm2813 = vcmp.gt.f32.partialorder %v2735, 0.0
        %vm2814 = vcmp.gt.f32.partialorder %v2737, 0.0
        %vm2815 = vcmp.gt.f32.partialorder %v2741, 0.0
        %vm2816 = vcmp.gt.f32.partialorder %v2743, 0.0
        %vm2817 = vcmp.gt.f32.partialorder %v2745, 0.0
        %vm2818 = vcmp.gt.f32.partialorder %v2747, 0.0
        %vm2819 = vcmp.gt.f32.partialorder %v2751, 0.0
        %vm2820 = vcmp.gt.f32.partialorder %v2753, 0.0
        %vm2821 = vcmp.gt.f32.partialorder %v2755, 0.0
        %vm2822 = vcmp.gt.f32.partialorder %v2757, 0.0
        %v2823 = vmul.f32 %v2601, 0.2
        %v2824 = vmul.f32 %v2603, 0.2
        %v2825 = vmul.f32 %v2605, 0.2
        %v2826 = vmul.f32 %v2607, 0.2
        %v2827 = vmul.f32 %v2611, 0.2
        %v2828 = vmul.f32 %v2613, 0.2
        %v2829 = vmul.f32 %v2615, 0.2
        %v2830 = vmul.f32 %v2617, 0.2
        %v2831 = vmul.f32 %v2621, 0.2
        %v2832 = vmul.f32 %v2623, 0.2
        %v2833 = vmul.f32 %v2625, 0.2
        %v2834 = vmul.f32 %v2627, 0.2
        %v2835 = vmul.f32 %v2631, 0.2
        %v2836 = vmul.f32 %v2633, 0.2
        %v2837 = vmul.f32 %v2635, 0.2
        %v2838 = vmul.f32 %v2637, 0.2
        %v2839 = vmul.f32 %v2641, 0.2
        %v2840 = vmul.f32 %v2643, 0.2
        %v2841 = vmul.f32 %v2645, 0.2
        %v2842 = vmul.f32 %v2647, 0.2
        %v2843 = vmul.f32 %v2651, 0.2
        %v2844 = vmul.f32 %v2653, 0.2
        %v2845 = vmul.f32 %v2655, 0.2
        %v2846 = vmul.f32 %v2657, 0.2
        %v2847 = vmul.f32 %v2661, 0.2
        %v2848 = vmul.f32 %v2663, 0.2
        %v2849 = vmul.f32 %v2665, 0.2
        %v2850 = vmul.f32 %v2667, 0.2
        %v2851 = vmul.f32 %v2671, 0.2
        %v2852 = vmul.f32 %v2673, 0.2
        %v2853 = vmul.f32 %v2675, 0.2
        %v2854 = vmul.f32 %v2677, 0.2
        %v2855 = vmul.f32 %v2681, 0.2
        %v2856 = vmul.f32 %v2683, 0.2
        %v2857 = vmul.f32 %v2685, 0.2
        %v2858 = vmul.f32 %v2687, 0.2
        %v2859 = vmul.f32 %v2691, 0.2
        %v2860 = vmul.f32 %v2693, 0.2
        %v2861 = vmul.f32 %v2695, 0.2
        %v2862 = vmul.f32 %v2697, 0.2
        %v2863 = vmul.f32 %v2701, 0.2
        %v2864 = vmul.f32 %v2703, 0.2
        %v2865 = vmul.f32 %v2705, 0.2
        %v2866 = vmul.f32 %v2707, 0.2
        %v2867 = vmul.f32 %v2711, 0.2
        %v2868 = vmul.f32 %v2713, 0.2
        %v2869 = vmul.f32 %v2715, 0.2
        %v2870 = vmul.f32 %v2717, 0.2
        %v2871 = vmul.f32 %v2721, 0.2
        %v2872 = vmul.f32 %v2723, 0.2
        %v2873 = vmul.f32 %v2725, 0.2
        %v2874 = vmul.f32 %v2727, 0.2
        %v2875 = vmul.f32 %v2731, 0.2
        %v2876 = vmul.f32 %v2733, 0.2
        %v2877 = vmul.f32 %v2735, 0.2
        %v2878 = vmul.f32 %v2737, 0.2
        %v2879 = vmul.f32 %v2741, 0.2
        %v2880 = vmul.f32 %v2743, 0.2
        %v2881 = vmul.f32 %v2745, 0.2
        %v2882 = vmul.f32 %v2747, 0.2
        %v2883 = vmul.f32 %v2751, 0.2
        %v2884 = vmul.f32 %v2753, 0.2
        %v2885 = vmul.f32 %v2755, 0.2
        %v2886 = vmul.f32 %v2757, 0.2
        %v2887 = vsel %vm2759, %v2601, %v2823
        %v2888 = vsel %vm2760, %v2603, %v2824
        %v2889 = vsel %vm2761, %v2605, %v2825
        %v2890 = vsel %vm2762, %v2607, %v2826
        %v2891 = vsel %vm2763, %v2611, %v2827
        %v2892 = vsel %vm2764, %v2613, %v2828
        %v2893 = vsel %vm2765, %v2615, %v2829
        %v2894 = vsel %vm2766, %v2617, %v2830
        %v2895 = vsel %vm2767, %v2621, %v2831
        %v2896 = vsel %vm2768, %v2623, %v2832
        %v2897 = vsel %vm2769, %v2625, %v2833
        %v2898 = vsel %vm2770, %v2627, %v2834
        %v2899 = vsel %vm2771, %v2631, %v2835
        %v2900 = vsel %vm2772, %v2633, %v2836
        %v2901 = vsel %vm2773, %v2635, %v2837
        %v2902 = vsel %vm2774, %v2637, %v2838
        %v2903 = vsel %vm2775, %v2641, %v2839
        %v2904 = vsel %vm2776, %v2643, %v2840
        %v2905 = vsel %vm2777, %v2645, %v2841
        %v2906 = vsel %vm2778, %v2647, %v2842
        %v2907 = vsel %vm2779, %v2651, %v2843
        %v2908 = vsel %vm2780, %v2653, %v2844
        %v2909 = vsel %vm2781, %v2655, %v2845
        %v2910 = vsel %vm2782, %v2657, %v2846
        %v2911 = vsel %vm2783, %v2661, %v2847
        %v2912 = vsel %vm2784, %v2663, %v2848
        %v2913 = vsel %vm2785, %v2665, %v2849
        %v2914 = vsel %vm2786, %v2667, %v2850
        %v2915 = vsel %vm2787, %v2671, %v2851
        %v2916 = vsel %vm2788, %v2673, %v2852
        %v2917 = vsel %vm2789, %v2675, %v2853
        %v2918 = vsel %vm2790, %v2677, %v2854
        %v2919 = vsel %vm2791, %v2681, %v2855
        %v2920 = vsel %vm2792, %v2683, %v2856
        %v2921 = vsel %vm2793, %v2685, %v2857
        %v2922 = vsel %vm2794, %v2687, %v2858
        %v2923 = vsel %vm2795, %v2691, %v2859
        %v2924 = vsel %vm2796, %v2693, %v2860
        %v2925 = vsel %vm2797, %v2695, %v2861
        %v2926 = vsel %vm2798, %v2697, %v2862
        %v2927 = vsel %vm2799, %v2701, %v2863
        %v2928 = vsel %vm2800, %v2703, %v2864
        %v2929 = vsel %vm2801, %v2705, %v2865
        %v2930 = vsel %vm2802, %v2707, %v2866
        %v2931 = vsel %vm2803, %v2711, %v2867
        %v2932 = vsel %vm2804, %v2713, %v2868
        %v2933 = vsel %vm2805, %v2715, %v2869
        %v2934 = vsel %vm2806, %v2717, %v2870
        %v2935 = vsel %vm2807, %v2721, %v2871
        %v2936 = vsel %vm2808, %v2723, %v2872
        %v2937 = vsel %vm2809, %v2725, %v2873
        %v2938 = vsel %vm2810, %v2727, %v2874
        %v2939 = vsel %vm2811, %v2731, %v2875
        %v2940 = vsel %vm2812, %v2733, %v2876
        %v2941 = vsel %vm2813, %v2735, %v2877
        %v2942 = vsel %vm2814, %v2737, %v2878
        %v2943 = vsel %vm2815, %v2741, %v2879
        %v2944 = vsel %vm2816, %v2743, %v2880
        %v2945 = vsel %vm2817, %v2745, %v2881
        %v2946 = vsel %vm2818, %v2747, %v2882
        %v2947 = vsel %vm2819, %v2751, %v2883
        %v2948 = vsel %vm2820, %v2753, %v2884
        %v2949 = vsel %vm2821, %v2755, %v2885
        %v2950 = vsel %vm2822, %v2757, %v2886
        %v2951 = vld [vmem:[#allocation12] sm:$0xff]
        %v2952 = vld [vmem:[#allocation12 + $0x8] sm:$0xff]
        %2953 = vmatprep.subr.mxu0 %v2888
        %2954 = vmatpush1.xpose.msra.mxu0 %v2887
        %2955 = vmatprep.subr.mxu0 %v2890
        %2956 = vmatpush1.xpose.msra.mxu0 %v2889
        %2957 = vmatprep.subr.mxu0 %v2892
        %2958 = vmatpush1.xpose.msra.mxu0 %v2891
        %2959 = vmatprep.subr.mxu0 %v2894
        %2960 = vmatpush1.xpose.msra.mxu0 %v2893
        %2961 = vmatprep.subr.mxu0 %v2896
        %2962 = vmatpush1.xpose.msra.mxu0 %v2895
        %2963 = vmatprep.subr.mxu0 %v2898
        %2964 = vmatpush1.xpose.msra.mxu0 %v2897
        %2965 = vmatprep.subr.mxu0 %v2900
        %2966 = vmatpush1.xpose.msra.mxu0 %v2899
        %2967 = vmatprep.subr.mxu0 %v2902
        %2968 = vmatpush1.xpose.msra.mxu0 %v2901
        %2969 = vmatprep.subr.mxu0 %v2904
        %2970 = vmatpush1.xpose.msra.mxu0 %v2903
        %2971 = vmatprep.subr.mxu0 %v2906
        %2972 = vmatpush1.xpose.msra.mxu0 %v2905
        %2973 = vmatprep.subr.mxu0 %v2908
        %2974 = vmatpush1.xpose.msra.mxu0 %v2907
        %2975 = vmatprep.subr.mxu0 %v2910
        %2976 = vmatpush1.xpose.msra.mxu0 %v2909
        %2977 = vmatprep.subr.mxu0 %v2912
        %2978 = vmatpush1.xpose.msra.mxu0 %v2911
        %2979 = vmatprep.subr.mxu0 %v2914
        %2980 = vmatpush1.xpose.msra.mxu0 %v2913
        %2981 = vmatprep.subr.mxu0 %v2916
        %2982 = vmatpush1.xpose.msra.mxu0 %v2915
        %2983 = vmatprep.subr.mxu0 %v2918
        %2984 = vmatpush1.xpose.msra.mxu0 %v2917
        %2985 = vmatprep.subr.mxu0 %v2920
        %2986 = vmatpush1.xpose.msra.mxu0 %v2919
        %2987 = vmatprep.subr.mxu0 %v2922
        %2988 = vmatpush1.xpose.msra.mxu0 %v2921
        %2989 = vmatprep.subr.mxu0 %v2924
        %2990 = vmatpush1.xpose.msra.mxu0 %v2923
        %2991 = vmatprep.subr.mxu0 %v2926
        %2992 = vmatpush1.xpose.msra.mxu0 %v2925
        %2993 = vmatprep.subr.mxu0 %v2928
        %2994 = vmatpush1.xpose.msra.mxu0 %v2927
        %2995 = vmatprep.subr.mxu0 %v2930
        %2996 = vmatpush1.xpose.msra.mxu0 %v2929
        %2997 = vmatprep.subr.mxu0 %v2932
        %2998 = vmatpush1.xpose.msra.mxu0 %v2931
        %2999 = vmatprep.subr.mxu0 %v2934
        %3000 = vmatpush1.xpose.msra.mxu0 %v2933
        %3001 = vmatprep.subr.mxu0 %v2936
        %3002 = vmatpush1.xpose.msra.mxu0 %v2935
        %3003 = vmatprep.subr.mxu0 %v2938
        %3004 = vmatpush1.xpose.msra.mxu0 %v2937
        %3005 = vmatprep.subr.mxu0 %v2940
        %3006 = vmatpush1.xpose.msra.mxu0 %v2939
        %3007 = vmatprep.subr.mxu0 %v2942
        %3008 = vmatpush1.xpose.msra.mxu0 %v2941
        %3009 = vmatprep.subr.mxu0 %v2944
        %3010 = vmatpush1.xpose.msra.mxu0 %v2943
        %3011 = vmatprep.subr.mxu0 %v2946
        %3012 = vmatpush1.xpose.msra.mxu0 %v2945
        %3013 = vmatprep.subr.mxu0 %v2948
        %3014 = vmatpush1.xpose.msra.mxu0 %v2947
        %3015 = vmatprep.subr.mxu0 %v2950
        %3016 = vmatpush1.xpose.msra.mxu0 %v2949
        %3017 = vmatprep.mubr.f32.mxu0 %v2952
        %3018 = vmatmul.mubr.f32.gmra.mrb[0].mxu0 %v2951
        %v3019 = vpop.f32.mrb[0].mxu0
        %v3020 = vadd.f32 0.0, %v3019
        %v3021 = vpop.f32.mrb[0].mxu0
        %v3022 = vadd.f32 0.0, %v3021
        %3023 = vdwg.mxu0
        %v3024 = vld [vmem:[#allocation2] sm:$0x1]
        %3026 = vset.pattern.permute.xlu0 0
        %3027 = vperm.xlu0 %3026, %v3024
        %v3028 = vpop.permute.xlu0 %3027
        %v3030 = vlaneseq
        %v3031 = vshrl.u32 %v3030, 7
        %v3032 = vsub.s32 0, %v3031
        %v3033 = vrot.slane %v3028, %v3032
        %v3034 = vadd.f32 %v3020, %v3033
        %v3035 = vadd.f32 %v3022, %v3033
        %v3036 = vxor.u32 %v3034, 2147483648
        %v3037 = vxor.u32 %v3035, 2147483648
        %v3038 = vmul.f32 %v3036, 1.442695
        %v3039 = vpow.pop %v3038
        %v3040 = vmul.f32 %v3037, 1.442695
        %v3041 = vpow.pop %v3040
        %v3042 = vadd.f32 %v3039, 1.0
        %v3043 = vadd.f32 %v3041, 1.0
        %v3044 = vrcp.pop %v3042
        %v3045 = vmul.f32 1.0, %v3044
        %v3046 = vrcp.pop %v3043
        %v3047 = vmul.f32 1.0, %v3046
        %v3050 = vcombine.low %v3045, %v3047
        %v3052 = vunpack.c.l.s4 1966171168
        %v3053 = vunpack.c.0.s8 %v3052
        %v3054 = vlaneseq
        %v3055 = vshrl.u32 %v3054, 7
        %v3056 = vsub.s32 %v3053, %v3055
        %v3057 = vrot.slane %v3050, %v3056
        %v3059 = vunpack.c.l.s4 1966171168
        %v3060 = vunpack.c.0.s8 %v3059
        %v3061 = vlaneseq
        %v3062 = vshrl.u32 %v3061, 7
        %v3063 = vsub.s32 %v3060, %v3062
        %v3064 = vrot.slane %v3057, %v3063
        %v3066 = vlaneseq
        %vm3067 = vcmp.ge.s32.totalorder %v3066, 0
        %vm3068 = vcmp.lt.s32.totalorder %v3066, 256
        %vm3069 = vmand %vm3067, %vm3068
        %3070 = vst.msk [vmem:[%s373] sm:$0x3] %vm3069, %v3064
        %s3071 = sand.u32 %s189, 1
        %s3072 = scalar_lea.sflag [#allocation5], %s3071
        %s3073 = sand.u32 %s189, 1
        %s3074 = smul.addr %s3073, 2
        %s3075 = scalar_lea.vmem [#allocation14], %s3074
        // Predicated region
        $region73: #{tpu_custom_call.1} parent=47 // pred_check
          %p3076 = pneg %p199
        $region74: #{tpu_custom_call.1} parent=47 // pred_check_branch
          %3078 = sbr.rel (%p3076) target = $region76
        $region75: #{tpu_custom_call.1} parent=47 // pred_region
          %s3080 = ssub.s32 32, 32
          %3081 = vsyncadd %s3072, %s3080
          %s3082 = smul.addr %s29, 2
          %s3083 = smul.addr %s3082, 16
          %s3084 = scalar_lea.hbm %s7, %s3083
          %s3086 = sshll.u32 %s3075, 4
          %s3087 = int_to_ptr.vmem [resolvable:$true] %s3086
          %3089 = dma.vmem_to_hbm [thread:$0]  %s3087, 32, %s3084, %s3072
        $region76: #{tpu_custom_call.1} parent=47 // pred_fallthru
          _
      $region48: #{tpu_custom_call.1} parent=5 // pred_fallthru
        _
      %p3090 = scmp.le.s32.totalorder 2, %s24
      // Predicated region
      $region77: #{tpu_custom_call.1} parent=5 // pred_check
        %p3091 = pneg %p3090
      $region78: #{tpu_custom_call.1} parent=5 // pred_check_branch
        %3093 = sbr.rel (%p3091) target = $region80
      $region79: #{tpu_custom_call.1} parent=5 // pred_region
        %s3094 = ssub.s32 %s24, 2
        // Predicated region
        $region81: #{tpu_custom_call.1} parent=79 // pred_check
          %p3095 = pneg %p205
        $region82: #{tpu_custom_call.1} parent=79 // pred_check_branch
          %3097 = sbr.rel (%p3095) target = $region84
        $region83: #{tpu_custom_call.1} parent=79 // pred_region
          %s3098 = sand.u32 %s190, 1
          %s3099 = scalar_lea.sflag [#allocation5], %s3098
          %s3100 = sand.u32 %s190, 1
          %s3101 = smul.addr %s3100, 2
          %s3102 = scalar_lea.vmem [#allocation14], %s3101
          %3103 = dma.done %s3099, 32
        $region84: #{tpu_custom_call.1} parent=79 // pred_fallthru
          _
      $region80: #{tpu_custom_call.1} parent=5 // pred_fallthru
        _
    $region6: #{tpu_custom_call.1} parent=1 // loop_footer
      %s28 = sadd.s32 1, %s24
    $region7: #{tpu_custom_call.1} parent=1 // loop_footer_branch
      %23 = sbr.rel target = $region3
    $region8: #{tpu_custom_call.1} parent=1 // loop_exit
      _
    %3104 = vsyncpa [#allocation4], 1
    %s3105 = scalar_lea.sflag [#allocation4], 1
    %3106 = vsyncpa %s3105, 1
    %3107 = vsyncpa [#allocation7], 1
    %3108 = vsyncpa [#allocation10], 1
    %3109 = vsyncpa [#allocation13], 1
    %3110 = vsyncpa [#allocation5], 1
    %s3111 = scalar_lea.sflag [#allocation5], 1
    %3112 = vsyncpa %s3111, 1

</llo_original>
